<compile_context>
chip_gen: v7x
topology: tpu7x:2x2x1
jax: 0.10.0
libtpu: 0.0.40
codegen_flags: <defaults>
</compile_context>

<pallas_src>
import functools

import jax
import jax.numpy as jnp
from jax import lax
from jax.experimental import pallas as pl
from jax.experimental.pallas import tpu as pltpu

EPS = 1e-5
NEG_SLOPE = 0.2
Z_PAD = 128  # latent channels padded 100 -> 128 (lane-dense / aligned K)


# ----------------------------- Pallas kernels ------------------------------

def _conv_bn_lrelu_kernel(x_ref, w_ref, b_ref, g_ref, beta_ref, o_ref):
    """(im2col patches) @ w + b, then per-column(=channel) BatchNorm + LeakyReLU."""
    y = jnp.dot(x_ref[...].astype(jnp.bfloat16), w_ref[...],
                preferred_element_type=jnp.float32) + b_ref[...]
    mean = jnp.mean(y, axis=0, keepdims=True)
    d = y - mean
    var = jnp.mean(d * d, axis=0, keepdims=True)
    yn = d * lax.rsqrt(var + EPS) * g_ref[...] + beta_ref[...]
    o_ref[...] = jnp.where(yn > 0, yn, NEG_SLOPE * yn)


def _mm_bias_kernel(x_ref, w_ref, b_ref, o_ref):
    """Latent conv: x @ w + b (output lanes padded to 128 -> dense stores)."""
    o_ref[...] = jnp.dot(x_ref[...].astype(jnp.bfloat16), w_ref[...],
                         preferred_element_type=jnp.float32) + b_ref[...]


def _group_bn_lrelu(y, b, gamma, beta, cout):
    """y: (M, 4*cout), columns grouped as (di, dj, channel).

    Per-channel BatchNorm over all M rows x 4 spatial groups (= N*H_out*W_out
    positions of the transposed conv), then LeakyReLU.  Returns the 4 activated
    (M, cout) groups.  All math in f32."""
    m_rows = y.shape[0]
    inv_n = 1.0 / (4.0 * m_rows)
    parts = [y[:, k * cout:(k + 1) * cout] + b for k in range(4)]
    mean = jnp.sum(parts[0] + parts[1] + parts[2] + parts[3],
                   axis=0, keepdims=True) * inv_n
    devs = [p - mean for p in parts]
    var = jnp.sum(devs[0] * devs[0] + devs[1] * devs[1]
                  + devs[2] * devs[2] + devs[3] * devs[3],
                  axis=0, keepdims=True) * inv_n
    scale = lax.rsqrt(var + EPS) * gamma
    acts = []
    for d in devs:
        yn = d * scale + beta
        acts.append(jnp.where(yn > 0, yn, NEG_SLOPE * yn))
    return acts


def _convt_bn_lrelu_kernel(x_ref, w_ref, b_ref, g_ref, beta_ref, o_ref, *, cout):
    """ConvTranspose2d(k=2, s=2) as x @ w (cols (di,dj,chan)) fused with
    per-channel BatchNorm + LeakyReLU."""
    y = jnp.dot(x_ref[...].astype(jnp.bfloat16), w_ref[...],
                preferred_element_type=jnp.float32)
    acts = _group_bn_lrelu(y, b_ref[...], g_ref[...], beta_ref[...], cout)
    o_ref[...] = jnp.concatenate(acts, axis=1)


def _convt_bn_lrelu_conv1x1_tanh_kernel(x_ref, w_ref, b_ref, g_ref, beta_ref,
                                        w3_ref, b3_ref, o_ref, *, cout):
    """dec2 ConvTranspose + BN + LeakyReLU fused with the final 1x1
    ConvTranspose (block-diagonal weight -> single matmul) + tanh."""
    y = jnp.dot(x_ref[...].astype(jnp.bfloat16), w_ref[...],
                preferred_element_type=jnp.float32)
    acts = _group_bn_lrelu(y, b_ref[...], g_ref[...], beta_ref[...], cout)
    a = jnp.concatenate(acts, axis=1).astype(jnp.bfloat16)
    out = jnp.dot(a, w3_ref[...], preferred_element_type=jnp.float32) + b3_ref[...]
    o_ref[...] = jnp.tanh(out)


# ----------------------------- Pallas wrapper -------------------------------

def _full_block_call(kernel, out_shape, *arrays):
    """Single-step pallas_call with full-array blocks (all operands are KB-sized)."""
    def spec(shape):
        nd = len(shape)
        return pl.BlockSpec(shape, lambda i, _nd=nd: (0,) * _nd)

    return pl.pallas_call(
        kernel,
        out_shape=out_shape,
        grid=(1,),
        in_specs=[spec(a.shape) for a in arrays],
        out_specs=spec(out_shape.shape),
        compiler_params=pltpu.CompilerParams(dimension_semantics=("arbitrary",)),
    )(*arrays)


# ------------------------------ JAX glue ops --------------------------------

def im2col_nhwc(x, k, s, pad):
    """x: NHWC -> (N*Ho*Wo, k*k*C) patches, column order (di, dj, cin)."""
    if pad:
        x = jnp.pad(x, ((0, 0), (pad, pad), (pad, pad), (0, 0)))
    n, h, w, c = x.shape
    ho = (h - k) // s + 1
    wo = (w - k) // s + 1
    cols = [x[:, di:di + s * ho:s, dj:dj + s * wo:s, :]
            for di in range(k) for dj in range(k)]
    p = jnp.concatenate(cols, axis=-1)          # (N, Ho, Wo, k*k*C)
    return p.reshape(n * ho * wo, k * k * c), ho, wo


def _conv_w(w):
    """PyTorch Conv2d weight (Cout, Cin, kh, kw) -> (kh*kw*Cin, Cout)."""
    co, ci, kh, kw = w.shape
    return w.transpose(2, 3, 1, 0).reshape(kh * kw * ci, co)


def _convt_w(w):
    """PyTorch ConvTranspose2d weight (Cin, Cout, kh, kw) -> (Cin, kh*kw*Cout),
    columns ordered (di, dj, cout)."""
    ci, co, kh, kw = w.shape
    return w.transpose(0, 2, 3, 1).reshape(ci, kh * kw * co)


# ------------------------------ Parameters ----------------------------------

def init_params(key, num_in_channels=4, z_size=100, num_filters=32):
    nf = num_filters
    ks = jax.random.split(key, 16)

    def xav(k, shape):
        rf = shape[2] * shape[3]
        fan_in, fan_out = shape[1] * rf, shape[0] * rf
        std = (2.0 / (fan_in + fan_out)) ** 0.5
        return std * jax.random.normal(k, shape, dtype=jnp.float32)

    def bias(k, n):
        return 0.01 * jax.random.normal(k, (n,), dtype=jnp.float32)

    def bn_gamma(k, n):
        return 1.0 + 0.02 * jax.random.normal(k, (n,), dtype=jnp.float32)

    p = {}
    p["enc1_w"] = xav(ks[0], (nf, num_in_channels, 3, 3)); p["enc1_b"] = bias(ks[1], nf)
    p["bn1_g"] = bn_gamma(ks[2], nf); p["bn1_b"] = jnp.zeros((nf,), jnp.float32)
    p["enc2_w"] = xav(ks[3], (2 * nf, nf, 3, 3)); p["enc2_b"] = bias(ks[4], 2 * nf)
    p["bn2_g"] = bn_gamma(ks[5], 2 * nf); p["bn2_b"] = jnp.zeros((2 * nf,), jnp.float32)
    p["lat_w"] = xav(ks[6], (z_size, 2 * nf, 2, 2)); p["lat_b"] = bias(ks[7], z_size)
    p["dec1_w"] = xav(ks[8], (z_size, 2 * nf, 2, 2)); p["dec1_b"] = bias(ks[9], 2 * nf)
    p["dbn1_g"] = bn_gamma(ks[10], 2 * nf); p["dbn1_b"] = jnp.zeros((2 * nf,), jnp.float32)
    p["dec2_w"] = xav(ks[11], (2 * nf, nf, 2, 2)); p["dec2_b"] = bias(ks[12], nf)
    p["dbn2_g"] = bn_gamma(ks[13], nf); p["dbn2_b"] = jnp.zeros((nf,), jnp.float32)
    p["dec3_w"] = xav(ks[14], (nf, num_in_channels, 1, 1)); p["dec3_b"] = bias(ks[15], num_in_channels)
    return p


def prepare_params(p, num_in_channels=4, z_size=100, num_filters=32):
    """One-time (outside jit) layout + bf16 cast of all matmul weights."""
    nf = num_filters
    bf = jnp.bfloat16
    row = lambda v: v.reshape(1, -1).astype(jnp.float32)
    q = {}
    q["enc1_w"] = _conv_w(p["enc1_w"]).astype(bf)
    q["enc1_b"], q["bn1_g"], q["bn1_b"] = row(p["enc1_b"]), row(p["bn1_g"]), row(p["bn1_b"])
    q["enc2_w"] = _conv_w(p["enc2_w"]).astype(bf)
    q["enc2_b"], q["bn2_g"], q["bn2_b"] = row(p["enc2_b"]), row(p["bn2_g"]), row(p["bn2_b"])

    # latent: pad output channels z_size -> 128 (zero cols) for lane-dense stores
    lw = _conv_w(p["lat_w"])
    q["lat_w"] = jnp.pad(lw, ((0, 0), (0, Z_PAD - z_size))).astype(bf)
    q["lat_b"] = row(jnp.pad(p["lat_b"], (0, Z_PAD - z_size)))

    # dec1: pad contraction dim z_size -> 128 (zero rows); columns (di,dj,chan)
    dw1 = _convt_w(p["dec1_w"])
    q["dec1_w"] = jnp.pad(dw1, ((0, Z_PAD - z_size), (0, 0))).astype(bf)
    q["dec1_b"], q["dbn1_g"], q["dbn1_b"] = row(p["dec1_b"]), row(p["dbn1_g"]), row(p["dbn1_b"])

    q["dec2_w"] = _convt_w(p["dec2_w"]).astype(bf)
    q["dec2_b"], q["dbn2_g"], q["dbn2_b"] = row(p["dec2_b"]), row(p["dbn2_g"]), row(p["dbn2_b"])

    # final 1x1 conv-transpose folded into dec2's kernel as a block-diagonal
    # matmul over the four (di, dj) column groups of dec2's output.
    w3 = p["dec3_w"].reshape(nf, num_in_channels)
    q["dec3_w"] = jnp.kron(jnp.eye(4, dtype=jnp.float32), w3).astype(bf)
    q["dec3_b"] = row(jnp.tile(p["dec3_b"], 4))
    return q


# ------------------------------ Forward pass ---------------------------------

def ae_forward(q, x, *, num_in_channels=4, z_size=100, num_filters=32):
    nf = num_filters
    n = x.shape[0]
    xh = x.transpose(0, 2, 3, 1)                       # NCHW -> NHWC, once

    # --- encoder: Conv(3, s2) + BN + LeakyReLU (x2), fully fused kernels ---
    p1, h1, w1 = im2col_nhwc(xh, 3, 2, 0)
    e1 = _full_block_call(_conv_bn_lrelu_kernel,
                          jax.ShapeDtypeStruct((p1.shape[0], nf), jnp.float32),
                          p1, q["enc1_w"], q["enc1_b"], q["bn1_g"], q["bn1_b"])

    p2, h2, w2 = im2col_nhwc(e1.reshape(n, h1, w1, nf), 3, 2, 0)
    e2 = _full_block_call(_conv_bn_lrelu_kernel,
                          jax.ShapeDtypeStruct((p2.shape[0], 2 * nf), jnp.float32),
                          p2, q["enc2_w"], q["enc2_b"], q["bn2_g"], q["bn2_b"])

    # --- latent: Conv(k=2, s=1, pad=1), channels padded to 128 lanes ---
    p3, h3, w3 = im2col_nhwc(e2.reshape(n, h2, w2, 2 * nf), 2, 1, 1)
    zf = _full_block_call(_mm_bias_kernel,
                          jax.ShapeDtypeStruct((p3.shape[0], Z_PAD), jnp.float32),
                          p3, q["lat_w"], q["lat_b"])
    z = zf[:, :z_size].reshape(n, h3, w3, z_size).transpose(0, 3, 1, 2)  # NCHW z

    # --- decoder stage 1: ConvTranspose(k2,s2) + BN + LeakyReLU, fused ---
    d1 = _full_block_call(
        functools.partial(_convt_bn_lrelu_kernel, cout=2 * nf),
        jax.ShapeDtypeStruct((zf.shape[0], 4 * 2 * nf), jnp.float32),
        zf, q["dec1_w"], q["dec1_b"], q["dbn1_g"], q["dbn1_b"])
    # scatter the (di, dj) column groups onto the upsampled NHWC grid
    h4, w4 = 2 * h3, 2 * w3
    d1 = (d1.reshape(n, h3, w3, 2, 2, 2 * nf)
             .transpose(0, 1, 3, 2, 4, 5)
             .reshape(n * h4 * w4, 2 * nf))

    # --- decoder stage 2 + final 1x1 conv-transpose + tanh, all fused ---
    out = _full_block_call(
        functools.partial(_convt_bn_lrelu_conv1x1_tanh_kernel, cout=nf),
        jax.ShapeDtypeStruct((d1.shape[0], 4 * num_in_channels), jnp.float32),
        d1, q["dec2_w"], q["dec2_b"], q["dbn2_g"], q["dbn2_b"],
        q["dec3_w"], q["dec3_b"])
    h5, w5 = 2 * h4, 2 * w4
    decode_z = (out.reshape(n, h4, w4, 2, 2, num_in_channels)
                   .transpose(0, 5, 1, 3, 2, 4)        # -> (N, C, h4, di, w4, dj)
                   .reshape(n, num_in_channels, h5, w5))
    return decode_z, z


# --------------------------------- main --------------------------------------

if __name__ == "__main__":
    key = jax.random.PRNGKey(0)
    kx, kp = jax.random.split(key)

    num_in_channels, z_size, num_filters = 4, 100, 32
    x = jax.random.normal(kx, (2, num_in_channels, 16, 16), dtype=jnp.float32)
    params = init_params(kp, num_in_channels, z_size, num_filters)
    prepared = prepare_params(params, num_in_channels, z_size, num_filters)

    fwd = jax.jit(ae_forward)
    decode_z, z = fwd(prepared, x)
    jax.block_until_ready((decode_z, z))

    assert decode_z.shape == (2, num_in_channels, 16, 16), decode_z.shape
    assert z.shape == (2, z_size, 4, 4), z.shape
    assert bool(jnp.all(jnp.isfinite(decode_z))) and bool(jnp.all(jnp.isfinite(z)))
    print("KERNEL_OK")
</pallas_src>

<mosaic_0001>
module attributes {stable_mosaic.version = 11 : i64} {
  func.func @_conv_bn_lrelu_kernel(%arg0: i32, %arg1: memref<98x36xf32, #tpu.memory_space<vmem>>, %arg2: memref<36x32xbf16, #tpu.memory_space<vmem>>, %arg3: memref<1x32xf32, #tpu.memory_space<vmem>>, %arg4: memref<1x32xf32, #tpu.memory_space<vmem>>, %arg5: memref<1x32xf32, #tpu.memory_space<vmem>>, %arg6: memref<98x32xf32, #tpu.memory_space<vmem>>) attributes {dimension_semantics = [#tpu.dimension_semantics<arbitrary>], iteration_bounds = array<i64: 1>, scalar_prefetch = 0 : i64, scratch_operands = 0 : i64, tpu.core_type = #tpu.core_type<tc>, window_params = [{pipeline_mode = #tpu.pipeline_mode<synchronous>, transform_indices = @transform_0, window_bounds = array<i64: 98, 36>}, {pipeline_mode = #tpu.pipeline_mode<synchronous>, transform_indices = @transform_1, window_bounds = array<i64: 36, 32>}, {pipeline_mode = #tpu.pipeline_mode<synchronous>, transform_indices = @transform_2, window_bounds = array<i64: 1, 32>}, {pipeline_mode = #tpu.pipeline_mode<synchronous>, transform_indices = @transform_3, window_bounds = array<i64: 1, 32>}, {pipeline_mode = #tpu.pipeline_mode<synchronous>, transform_indices = @transform_4, window_bounds = array<i64: 1, 32>}, {pipeline_mode = #tpu.pipeline_mode<synchronous>, transform_indices = @transform_5, window_bounds = array<i64: 98, 32>}]} {
    %c0 = arith.constant 0 : index
    %c0_0 = arith.constant 0 : index
    %0 = vector.load %arg1[%c0, %c0_0] : memref<98x36xf32, #tpu.memory_space<vmem>>, vector<98x36xf32>
    %1 = arith.truncf %0 : vector<98x36xf32> to vector<98x36xbf16>
    %c0_1 = arith.constant 0 : index
    %c0_2 = arith.constant 0 : index
    %2 = vector.load %arg2[%c0_1, %c0_2] : memref<36x32xbf16, #tpu.memory_space<vmem>>, vector<36x32xbf16>
    %cst = arith.constant dense<0.000000e+00> : vector<98x32xf32>
    %3 = tpu.matmul %1, %2, %cst {dimension_numbers = #tpu.dot_dimension_numbers<[1], [0], [0], [1], [0, 0, 1, 1], [], []>} : vector<98x36xbf16>, vector<36x32xbf16>, vector<98x32xf32> -> vector<98x32xf32>
    %c0_3 = arith.constant 0 : index
    %c0_4 = arith.constant 0 : index
    %4 = vector.load %arg3[%c0_3, %c0_4] : memref<1x32xf32, #tpu.memory_space<vmem>>, vector<1x32xf32>
    %5 = vector.broadcast %4 : vector<1x32xf32> to vector<98x32xf32>
    %6 = arith.addf %3, %5 : vector<98x32xf32>
    %cst_5 = arith.constant dense<0.000000e+00> : vector<32xf32>
    %7 = vector.multi_reduction <add>, %6, %cst_5 [0] : vector<98x32xf32> to vector<32xf32>
    %8 = vector.shape_cast %7 : vector<32xf32> to vector<1x32xf32>
    %cst_6 = arith.constant 9.800000e+01 : f32
    %9 = vector.broadcast %cst_6 : f32 to vector<1x32xf32>
    %10 = arith.divf %8, %9 : vector<1x32xf32>
    %11 = vector.broadcast %10 : vector<1x32xf32> to vector<98x32xf32>
    %12 = arith.subf %6, %11 : vector<98x32xf32>
    %13 = arith.mulf %12, %12 : vector<98x32xf32>
    %cst_7 = arith.constant dense<0.000000e+00> : vector<32xf32>
    %14 = vector.multi_reduction <add>, %13, %cst_7 [0] : vector<98x32xf32> to vector<32xf32>
    %15 = vector.shape_cast %14 : vector<32xf32> to vector<1x32xf32>
    %cst_8 = arith.constant 9.800000e+01 : f32
    %16 = vector.broadcast %cst_8 : f32 to vector<1x32xf32>
    %17 = arith.divf %15, %16 : vector<1x32xf32>
    %cst_9 = arith.constant 9.99999974E-6 : f32
    %18 = vector.broadcast %cst_9 : f32 to vector<1x32xf32>
    %19 = arith.addf %17, %18 : vector<1x32xf32>
    %20 = math.rsqrt %19 : vector<1x32xf32>
    %21 = vector.broadcast %20 : vector<1x32xf32> to vector<98x32xf32>
    %22 = arith.mulf %12, %21 : vector<98x32xf32>
    %c0_10 = arith.constant 0 : index
    %c0_11 = arith.constant 0 : index
    %23 = vector.load %arg4[%c0_10, %c0_11] : memref<1x32xf32, #tpu.memory_space<vmem>>, vector<1x32xf32>
    %24 = vector.broadcast %23 : vector<1x32xf32> to vector<98x32xf32>
    %25 = arith.mulf %22, %24 : vector<98x32xf32>
    %c0_12 = arith.constant 0 : index
    %c0_13 = arith.constant 0 : index
    %26 = vector.load %arg5[%c0_12, %c0_13] : memref<1x32xf32, #tpu.memory_space<vmem>>, vector<1x32xf32>
    %27 = vector.broadcast %26 : vector<1x32xf32> to vector<98x32xf32>
    %28 = arith.addf %25, %27 : vector<98x32xf32>
    %cst_14 = arith.constant 0.000000e+00 : f32
    %29 = vector.broadcast %cst_14 : f32 to vector<98x32xf32>
    %30 = arith.cmpf ogt, %28, %29 : vector<98x32xf32>
    %cst_15 = arith.constant 2.000000e-01 : f32
    %31 = vector.broadcast %cst_15 : f32 to vector<98x32xf32>
    %32 = arith.mulf %31, %28 : vector<98x32xf32>
    %33 = arith.select %30, %28, %32 : vector<98x32xi1>, vector<98x32xf32>
    %c0_16 = arith.constant 0 : index
    %c0_17 = arith.constant 0 : index
    %34 = vector.load %arg6[%c0_16, %c0_17] : memref<98x32xf32, #tpu.memory_space<vmem>>, vector<98x32xf32>
    tpu.vector_store %arg6[%c0_16, %c0_17], %33 {strides = array<i32>} : memref<98x32xf32, #tpu.memory_space<vmem>>, vector<98x32xf32>,
    return
  }
  func.func @transform_0(%arg0: i32) -> (i32, i32) {
    %c0_i32 = arith.constant 0 : i32
    %c0_i32_0 = arith.constant 0 : i32
    %c0_i32_1 = arith.constant 0 : i32
    return %c0_i32, %c0_i32_0 : i32, i32
  }
  func.func @transform_1(%arg0: i32) -> (i32, i32) {
    %c0_i32 = arith.constant 0 : i32
    %c0_i32_0 = arith.constant 0 : i32
    %c0_i32_1 = arith.constant 0 : i32
    return %c0_i32, %c0_i32_0 : i32, i32
  }
  func.func @transform_2(%arg0: i32) -> (i32, i32) {
    %c0_i32 = arith.constant 0 : i32
    %c0_i32_0 = arith.constant 0 : i32
    %c0_i32_1 = arith.constant 0 : i32
    return %c0_i32, %c0_i32_0 : i32, i32
  }
  func.func @transform_3(%arg0: i32) -> (i32, i32) {
    %c0_i32 = arith.constant 0 : i32
    %c0_i32_0 = arith.constant 0 : i32
    %c0_i32_1 = arith.constant 0 : i32
    return %c0_i32, %c0_i32_0 : i32, i32
  }
  func.func @transform_4(%arg0: i32) -> (i32, i32) {
    %c0_i32 = arith.constant 0 : i32
    %c0_i32_0 = arith.constant 0 : i32
    %c0_i32_1 = arith.constant 0 : i32
    return %c0_i32, %c0_i32_0 : i32, i32
  }
  func.func @transform_5(%arg0: i32) -> (i32, i32) {
    %c0_i32 = arith.constant 0 : i32
    %c0_i32_0 = arith.constant 0 : i32
    %c0_i32_1 = arith.constant 0 : i32
    return %c0_i32, %c0_i32_0 : i32, i32
  }
}

module attributes {stable_mosaic.version = 11 : i64} {
  func.func @_conv_bn_lrelu_kernel(%arg0: i32, %arg1: memref<18x288xf32, #tpu.memory_space<vmem>>, %arg2: memref<288x64xbf16, #tpu.memory_space<vmem>>, %arg3: memref<1x64xf32, #tpu.memory_space<vmem>>, %arg4: memref<1x64xf32, #tpu.memory_space<vmem>>, %arg5: memref<1x64xf32, #tpu.memory_space<vmem>>, %arg6: memref<18x64xf32, #tpu.memory_space<vmem>>) attributes {dimension_semantics = [#tpu.dimension_semantics<arbitrary>], iteration_bounds = array<i64: 1>, scalar_prefetch = 0 : i64, scratch_operands = 0 : i64, tpu.core_type = #tpu.core_type<tc>, window_params = [{pipeline_mode = #tpu.pipeline_mode<synchronous>, transform_indices = @transform_0, window_bounds = array<i64: 18, 288>}, {pipeline_mode = #tpu.pipeline_mode<synchronous>, transform_indices = @transform_1, window_bounds = array<i64: 288, 64>}, {pipeline_mode = #tpu.pipeline_mode<synchronous>, transform_indices = @transform_2, window_bounds = array<i64: 1, 64>}, {pipeline_mode = #tpu.pipeline_mode<synchronous>, transform_indices = @transform_3, window_bounds = array<i64: 1, 64>}, {pipeline_mode = #tpu.pipeline_mode<synchronous>, transform_indices = @transform_4, window_bounds = array<i64: 1, 64>}, {pipeline_mode = #tpu.pipeline_mode<synchronous>, transform_indices = @transform_5, window_bounds = array<i64: 18, 64>}]} {
    %c0 = arith.constant 0 : index
    %c0_0 = arith.constant 0 : index
    %0 = vector.load %arg1[%c0, %c0_0] : memref<18x288xf32, #tpu.memory_space<vmem>>, vector<18x288xf32>
    %1 = arith.truncf %0 : vector<18x288xf32> to vector<18x288xbf16>
    %c0_1 = arith.constant 0 : index
    %c0_2 = arith.constant 0 : index
    %2 = vector.load %arg2[%c0_1, %c0_2] : memref<288x64xbf16, #tpu.memory_space<vmem>>, vector<288x64xbf16>
    %cst = arith.constant dense<0.000000e+00> : vector<18x64xf32>
    %3 = tpu.matmul %1, %2, %cst {dimension_numbers = #tpu.dot_dimension_numbers<[1], [0], [0], [1], [0, 0, 1, 1], [], []>} : vector<18x288xbf16>, vector<288x64xbf16>, vector<18x64xf32> -> vector<18x64xf32>
    %c0_3 = arith.constant 0 : index
    %c0_4 = arith.constant 0 : index
    %4 = vector.load %arg3[%c0_3, %c0_4] : memref<1x64xf32, #tpu.memory_space<vmem>>, vector<1x64xf32>
    %5 = vector.broadcast %4 : vector<1x64xf32> to vector<18x64xf32>
    %6 = arith.addf %3, %5 : vector<18x64xf32>
    %cst_5 = arith.constant dense<0.000000e+00> : vector<64xf32>
    %7 = vector.multi_reduction <add>, %6, %cst_5 [0] : vector<18x64xf32> to vector<64xf32>
    %8 = vector.shape_cast %7 : vector<64xf32> to vector<1x64xf32>
    %cst_6 = arith.constant 1.800000e+01 : f32
    %9 = vector.broadcast %cst_6 : f32 to vector<1x64xf32>
    %10 = arith.divf %8, %9 : vector<1x64xf32>
    %11 = vector.broadcast %10 : vector<1x64xf32> to vector<18x64xf32>
    %12 = arith.subf %6, %11 : vector<18x64xf32>
    %13 = arith.mulf %12, %12 : vector<18x64xf32>
    %cst_7 = arith.constant dense<0.000000e+00> : vector<64xf32>
    %14 = vector.multi_reduction <add>, %13, %cst_7 [0] : vector<18x64xf32> to vector<64xf32>
    %15 = vector.shape_cast %14 : vector<64xf32> to vector<1x64xf32>
    %cst_8 = arith.constant 1.800000e+01 : f32
    %16 = vector.broadcast %cst_8 : f32 to vector<1x64xf32>
    %17 = arith.divf %15, %16 : vector<1x64xf32>
    %cst_9 = arith.constant 9.99999974E-6 : f32
    %18 = vector.broadcast %cst_9 : f32 to vector<1x64xf32>
    %19 = arith.addf %17, %18 : vector<1x64xf32>
    %20 = math.rsqrt %19 : vector<1x64xf32>
    %21 = vector.broadcast %20 : vector<1x64xf32> to vector<18x64xf32>
    %22 = arith.mulf %12, %21 : vector<18x64xf32>
    %c0_10 = arith.constant 0 : index
    %c0_11 = arith.constant 0 : index
    %23 = vector.load %arg4[%c0_10, %c0_11] : memref<1x64xf32, #tpu.memory_space<vmem>>, vector<1x64xf32>
    %24 = vector.broadcast %23 : vector<1x64xf32> to vector<18x64xf32>
    %25 = arith.mulf %22, %24 : vector<18x64xf32>
    %c0_12 = arith.constant 0 : index
    %c0_13 = arith.constant 0 : index
    %26 = vector.load %arg5[%c0_12, %c0_13] : memref<1x64xf32, #tpu.memory_space<vmem>>, vector<1x64xf32>
    %27 = vector.broadcast %26 : vector<1x64xf32> to vector<18x64xf32>
    %28 = arith.addf %25, %27 : vector<18x64xf32>
    %cst_14 = arith.constant 0.000000e+00 : f32
    %29 = vector.broadcast %cst_14 : f32 to vector<18x64xf32>
    %30 = arith.cmpf ogt, %28, %29 : vector<18x64xf32>
    %cst_15 = arith.constant 2.000000e-01 : f32
    %31 = vector.broadcast %cst_15 : f32 to vector<18x64xf32>
    %32 = arith.mulf %31, %28 : vector<18x64xf32>
    %33 = arith.select %30, %28, %32 : vector<18x64xi1>, vector<18x64xf32>
    %c0_16 = arith.constant 0 : index
    %c0_17 = arith.constant 0 : index
    %34 = vector.load %arg6[%c0_16, %c0_17] : memref<18x64xf32, #tpu.memory_space<vmem>>, vector<18x64xf32>
    tpu.vector_store %arg6[%c0_16, %c0_17], %33 {strides = array<i32>} : memref<18x64xf32, #tpu.memory_space<vmem>>, vector<18x64xf32>,
    return
  }
  func.func @transform_0(%arg0: i32) -> (i32, i32) {
    %c0_i32 = arith.constant 0 : i32
    %c0_i32_0 = arith.constant 0 : i32
    %c0_i32_1 = arith.constant 0 : i32
    return %c0_i32, %c0_i32_0 : i32, i32
  }
  func.func @transform_1(%arg0: i32) -> (i32, i32) {
    %c0_i32 = arith.constant 0 : i32
    %c0_i32_0 = arith.constant 0 : i32
    %c0_i32_1 = arith.constant 0 : i32
    return %c0_i32, %c0_i32_0 : i32, i32
  }
  func.func @transform_2(%arg0: i32) -> (i32, i32) {
    %c0_i32 = arith.constant 0 : i32
    %c0_i32_0 = arith.constant 0 : i32
    %c0_i32_1 = arith.constant 0 : i32
    return %c0_i32, %c0_i32_0 : i32, i32
  }
  func.func @transform_3(%arg0: i32) -> (i32, i32) {
    %c0_i32 = arith.constant 0 : i32
    %c0_i32_0 = arith.constant 0 : i32
    %c0_i32_1 = arith.constant 0 : i32
    return %c0_i32, %c0_i32_0 : i32, i32
  }
  func.func @transform_4(%arg0: i32) -> (i32, i32) {
    %c0_i32 = arith.constant 0 : i32
    %c0_i32_0 = arith.constant 0 : i32
    %c0_i32_1 = arith.constant 0 : i32
    return %c0_i32, %c0_i32_0 : i32, i32
  }
  func.func @transform_5(%arg0: i32) -> (i32, i32) {
    %c0_i32 = arith.constant 0 : i32
    %c0_i32_0 = arith.constant 0 : i32
    %c0_i32_1 = arith.constant 0 : i32
    return %c0_i32, %c0_i32_0 : i32, i32
  }
}

module attributes {stable_mosaic.version = 11 : i64} {
  func.func @_mm_bias_kernel(%arg0: i32, %arg1: memref<32x256xf32, #tpu.memory_space<vmem>>, %arg2: memref<256x128xbf16, #tpu.memory_space<vmem>>, %arg3: memref<1x128xf32, #tpu.memory_space<vmem>>, %arg4: memref<32x128xf32, #tpu.memory_space<vmem>>) attributes {dimension_semantics = [#tpu.dimension_semantics<arbitrary>], iteration_bounds = array<i64: 1>, scalar_prefetch = 0 : i64, scratch_operands = 0 : i64, tpu.core_type = #tpu.core_type<tc>, window_params = [{pipeline_mode = #tpu.pipeline_mode<synchronous>, transform_indices = @transform_0, window_bounds = array<i64: 32, 256>}, {pipeline_mode = #tpu.pipeline_mode<synchronous>, transform_indices = @transform_1, window_bounds = array<i64: 256, 128>}, {pipeline_mode = #tpu.pipeline_mode<synchronous>, transform_indices = @transform_2, window_bounds = array<i64: 1, 128>}, {pipeline_mode = #tpu.pipeline_mode<synchronous>, transform_indices = @transform_3, window_bounds = array<i64: 32, 128>}]} {
    %c0 = arith.constant 0 : index
    %c0_0 = arith.constant 0 : index
    %0 = vector.load %arg1[%c0, %c0_0] : memref<32x256xf32, #tpu.memory_space<vmem>>, vector<32x256xf32>
    %1 = arith.truncf %0 : vector<32x256xf32> to vector<32x256xbf16>
    %c0_1 = arith.constant 0 : index
    %c0_2 = arith.constant 0 : index
    %2 = vector.load %arg2[%c0_1, %c0_2] : memref<256x128xbf16, #tpu.memory_space<vmem>>, vector<256x128xbf16>
    %cst = arith.constant dense<0.000000e+00> : vector<32x128xf32>
    %3 = tpu.matmul %1, %2, %cst {dimension_numbers = #tpu.dot_dimension_numbers<[1], [0], [0], [1], [0, 0, 1, 1], [], []>} : vector<32x256xbf16>, vector<256x128xbf16>, vector<32x128xf32> -> vector<32x128xf32>
    %c0_3 = arith.constant 0 : index
    %c0_4 = arith.constant 0 : index
    %4 = vector.load %arg3[%c0_3, %c0_4] : memref<1x128xf32, #tpu.memory_space<vmem>>, vector<1x128xf32>
    %5 = vector.broadcast %4 : vector<1x128xf32> to vector<32x128xf32>
    %6 = arith.addf %3, %5 : vector<32x128xf32>
    %c0_5 = arith.constant 0 : index
    %c0_6 = arith.constant 0 : index
    %7 = vector.load %arg4[%c0_5, %c0_6] : memref<32x128xf32, #tpu.memory_space<vmem>>, vector<32x128xf32>
    tpu.vector_store %arg4[%c0_5, %c0_6], %6 {strides = array<i32>} : memref<32x128xf32, #tpu.memory_space<vmem>>, vector<32x128xf32>,
    return
  }
  func.func @transform_0(%arg0: i32) -> (i32, i32) {
    %c0_i32 = arith.constant 0 : i32
    %c0_i32_0 = arith.constant 0 : i32
    %c0_i32_1 = arith.constant 0 : i32
    return %c0_i32, %c0_i32_0 : i32, i32
  }
  func.func @transform_1(%arg0: i32) -> (i32, i32) {
    %c0_i32 = arith.constant 0 : i32
    %c0_i32_0 = arith.constant 0 : i32
    %c0_i32_1 = arith.constant 0 : i32
    return %c0_i32, %c0_i32_0 : i32, i32
  }
  func.func @transform_2(%arg0: i32) -> (i32, i32) {
    %c0_i32 = arith.constant 0 : i32
    %c0_i32_0 = arith.constant 0 : i32
    %c0_i32_1 = arith.constant 0 : i32
    return %c0_i32, %c0_i32_0 : i32, i32
  }
  func.func @transform_3(%arg0: i32) -> (i32, i32) {
    %c0_i32 = arith.constant 0 : i32
    %c0_i32_0 = arith.constant 0 : i32
    %c0_i32_1 = arith.constant 0 : i32
    return %c0_i32, %c0_i32_0 : i32, i32
  }
}

module attributes {stable_mosaic.version = 11 : i64} {
  func.func @_convt_bn_lrelu_kernel(%arg0: i32, %arg1: memref<32x128xf32, #tpu.memory_space<vmem>>, %arg2: memref<128x256xbf16, #tpu.memory_space<vmem>>, %arg3: memref<1x64xf32, #tpu.memory_space<vmem>>, %arg4: memref<1x64xf32, #tpu.memory_space<vmem>>, %arg5: memref<1x64xf32, #tpu.memory_space<vmem>>, %arg6: memref<32x256xf32, #tpu.memory_space<vmem>>) attributes {dimension_semantics = [#tpu.dimension_semantics<arbitrary>], iteration_bounds = array<i64: 1>, scalar_prefetch = 0 : i64, scratch_operands = 0 : i64, tpu.core_type = #tpu.core_type<tc>, window_params = [{pipeline_mode = #tpu.pipeline_mode<synchronous>, transform_indices = @transform_0, window_bounds = array<i64: 32, 128>}, {pipeline_mode = #tpu.pipeline_mode<synchronous>, transform_indices = @transform_1, window_bounds = array<i64: 128, 256>}, {pipeline_mode = #tpu.pipeline_mode<synchronous>, transform_indices = @transform_2, window_bounds = array<i64: 1, 64>}, {pipeline_mode = #tpu.pipeline_mode<synchronous>, transform_indices = @transform_3, window_bounds = array<i64: 1, 64>}, {pipeline_mode = #tpu.pipeline_mode<synchronous>, transform_indices = @transform_4, window_bounds = array<i64: 1, 64>}, {pipeline_mode = #tpu.pipeline_mode<synchronous>, transform_indices = @transform_5, window_bounds = array<i64: 32, 256>}]} {
    %c0 = arith.constant 0 : index
    %c0_0 = arith.constant 0 : index
    %0 = vector.load %arg1[%c0, %c0_0] : memref<32x128xf32, #tpu.memory_space<vmem>>, vector<32x128xf32>
    %1 = arith.truncf %0 : vector<32x128xf32> to vector<32x128xbf16>
    %c0_1 = arith.constant 0 : index
    %c0_2 = arith.constant 0 : index
    %2 = vector.load %arg2[%c0_1, %c0_2] : memref<128x256xbf16, #tpu.memory_space<vmem>>, vector<128x256xbf16>
    %cst = arith.constant dense<0.000000e+00> : vector<32x256xf32>
    %3 = tpu.matmul %1, %2, %cst {dimension_numbers = #tpu.dot_dimension_numbers<[1], [0], [0], [1], [0, 0, 1, 1], [], []>} : vector<32x128xbf16>, vector<128x256xbf16>, vector<32x256xf32> -> vector<32x256xf32>
    %c0_3 = arith.constant 0 : index
    %c0_4 = arith.constant 0 : index
    %4 = vector.load %arg3[%c0_3, %c0_4] : memref<1x64xf32, #tpu.memory_space<vmem>>, vector<1x64xf32>
    %c0_5 = arith.constant 0 : index
    %c0_6 = arith.constant 0 : index
    %5 = vector.load %arg4[%c0_5, %c0_6] : memref<1x64xf32, #tpu.memory_space<vmem>>, vector<1x64xf32>
    %c0_7 = arith.constant 0 : index
    %c0_8 = arith.constant 0 : index
    %6 = vector.load %arg5[%c0_7, %c0_8] : memref<1x64xf32, #tpu.memory_space<vmem>>, vector<1x64xf32>
    %7 = vector.extract_strided_slice %3 {offsets = [0, 0], sizes = [32, 64], strides = [1, 1]} : vector<32x256xf32> to vector<32x64xf32>
    %8 = vector.broadcast %4 : vector<1x64xf32> to vector<32x64xf32>
    %9 = arith.addf %7, %8 : vector<32x64xf32>
    %10 = vector.extract_strided_slice %3 {offsets = [0, 64], sizes = [32, 64], strides = [1, 1]} : vector<32x256xf32> to vector<32x64xf32>
    %11 = vector.broadcast %4 : vector<1x64xf32> to vector<32x64xf32>
    %12 = arith.addf %10, %11 : vector<32x64xf32>
    %13 = vector.extract_strided_slice %3 {offsets = [0, 128], sizes = [32, 64], strides = [1, 1]} : vector<32x256xf32> to vector<32x64xf32>
    %14 = vector.broadcast %4 : vector<1x64xf32> to vector<32x64xf32>
    %15 = arith.addf %13, %14 : vector<32x64xf32>
    %16 = vector.extract_strided_slice %3 {offsets = [0, 192], sizes = [32, 64], strides = [1, 1]} : vector<32x256xf32> to vector<32x64xf32>
    %17 = vector.broadcast %4 : vector<1x64xf32> to vector<32x64xf32>
    %18 = arith.addf %16, %17 : vector<32x64xf32>
    %19 = arith.addf %9, %12 : vector<32x64xf32>
    %20 = arith.addf %19, %15 : vector<32x64xf32>
    %21 = arith.addf %20, %18 : vector<32x64xf32>
    %cst_9 = arith.constant dense<0.000000e+00> : vector<64xf32>
    %22 = vector.multi_reduction <add>, %21, %cst_9 [0] : vector<32x64xf32> to vector<64xf32>
    %23 = vector.shape_cast %22 : vector<64xf32> to vector<1x64xf32>
    %cst_10 = arith.constant 7.812500e-03 : f32
    %24 = vector.broadcast %cst_10 : f32 to vector<1x64xf32>
    %25 = arith.mulf %23, %24 : vector<1x64xf32>
    %26 = vector.broadcast %25 : vector<1x64xf32> to vector<32x64xf32>
    %27 = arith.subf %9, %26 : vector<32x64xf32>
    %28 = vector.broadcast %25 : vector<1x64xf32> to vector<32x64xf32>
    %29 = arith.subf %12, %28 : vector<32x64xf32>
    %30 = vector.broadcast %25 : vector<1x64xf32> to vector<32x64xf32>
    %31 = arith.subf %15, %30 : vector<32x64xf32>
    %32 = vector.broadcast %25 : vector<1x64xf32> to vector<32x64xf32>
    %33 = arith.subf %18, %32 : vector<32x64xf32>
    %34 = arith.mulf %27, %27 : vector<32x64xf32>
    %35 = arith.mulf %29, %29 : vector<32x64xf32>
    %36 = arith.addf %34, %35 : vector<32x64xf32>
    %37 = arith.mulf %31, %31 : vector<32x64xf32>
    %38 = arith.addf %36, %37 : vector<32x64xf32>
    %39 = arith.mulf %33, %33 : vector<32x64xf32>
    %40 = arith.addf %38, %39 : vector<32x64xf32>
    %cst_11 = arith.constant dense<0.000000e+00> : vector<64xf32>
    %41 = vector.multi_reduction <add>, %40, %cst_11 [0] : vector<32x64xf32> to vector<64xf32>
    %42 = vector.shape_cast %41 : vector<64xf32> to vector<1x64xf32>
    %cst_12 = arith.constant 7.812500e-03 : f32
    %43 = vector.broadcast %cst_12 : f32 to vector<1x64xf32>
    %44 = arith.mulf %42, %43 : vector<1x64xf32>
    %cst_13 = arith.constant 9.99999974E-6 : f32
    %45 = vector.broadcast %cst_13 : f32 to vector<1x64xf32>
    %46 = arith.addf %44, %45 : vector<1x64xf32>
    %47 = math.rsqrt %46 : vector<1x64xf32>
    %48 = arith.mulf %47, %5 : vector<1x64xf32>
    %49 = vector.broadcast %48 : vector<1x64xf32> to vector<32x64xf32>
    %50 = arith.mulf %27, %49 : vector<32x64xf32>
    %51 = vector.broadcast %6 : vector<1x64xf32> to vector<32x64xf32>
    %52 = arith.addf %50, %51 : vector<32x64xf32>
    %cst_14 = arith.constant 0.000000e+00 : f32
    %53 = vector.broadcast %cst_14 : f32 to vector<32x64xf32>
    %54 = arith.cmpf ogt, %52, %53 : vector<32x64xf32>
    %cst_15 = arith.constant 2.000000e-01 : f32
    %55 = vector.broadcast %cst_15 : f32 to vector<32x64xf32>
    %56 = arith.mulf %55, %52 : vector<32x64xf32>
    %57 = arith.select %54, %52, %56 : vector<32x64xi1>, vector<32x64xf32>
    %58 = vector.broadcast %48 : vector<1x64xf32> to vector<32x64xf32>
    %59 = arith.mulf %29, %58 : vector<32x64xf32>
    %60 = vector.broadcast %6 : vector<1x64xf32> to vector<32x64xf32>
    %61 = arith.addf %59, %60 : vector<32x64xf32>
    %cst_16 = arith.constant 0.000000e+00 : f32
    %62 = vector.broadcast %cst_16 : f32 to vector<32x64xf32>
    %63 = arith.cmpf ogt, %61, %62 : vector<32x64xf32>
    %cst_17 = arith.constant 2.000000e-01 : f32
    %64 = vector.broadcast %cst_17 : f32 to vector<32x64xf32>
    %65 = arith.mulf %64, %61 : vector<32x64xf32>
    %66 = arith.select %63, %61, %65 : vector<32x64xi1>, vector<32x64xf32>
    %67 = vector.broadcast %48 : vector<1x64xf32> to vector<32x64xf32>
    %68 = arith.mulf %31, %67 : vector<32x64xf32>
    %69 = vector.broadcast %6 : vector<1x64xf32> to vector<32x64xf32>
    %70 = arith.addf %68, %69 : vector<32x64xf32>
    %cst_18 = arith.constant 0.000000e+00 : f32
    %71 = vector.broadcast %cst_18 : f32 to vector<32x64xf32>
    %72 = arith.cmpf ogt, %70, %71 : vector<32x64xf32>
    %cst_19 = arith.constant 2.000000e-01 : f32
    %73 = vector.broadcast %cst_19 : f32 to vector<32x64xf32>
    %74 = arith.mulf %73, %70 : vector<32x64xf32>
    %75 = arith.select %72, %70, %74 : vector<32x64xi1>, vector<32x64xf32>
    %76 = vector.broadcast %48 : vector<1x64xf32> to vector<32x64xf32>
    %77 = arith.mulf %33, %76 : vector<32x64xf32>
    %78 = vector.broadcast %6 : vector<1x64xf32> to vector<32x64xf32>
    %79 = arith.addf %77, %78 : vector<32x64xf32>
    %cst_20 = arith.constant 0.000000e+00 : f32
    %80 = vector.broadcast %cst_20 : f32 to vector<32x64xf32>
    %81 = arith.cmpf ogt, %79, %80 : vector<32x64xf32>
    %cst_21 = arith.constant 2.000000e-01 : f32
    %82 = vector.broadcast %cst_21 : f32 to vector<32x64xf32>
    %83 = arith.mulf %82, %79 : vector<32x64xf32>
    %84 = arith.select %81, %79, %83 : vector<32x64xi1>, vector<32x64xf32>
    %85 = tpu.concatenate %57, %66, %75, %84 in 1 : vector<32x64xf32>, vector<32x64xf32>, vector<32x64xf32>, vector<32x64xf32> -> vector<32x256xf32>
    %c0_22 = arith.constant 0 : index
    %c0_23 = arith.constant 0 : index
    %86 = vector.load %arg6[%c0_22, %c0_23] : memref<32x256xf32, #tpu.memory_space<vmem>>, vector<32x256xf32>
    tpu.vector_store %arg6[%c0_22, %c0_23], %85 {strides = array<i32>} : memref<32x256xf32, #tpu.memory_space<vmem>>, vector<32x256xf32>,
    return
  }
  func.func @transform_0(%arg0: i32) -> (i32, i32) {
    %c0_i32 = arith.constant 0 : i32
    %c0_i32_0 = arith.constant 0 : i32
    %c0_i32_1 = arith.constant 0 : i32
    return %c0_i32, %c0_i32_0 : i32, i32
  }
  func.func @transform_1(%arg0: i32) -> (i32, i32) {
    %c0_i32 = arith.constant 0 : i32
    %c0_i32_0 = arith.constant 0 : i32
    %c0_i32_1 = arith.constant 0 : i32
    return %c0_i32, %c0_i32_0 : i32, i32
  }
  func.func @transform_2(%arg0: i32) -> (i32, i32) {
    %c0_i32 = arith.constant 0 : i32
    %c0_i32_0 = arith.constant 0 : i32
    %c0_i32_1 = arith.constant 0 : i32
    return %c0_i32, %c0_i32_0 : i32, i32
  }
  func.func @transform_3(%arg0: i32) -> (i32, i32) {
    %c0_i32 = arith.constant 0 : i32
    %c0_i32_0 = arith.constant 0 : i32
    %c0_i32_1 = arith.constant 0 : i32
    return %c0_i32, %c0_i32_0 : i32, i32
  }
  func.func @transform_4(%arg0: i32) -> (i32, i32) {
    %c0_i32 = arith.constant 0 : i32
    %c0_i32_0 = arith.constant 0 : i32
    %c0_i32_1 = arith.constant 0 : i32
    return %c0_i32, %c0_i32_0 : i32, i32
  }
  func.func @transform_5(%arg0: i32) -> (i32, i32) {
    %c0_i32 = arith.constant 0 : i32
    %c0_i32_0 = arith.constant 0 : i32
    %c0_i32_1 = arith.constant 0 : i32
    return %c0_i32, %c0_i32_0 : i32, i32
  }
}

module attributes {stable_mosaic.version = 11 : i64} {
  func.func @_convt_bn_lrelu_conv1x1_tanh_kernel(%arg0: i32, %arg1: memref<128x64xf32, #tpu.memory_space<vmem>>, %arg2: memref<64x128xbf16, #tpu.memory_space<vmem>>, %arg3: memref<1x32xf32, #tpu.memory_space<vmem>>, %arg4: memref<1x32xf32, #tpu.memory_space<vmem>>, %arg5: memref<1x32xf32, #tpu.memory_space<vmem>>, %arg6: memref<128x16xbf16, #tpu.memory_space<vmem>>, %arg7: memref<1x16xf32, #tpu.memory_space<vmem>>, %arg8: memref<128x16xf32, #tpu.memory_space<vmem>>) attributes {dimension_semantics = [#tpu.dimension_semantics<arbitrary>], iteration_bounds = array<i64: 1>, scalar_prefetch = 0 : i64, scratch_operands = 0 : i64, tpu.core_type = #tpu.core_type<tc>, window_params = [{pipeline_mode = #tpu.pipeline_mode<synchronous>, transform_indices = @transform_0, window_bounds = array<i64: 128, 64>}, {pipeline_mode = #tpu.pipeline_mode<synchronous>, transform_indices = @transform_1, window_bounds = array<i64: 64, 128>}, {pipeline_mode = #tpu.pipeline_mode<synchronous>, transform_indices = @transform_2, window_bounds = array<i64: 1, 32>}, {pipeline_mode = #tpu.pipeline_mode<synchronous>, transform_indices = @transform_3, window_bounds = array<i64: 1, 32>}, {pipeline_mode = #tpu.pipeline_mode<synchronous>, transform_indices = @transform_4, window_bounds = array<i64: 1, 32>}, {pipeline_mode = #tpu.pipeline_mode<synchronous>, transform_indices = @transform_5, window_bounds = array<i64: 128, 16>}, {pipeline_mode = #tpu.pipeline_mode<synchronous>, transform_indices = @transform_6, window_bounds = array<i64: 1, 16>}, {pipeline_mode = #tpu.pipeline_mode<synchronous>, transform_indices = @transform_7, window_bounds = array<i64: 128, 16>}]} {
    %c0 = arith.constant 0 : index
    %c0_0 = arith.constant 0 : index
    %0 = vector.load %arg1[%c0, %c0_0] : memref<128x64xf32, #tpu.memory_space<vmem>>, vector<128x64xf32>
    %1 = arith.truncf %0 : vector<128x64xf32> to vector<128x64xbf16>
    %c0_1 = arith.constant 0 : index
    %c0_2 = arith.constant 0 : index
    %2 = vector.load %arg2[%c0_1, %c0_2] : memref<64x128xbf16, #tpu.memory_space<vmem>>, vector<64x128xbf16>
    %cst = arith.constant dense<0.000000e+00> : vector<128x128xf32>
    %3 = tpu.matmul %1, %2, %cst {dimension_numbers = #tpu.dot_dimension_numbers<[1], [0], [0], [1], [0, 0, 1, 1], [], []>} : vector<128x64xbf16>, vector<64x128xbf16>, vector<128x128xf32> -> vector<128x128xf32>
    %c0_3 = arith.constant 0 : index
    %c0_4 = arith.constant 0 : index
    %4 = vector.load %arg3[%c0_3, %c0_4] : memref<1x32xf32, #tpu.memory_space<vmem>>, vector<1x32xf32>
    %c0_5 = arith.constant 0 : index
    %c0_6 = arith.constant 0 : index
    %5 = vector.load %arg4[%c0_5, %c0_6] : memref<1x32xf32, #tpu.memory_space<vmem>>, vector<1x32xf32>
    %c0_7 = arith.constant 0 : index
    %c0_8 = arith.constant 0 : index
    %6 = vector.load %arg5[%c0_7, %c0_8] : memref<1x32xf32, #tpu.memory_space<vmem>>, vector<1x32xf32>
    %7 = vector.extract_strided_slice %3 {offsets = [0, 0], sizes = [128, 32], strides = [1, 1]} : vector<128x128xf32> to vector<128x32xf32>
    %8 = vector.broadcast %4 : vector<1x32xf32> to vector<128x32xf32>
    %9 = arith.addf %7, %8 : vector<128x32xf32>
    %10 = vector.extract_strided_slice %3 {offsets = [0, 32], sizes = [128, 32], strides = [1, 1]} : vector<128x128xf32> to vector<128x32xf32>
    %11 = vector.broadcast %4 : vector<1x32xf32> to vector<128x32xf32>
    %12 = arith.addf %10, %11 : vector<128x32xf32>
    %13 = vector.extract_strided_slice %3 {offsets = [0, 64], sizes = [128, 32], strides = [1, 1]} : vector<128x128xf32> to vector<128x32xf32>
    %14 = vector.broadcast %4 : vector<1x32xf32> to vector<128x32xf32>
    %15 = arith.addf %13, %14 : vector<128x32xf32>
    %16 = vector.extract_strided_slice %3 {offsets = [0, 96], sizes = [128, 32], strides = [1, 1]} : vector<128x128xf32> to vector<128x32xf32>
    %17 = vector.broadcast %4 : vector<1x32xf32> to vector<128x32xf32>
    %18 = arith.addf %16, %17 : vector<128x32xf32>
    %19 = arith.addf %9, %12 : vector<128x32xf32>
    %20 = arith.addf %19, %15 : vector<128x32xf32>
    %21 = arith.addf %20, %18 : vector<128x32xf32>
    %cst_9 = arith.constant dense<0.000000e+00> : vector<32xf32>
    %22 = vector.multi_reduction <add>, %21, %cst_9 [0] : vector<128x32xf32> to vector<32xf32>
    %23 = vector.shape_cast %22 : vector<32xf32> to vector<1x32xf32>
    %cst_10 = arith.constant 0.001953125 : f32
    %24 = vector.broadcast %cst_10 : f32 to vector<1x32xf32>
    %25 = arith.mulf %23, %24 : vector<1x32xf32>
    %26 = vector.broadcast %25 : vector<1x32xf32> to vector<128x32xf32>
    %27 = arith.subf %9, %26 : vector<128x32xf32>
    %28 = vector.broadcast %25 : vector<1x32xf32> to vector<128x32xf32>
    %29 = arith.subf %12, %28 : vector<128x32xf32>
    %30 = vector.broadcast %25 : vector<1x32xf32> to vector<128x32xf32>
    %31 = arith.subf %15, %30 : vector<128x32xf32>
    %32 = vector.broadcast %25 : vector<1x32xf32> to vector<128x32xf32>
    %33 = arith.subf %18, %32 : vector<128x32xf32>
    %34 = arith.mulf %27, %27 : vector<128x32xf32>
    %35 = arith.mulf %29, %29 : vector<128x32xf32>
    %36 = arith.addf %34, %35 : vector<128x32xf32>
    %37 = arith.mulf %31, %31 : vector<128x32xf32>
    %38 = arith.addf %36, %37 : vector<128x32xf32>
    %39 = arith.mulf %33, %33 : vector<128x32xf32>
    %40 = arith.addf %38, %39 : vector<128x32xf32>
    %cst_11 = arith.constant dense<0.000000e+00> : vector<32xf32>
    %41 = vector.multi_reduction <add>, %40, %cst_11 [0] : vector<128x32xf32> to vector<32xf32>
    %42 = vector.shape_cast %41 : vector<32xf32> to vector<1x32xf32>
    %cst_12 = arith.constant 0.001953125 : f32
    %43 = vector.broadcast %cst_12 : f32 to vector<1x32xf32>
    %44 = arith.mulf %42, %43 : vector<1x32xf32>
    %cst_13 = arith.constant 9.99999974E-6 : f32
    %45 = vector.broadcast %cst_13 : f32 to vector<1x32xf32>
    %46 = arith.addf %44, %45 : vector<1x32xf32>
    %47 = math.rsqrt %46 : vector<1x32xf32>
    %48 = arith.mulf %47, %5 : vector<1x32xf32>
    %49 = vector.broadcast %48 : vector<1x32xf32> to vector<128x32xf32>
    %50 = arith.mulf %27, %49 : vector<128x32xf32>
    %51 = vector.broadcast %6 : vector<1x32xf32> to vector<128x32xf32>
    %52 = arith.addf %50, %51 : vector<128x32xf32>
    %cst_14 = arith.constant 0.000000e+00 : f32
    %53 = vector.broadcast %cst_14 : f32 to vector<128x32xf32>
    %54 = arith.cmpf ogt, %52, %53 : vector<128x32xf32>
    %cst_15 = arith.constant 2.000000e-01 : f32
    %55 = vector.broadcast %cst_15 : f32 to vector<128x32xf32>
    %56 = arith.mulf %55, %52 : vector<128x32xf32>
    %57 = arith.select %54, %52, %56 : vector<128x32xi1>, vector<128x32xf32>
    %58 = vector.broadcast %48 : vector<1x32xf32> to vector<128x32xf32>
    %59 = arith.mulf %29, %58 : vector<128x32xf32>
    %60 = vector.broadcast %6 : vector<1x32xf32> to vector<128x32xf32>
    %61 = arith.addf %59, %60 : vector<128x32xf32>
    %cst_16 = arith.constant 0.000000e+00 : f32
    %62 = vector.broadcast %cst_16 : f32 to vector<128x32xf32>
    %63 = arith.cmpf ogt, %61, %62 : vector<128x32xf32>
    %cst_17 = arith.constant 2.000000e-01 : f32
    %64 = vector.broadcast %cst_17 : f32 to vector<128x32xf32>
    %65 = arith.mulf %64, %61 : vector<128x32xf32>
    %66 = arith.select %63, %61, %65 : vector<128x32xi1>, vector<128x32xf32>
    %67 = vector.broadcast %48 : vector<1x32xf32> to vector<128x32xf32>
    %68 = arith.mulf %31, %67 : vector<128x32xf32>
    %69 = vector.broadcast %6 : vector<1x32xf32> to vector<128x32xf32>
    %70 = arith.addf %68, %69 : vector<128x32xf32>
    %cst_18 = arith.constant 0.000000e+00 : f32
    %71 = vector.broadcast %cst_18 : f32 to vector<128x32xf32>
    %72 = arith.cmpf ogt, %70, %71 : vector<128x32xf32>
    %cst_19 = arith.constant 2.000000e-01 : f32
    %73 = vector.broadcast %cst_19 : f32 to vector<128x32xf32>
    %74 = arith.mulf %73, %70 : vector<128x32xf32>
    %75 = arith.select %72, %70, %74 : vector<128x32xi1>, vector<128x32xf32>
    %76 = vector.broadcast %48 : vector<1x32xf32> to vector<128x32xf32>
    %77 = arith.mulf %33, %76 : vector<128x32xf32>
    %78 = vector.broadcast %6 : vector<1x32xf32> to vector<128x32xf32>
    %79 = arith.addf %77, %78 : vector<128x32xf32>
    %cst_20 = arith.constant 0.000000e+00 : f32
    %80 = vector.broadcast %cst_20 : f32 to vector<128x32xf32>
    %81 = arith.cmpf ogt, %79, %80 : vector<128x32xf32>
    %cst_21 = arith.constant 2.000000e-01 : f32
    %82 = vector.broadcast %cst_21 : f32 to vector<128x32xf32>
    %83 = arith.mulf %82, %79 : vector<128x32xf32>
    %84 = arith.select %81, %79, %83 : vector<128x32xi1>, vector<128x32xf32>
    %85 = tpu.concatenate %57, %66, %75, %84 in 1 : vector<128x32xf32>, vector<128x32xf32>, vector<128x32xf32>, vector<128x32xf32> -> vector<128x128xf32>
    %86 = arith.truncf %85 : vector<128x128xf32> to vector<128x128xbf16>
    %c0_22 = arith.constant 0 : index
    %c0_23 = arith.constant 0 : index
    %87 = vector.load %arg6[%c0_22, %c0_23] : memref<128x16xbf16, #tpu.memory_space<vmem>>, vector<128x16xbf16>
    %cst_24 = arith.constant dense<0.000000e+00> : vector<128x16xf32>
    %88 = tpu.matmul %86, %87, %cst_24 {dimension_numbers = #tpu.dot_dimension_numbers<[1], [0], [0], [1], [0, 0, 1, 1], [], []>} : vector<128x128xbf16>, vector<128x16xbf16>, vector<128x16xf32> -> vector<128x16xf32>
    %c0_25 = arith.constant 0 : index
    %c0_26 = arith.constant 0 : index
    %89 = vector.load %arg7[%c0_25, %c0_26] : memref<1x16xf32, #tpu.memory_space<vmem>>, vector<1x16xf32>
    %90 = vector.broadcast %89 : vector<1x16xf32> to vector<128x16xf32>
    %91 = arith.addf %88, %90 : vector<128x16xf32>
    %92 = math.tanh %91 : vector<128x16xf32>
    %c0_27 = arith.constant 0 : index
    %c0_28 = arith.constant 0 : index
    %93 = vector.load %arg8[%c0_27, %c0_28] : memref<128x16xf32, #tpu.memory_space<vmem>>, vector<128x16xf32>
    tpu.vector_store %arg8[%c0_27, %c0_28], %92 {strides = array<i32>} : memref<128x16xf32, #tpu.memory_space<vmem>>, vector<128x16xf32>,
    return
  }
  func.func @transform_0(%arg0: i32) -> (i32, i32) {
    %c0_i32 = arith.constant 0 : i32
    %c0_i32_0 = arith.constant 0 : i32
    %c0_i32_1 = arith.constant 0 : i32
    return %c0_i32, %c0_i32_0 : i32, i32
  }
  func.func @transform_1(%arg0: i32) -> (i32, i32) {
    %c0_i32 = arith.constant 0 : i32
    %c0_i32_0 = arith.constant 0 : i32
    %c0_i32_1 = arith.constant 0 : i32
    return %c0_i32, %c0_i32_0 : i32, i32
  }
  func.func @transform_2(%arg0: i32) -> (i32, i32) {
    %c0_i32 = arith.constant 0 : i32
    %c0_i32_0 = arith.constant 0 : i32
    %c0_i32_1 = arith.constant 0 : i32
    return %c0_i32, %c0_i32_0 : i32, i32
  }
  func.func @transform_3(%arg0: i32) -> (i32, i32) {
    %c0_i32 = arith.constant 0 : i32
    %c0_i32_0 = arith.constant 0 : i32
    %c0_i32_1 = arith.constant 0 : i32
    return %c0_i32, %c0_i32_0 : i32, i32
  }
  func.func @transform_4(%arg0: i32) -> (i32, i32) {
    %c0_i32 = arith.constant 0 : i32
    %c0_i32_0 = arith.constant 0 : i32
    %c0_i32_1 = arith.constant 0 : i32
    return %c0_i32, %c0_i32_0 : i32, i32
  }
  func.func @transform_5(%arg0: i32) -> (i32, i32) {
    %c0_i32 = arith.constant 0 : i32
    %c0_i32_0 = arith.constant 0 : i32
    %c0_i32_1 = arith.constant 0 : i32
    return %c0_i32, %c0_i32_0 : i32, i32
  }
  func.func @transform_6(%arg0: i32) -> (i32, i32) {
    %c0_i32 = arith.constant 0 : i32
    %c0_i32_0 = arith.constant 0 : i32
    %c0_i32_1 = arith.constant 0 : i32
    return %c0_i32, %c0_i32_0 : i32, i32
  }
  func.func @transform_7(%arg0: i32) -> (i32, i32) {
    %c0_i32 = arith.constant 0 : i32
    %c0_i32_0 = arith.constant 0 : i32
    %c0_i32_1 = arith.constant 0 : i32
    return %c0_i32, %c0_i32_0 : i32, i32
  }
}

</mosaic_0001>

<llo_original>
// kernel: ae_forward.5
$region0: #{ae_forward.5}
  #allocation0 [shape = 'u32[]', space=smem, size = 0x4, offset = 0x4, fixed_abs, tag = 'smem constant byte address 0x4 - core index']
  #allocation1 [shape = 'u32[144,128]{1,0:T(1,128)}', space=vmem, size = 0x12000, scoped, tag = 'internal scratch']
  %s0 = inlined_call_operand.vmem [shape: f32[98,36], index: 0, kind: input, shape index: {}]
  %s1 = inlined_call_operand.vmem [shape: bf16[36,32], index: 1, kind: input, shape index: {}]
  %s2 = inlined_call_operand.vmem [shape: f32[1,32], index: 2, kind: input, shape index: {}]
  %s3 = inlined_call_operand.vmem [shape: f32[1,32], index: 3, kind: input, shape index: {}]
  %s4 = inlined_call_operand.vmem [shape: f32[1,32], index: 4, kind: input, shape index: {}]
  %s5 = inlined_call_operand.vmem [shape: f32[98,32], index: 5, kind: output, shape index: {}]
  %s6 = sld [smem:[#allocation0]]
  $region30: #{ae_forward.5} parent=0
    _
  %s8 = ssub.s32 1, %s6
  %s9 = scalar_select 0, %s8, %s6
  // Predicated region
  $region2: #{ae_forward.5} parent=0 // pred_check
    _
  $region3: #{ae_forward.5} parent=0 // pred_check_branch
    %11 = sbr.rel (0) target = $region5
  $region4: #{ae_forward.5} parent=0 // pred_region
    _
  $region5: #{ae_forward.5} parent=0 // pred_fallthru
    _
  // Predicated region
  $region6: #{ae_forward.5} parent=0 // pred_check
    _
  $region7: #{ae_forward.5} parent=0 // pred_check_branch
    %13 = sbr.rel (0) target = $region9
  $region8: #{ae_forward.5} parent=0 // pred_region
    _
  $region9: #{ae_forward.5} parent=0 // pred_fallthru
    _
  // Predicated region
  $region10: #{ae_forward.5} parent=0 // pred_check
    _
  $region11: #{ae_forward.5} parent=0 // pred_check_branch
    %15 = sbr.rel (0) target = $region13
  $region12: #{ae_forward.5} parent=0 // pred_region
    _
  $region13: #{ae_forward.5} parent=0 // pred_fallthru
    _
  // Predicated region
  $region14: #{ae_forward.5} parent=0 // pred_check
    _
  $region15: #{ae_forward.5} parent=0 // pred_check_branch
    %17 = sbr.rel (0) target = $region17
  $region16: #{ae_forward.5} parent=0 // pred_region
    _
  $region17: #{ae_forward.5} parent=0 // pred_fallthru
    _
  // Predicated region
  $region18: #{ae_forward.5} parent=0 // pred_check
    _
  $region19: #{ae_forward.5} parent=0 // pred_check_branch
    %19 = sbr.rel (0) target = $region21
  $region20: #{ae_forward.5} parent=0 // pred_region
    _
  $region21: #{ae_forward.5} parent=0 // pred_fallthru
    _
  %v21 = vld [vmem:[%s0] sm:$0xff]
  %v22 = vld [vmem:[%s0 + $0x8] sm:$0xff]
  %v23 = vld [vmem:[%s0 + $0x10] sm:$0xff]
  %v24 = vld [vmem:[%s0 + $0x18] sm:$0xff]
  %v25 = vld [vmem:[%s0 + $0x20] sm:$0xff]
  %v26 = vld [vmem:[%s0 + $0x28] sm:$0xff]
  %v27 = vld [vmem:[%s0 + $0x30] sm:$0xff]
  %v28 = vld [vmem:[%s0 + $0x38] sm:$0xff]
  %v29 = vld [vmem:[%s0 + $0x40] sm:$0xff]
  %v30 = vld [vmem:[%s0 + $0x48] sm:$0xff]
  %v31 = vld [vmem:[%s0 + $0x50] sm:$0xff]
  %v32 = vld [vmem:[%s0 + $0x58] sm:$0xff]
  %v33 = vld [vmem:[%s0 + $0x60] sm:$0x3]
  %v34 = vpack.c.bf16 %v22, %v21
  %v35 = vpack.c.bf16 %v24, %v23
  %v36 = vpack.c.bf16 %v26, %v25
  %v37 = vpack.c.bf16 %v28, %v27
  %v38 = vpack.c.bf16 %v30, %v29
  %v39 = vpack.c.bf16 %v32, %v31
  %v40 = vpack.c.bf16 %v33, %v33
  %v41 = vld [vmem:[%s1] sm:$0xf]
  %v42 = vld [vmem:[%s1 + $0x4] sm:$0xf]
  %v43 = vld [vmem:[%s1 + $0x8] sm:$0xf]
  %v44 = vld [vmem:[%s1 + $0xc] sm:$0xf]
  %v45 = vld [vmem:[%s1 + $0x10] sm:$0x3]
  %v46 = vld [vmem:[%s2] sm:$0x1]
  %v48 = vlaneseq
  %v49 = vshrl.u32 %v48, 7
  %v50 = vsub.s32 0, %v49
  %v51 = vrot.slane %v46, %v50
  %v58 = vunpack.c.l.b16 %v41
  %v59 = vunpack.c.l.b16 %v42
  %v60 = vunpack.c.l.b16 %v43
  %v61 = vunpack.c.l.b16 %v44
  %v62 = vunpack.c.l.b16 %v45
  %v63 = vpack.c.b16 %v59, %v58
  %v64 = vpack.c.b16 %v61, %v60
  %v65 = vpack.c.b16 %v62, %v62
  %vm68 = vcmask 293888
  %v70 = vsel %vm68, %v34, 0
  %v73 = vsel %vm68, %v35, 0
  %v76 = vsel %vm68, %v36, 0
  %v79 = vsel %vm68, %v37, 0
  %v82 = vsel %vm68, %v38, 0
  %v85 = vsel %vm68, %v39, 0
  %v88 = vsel %vm68, %v40, 0
  %vm90 = vcmask 1041408
  %v92 = vsel %vm90, %v65, 0
  %94 = vmatprep.subr.bf16.mxu0 0
  %95 = vmatpush1.bf16.msra.mxu0 %v63
  %96 = vmatprep.subr.bf16.mxu0 0
  %97 = vmatpush1.bf16.msra.mxu0 %v64
  %98 = vmatprep.subr.bf16.mxu0 0
  %99 = vmatpush1.bf16.msra.mxu0 %v92
  %100 = vmatprep.subr.bf16.mxu0 0
  %101 = vmatpush1.bf16.msra.mxu0 0
  %102 = vmatprep.subr.bf16.mxu0 0
  %103 = vmatpush1.bf16.msra.mxu0 0
  %104 = vmatprep.subr.bf16.mxu0 0
  %105 = vmatpush1.bf16.msra.mxu0 0
  %106 = vmatprep.subr.bf16.mxu0 0
  %107 = vmatpush1.bf16.msra.mxu0 0
  %108 = vmatprep.subr.bf16.mxu0 0
  %109 = vmatpush1.bf16.msra.mxu0 0
  %110 = vmatprep.subr.bf16.mxu0 0
  %111 = vmatpush1.bf16.msra.mxu0 0
  %112 = vmatprep.subr.bf16.mxu0 0
  %113 = vmatpush1.bf16.msra.mxu0 0
  %114 = vmatprep.subr.bf16.mxu0 0
  %115 = vmatpush1.bf16.msra.mxu0 0
  %116 = vmatprep.subr.bf16.mxu0 0
  %117 = vmatpush1.bf16.msra.mxu0 0
  %118 = vmatprep.subr.bf16.mxu0 0
  %119 = vmatpush1.bf16.msra.mxu0 0
  %120 = vmatprep.subr.bf16.mxu0 0
  %121 = vmatpush1.bf16.msra.mxu0 0
  %122 = vmatprep.subr.bf16.mxu0 0
  %123 = vmatpush1.bf16.msra.mxu0 0
  %124 = vmatprep.subr.bf16.mxu0 0
  %125 = vmatpush1.bf16.msra.mxu0 0
  %126 = vmatprep.mubr.bf16.mxu0 0
  %127 = vmatmul.mubr.bf16.gmra.mrb[0].mxu0 %v70
  %v128 = vpop.f32.mrb[0].mxu0
  %v129 = vadd.f32 %v51, %v128
  %v130 = vpop.f32.mrb[0].mxu0
  %v131 = vpop.f32.mrb[0].mxu0
  %v132 = vadd.f32 %v51, %v131
  %v133 = vpop.f32.mrb[0].mxu0
  %134 = vmatprep.mubr.bf16.mxu0 0
  %135 = vmatmul.mubr.bf16.gmra.mrb[0].mxu0 %v73
  %v136 = vpop.f32.mrb[0].mxu0
  %v137 = vadd.f32 %v51, %v136
  %v138 = vpop.f32.mrb[0].mxu0
  %v139 = vpop.f32.mrb[0].mxu0
  %v140 = vadd.f32 %v51, %v139
  %v141 = vpop.f32.mrb[0].mxu0
  %142 = vmatprep.mubr.bf16.mxu0 0
  %143 = vmatmul.mubr.bf16.gmra.mrb[0].mxu0 %v76
  %v144 = vpop.f32.mrb[0].mxu0
  %v145 = vadd.f32 %v51, %v144
  %v146 = vpop.f32.mrb[0].mxu0
  %v147 = vpop.f32.mrb[0].mxu0
  %v148 = vadd.f32 %v51, %v147
  %v149 = vpop.f32.mrb[0].mxu0
  %150 = vmatprep.mubr.bf16.mxu0 0
  %151 = vmatmul.mubr.bf16.gmra.mrb[0].mxu0 %v79
  %v152 = vpop.f32.mrb[0].mxu0
  %v153 = vadd.f32 %v51, %v152
  %v154 = vpop.f32.mrb[0].mxu0
  %v155 = vpop.f32.mrb[0].mxu0
  %v156 = vadd.f32 %v51, %v155
  %v157 = vpop.f32.mrb[0].mxu0
  %158 = vmatprep.mubr.bf16.mxu0 0
  %159 = vmatmul.mubr.bf16.gmra.mrb[0].mxu0 %v82
  %v160 = vpop.f32.mrb[0].mxu0
  %v161 = vadd.f32 %v51, %v160
  %v162 = vpop.f32.mrb[0].mxu0
  %v163 = vpop.f32.mrb[0].mxu0
  %v164 = vadd.f32 %v51, %v163
  %v165 = vpop.f32.mrb[0].mxu0
  %166 = vmatprep.mubr.bf16.mxu0 0
  %167 = vmatmul.mubr.bf16.gmra.mrb[0].mxu0 %v85
  %v168 = vpop.f32.mrb[0].mxu0
  %v169 = vadd.f32 %v51, %v168
  %v170 = vpop.f32.mrb[0].mxu0
  %v171 = vpop.f32.mrb[0].mxu0
  %v172 = vadd.f32 %v51, %v171
  %v173 = vpop.f32.mrb[0].mxu0
  %174 = vmatprep.mubr.bf16.mxu0 0
  %175 = vmatmul.mubr.bf16.gmra.mrb[0].mxu0 %v88
  %v176 = vpop.f32.mrb[0].mxu0
  %v177 = vadd.f32 %v51, %v176
  %v178 = vpop.f32.mrb[0].mxu0
  %v179 = vpop.f32.mrb[0].mxu0
  %v180 = vpop.f32.mrb[0].mxu0
  %181 = vdwg.mxu0
  %vm182 = vcmask 261120
  %v183 = vsel %vm182, %v129, 0.0
  %v184 = vsel %vm182, %v132, 0.0
  %v185 = vadd.f32 %v183, %v184
  %v186 = vsel %vm182, %v137, 0.0
  %v187 = vadd.f32 %v185, %v186
  %v188 = vsel %vm182, %v140, 0.0
  %v189 = vadd.f32 %v187, %v188
  %v190 = vsel %vm182, %v145, 0.0
  %v191 = vadd.f32 %v189, %v190
  %v192 = vsel %vm182, %v148, 0.0
  %v193 = vadd.f32 %v191, %v192
  %v194 = vsel %vm182, %v153, 0.0
  %v195 = vadd.f32 %v193, %v194
  %v196 = vsel %vm182, %v156, 0.0
  %v197 = vadd.f32 %v195, %v196
  %v198 = vsel %vm182, %v161, 0.0
  %v199 = vadd.f32 %v197, %v198
  %v200 = vsel %vm182, %v164, 0.0
  %v201 = vadd.f32 %v199, %v200
  %v202 = vsel %vm182, %v169, 0.0
  %v203 = vadd.f32 %v201, %v202
  %v204 = vsel %vm182, %v172, 0.0
  %v205 = vadd.f32 %v203, %v204
  %vm206 = vcmask 254976
  %v207 = vsel %vm206, %v177, 0.0
  %v208 = vadd.f32 %v205, %v207
  %v209 = vrot.slane %v208, 4
  %v210 = vadd.f32 %v208, %v209
  %v211 = vrot.slane %v210, 2
  %v212 = vadd.f32 %v210, %v211
  %v213 = vrot.slane %v212, 1
  %v214 = vadd.f32 %v212, %v213
  %v215 = vrcp.pop 98.0
  %v216 = vmul.f32 %v214, %v215
  %v217 = vsub.f32 %v129, %v216
  %v218 = vsub.f32 %v132, %v216
  %v219 = vsub.f32 %v137, %v216
  %v220 = vsub.f32 %v140, %v216
  %v221 = vsub.f32 %v145, %v216
  %v222 = vsub.f32 %v148, %v216
  %v223 = vsub.f32 %v153, %v216
  %v224 = vsub.f32 %v156, %v216
  %v225 = vsub.f32 %v161, %v216
  %v226 = vsub.f32 %v164, %v216
  %v227 = vsub.f32 %v169, %v216
  %v228 = vsub.f32 %v172, %v216
  %v229 = vsub.f32 %v177, %v216
  %v230 = vmul.f32 %v217, %v217
  %v231 = vmul.f32 %v218, %v218
  %v232 = vmul.f32 %v219, %v219
  %v233 = vmul.f32 %v220, %v220
  %v234 = vmul.f32 %v221, %v221
  %v235 = vmul.f32 %v222, %v222
  %v236 = vmul.f32 %v223, %v223
  %v237 = vmul.f32 %v224, %v224
  %v238 = vmul.f32 %v225, %v225
  %v239 = vmul.f32 %v226, %v226
  %v240 = vmul.f32 %v227, %v227
  %v241 = vmul.f32 %v228, %v228
  %v242 = vmul.f32 %v229, %v229
  %v243 = vsel %vm182, %v230, 0.0
  %v244 = vsel %vm182, %v231, 0.0
  %v245 = vadd.f32 %v243, %v244
  %v246 = vsel %vm182, %v232, 0.0
  %v247 = vadd.f32 %v245, %v246
  %v248 = vsel %vm182, %v233, 0.0
  %v249 = vadd.f32 %v247, %v248
  %v250 = vsel %vm182, %v234, 0.0
  %v251 = vadd.f32 %v249, %v250
  %v252 = vsel %vm182, %v235, 0.0
  %v253 = vadd.f32 %v251, %v252
  %v254 = vsel %vm182, %v236, 0.0
  %v255 = vadd.f32 %v253, %v254
  %v256 = vsel %vm182, %v237, 0.0
  %v257 = vadd.f32 %v255, %v256
  %v258 = vsel %vm182, %v238, 0.0
  %v259 = vadd.f32 %v257, %v258
  %v260 = vsel %vm182, %v239, 0.0
  %v261 = vadd.f32 %v259, %v260
  %v262 = vsel %vm182, %v240, 0.0
  %v263 = vadd.f32 %v261, %v262
  %v264 = vsel %vm182, %v241, 0.0
  %v265 = vadd.f32 %v263, %v264
  %v266 = vsel %vm206, %v242, 0.0
  %v267 = vadd.f32 %v265, %v266
  %v268 = vrot.slane %v267, 4
  %v269 = vadd.f32 %v267, %v268
  %v270 = vrot.slane %v269, 2
  %v271 = vadd.f32 %v269, %v270
  %v272 = vrot.slane %v271, 1
  %v273 = vadd.f32 %v271, %v272
  %v274 = vmul.f32 %v273, %v215
  %v275 = vadd.f32 %v274, 1e-05
  %v276 = vrsqrt.pop %v275
  %v277 = vmul.f32 %v217, %v276
  %v278 = vmul.f32 %v218, %v276
  %v279 = vmul.f32 %v219, %v276
  %v280 = vmul.f32 %v220, %v276
  %v281 = vmul.f32 %v221, %v276
  %v282 = vmul.f32 %v222, %v276
  %v283 = vmul.f32 %v223, %v276
  %v284 = vmul.f32 %v224, %v276
  %v285 = vmul.f32 %v225, %v276
  %v286 = vmul.f32 %v226, %v276
  %v287 = vmul.f32 %v227, %v276
  %v288 = vmul.f32 %v228, %v276
  %v289 = vmul.f32 %v229, %v276
  %v290 = vld [vmem:[%s3] sm:$0x1]
  %v292 = vlaneseq
  %v293 = vshrl.u32 %v292, 7
  %v294 = vsub.s32 0, %v293
  %v295 = vrot.slane %v290, %v294
  %v297 = vmul.f32 %v277, %v295
  %v298 = vmul.f32 %v278, %v295
  %v299 = vmul.f32 %v279, %v295
  %v300 = vmul.f32 %v280, %v295
  %v301 = vmul.f32 %v281, %v295
  %v302 = vmul.f32 %v282, %v295
  %v303 = vmul.f32 %v283, %v295
  %v304 = vmul.f32 %v284, %v295
  %v305 = vmul.f32 %v285, %v295
  %v306 = vmul.f32 %v286, %v295
  %v307 = vmul.f32 %v287, %v295
  %v308 = vmul.f32 %v288, %v295
  %v309 = vmul.f32 %v289, %v295
  %v310 = vld [vmem:[%s4] sm:$0x1]
  %v312 = vlaneseq
  %v313 = vshrl.u32 %v312, 7
  %v314 = vsub.s32 0, %v313
  %v315 = vrot.slane %v310, %v314
  %v317 = vadd.f32 %v297, %v315
  %v318 = vadd.f32 %v298, %v315
  %v319 = vadd.f32 %v299, %v315
  %v320 = vadd.f32 %v300, %v315
  %v321 = vadd.f32 %v301, %v315
  %v322 = vadd.f32 %v302, %v315
  %v323 = vadd.f32 %v303, %v315
  %v324 = vadd.f32 %v304, %v315
  %v325 = vadd.f32 %v305, %v315
  %v326 = vadd.f32 %v306, %v315
  %v327 = vadd.f32 %v307, %v315
  %v328 = vadd.f32 %v308, %v315
  %v329 = vadd.f32 %v309, %v315
  %vm330 = vcmp.gt.f32.partialorder %v317, 0.0
  %vm331 = vcmp.gt.f32.partialorder %v318, 0.0
  %vm332 = vcmp.gt.f32.partialorder %v319, 0.0
  %vm333 = vcmp.gt.f32.partialorder %v320, 0.0
  %vm334 = vcmp.gt.f32.partialorder %v321, 0.0
  %vm335 = vcmp.gt.f32.partialorder %v322, 0.0
  %vm336 = vcmp.gt.f32.partialorder %v323, 0.0
  %vm337 = vcmp.gt.f32.partialorder %v324, 0.0
  %vm338 = vcmp.gt.f32.partialorder %v325, 0.0
  %vm339 = vcmp.gt.f32.partialorder %v326, 0.0
  %vm340 = vcmp.gt.f32.partialorder %v327, 0.0
  %vm341 = vcmp.gt.f32.partialorder %v328, 0.0
  %vm342 = vcmp.gt.f32.partialorder %v329, 0.0
  %v343 = vmul.f32 %v317, 0.2
  %v344 = vmul.f32 %v318, 0.2
  %v345 = vmul.f32 %v319, 0.2
  %v346 = vmul.f32 %v320, 0.2
  %v347 = vmul.f32 %v321, 0.2
  %v348 = vmul.f32 %v322, 0.2
  %v349 = vmul.f32 %v323, 0.2
  %v350 = vmul.f32 %v324, 0.2
  %v351 = vmul.f32 %v325, 0.2
  %v352 = vmul.f32 %v326, 0.2
  %v353 = vmul.f32 %v327, 0.2
  %v354 = vmul.f32 %v328, 0.2
  %v355 = vmul.f32 %v329, 0.2
  %v356 = vsel %vm330, %v317, %v343
  %v357 = vsel %vm331, %v318, %v344
  %v358 = vsel %vm332, %v319, %v345
  %v359 = vsel %vm333, %v320, %v346
  %v360 = vsel %vm334, %v321, %v347
  %v361 = vsel %vm335, %v322, %v348
  %v362 = vsel %vm336, %v323, %v349
  %v363 = vsel %vm337, %v324, %v350
  %v364 = vsel %vm338, %v325, %v351
  %v365 = vsel %vm339, %v326, %v352
  %v366 = vsel %vm340, %v327, %v353
  %v367 = vsel %vm341, %v328, %v354
  %v368 = vsel %vm342, %v329, %v355
  %369 = vst.msk [vmem:[%s5] sm:$0xff] %vm182, %v356
  %370 = vst.msk [vmem:[%s5 + $0x8] sm:$0xff] %vm182, %v357
  %371 = vst.msk [vmem:[%s5 + $0x10] sm:$0xff] %vm182, %v358
  %372 = vst.msk [vmem:[%s5 + $0x18] sm:$0xff] %vm182, %v359
  %373 = vst.msk [vmem:[%s5 + $0x20] sm:$0xff] %vm182, %v360
  %374 = vst.msk [vmem:[%s5 + $0x28] sm:$0xff] %vm182, %v361
  %375 = vst.msk [vmem:[%s5 + $0x30] sm:$0xff] %vm182, %v362
  %376 = vst.msk [vmem:[%s5 + $0x38] sm:$0xff] %vm182, %v363
  %377 = vst.msk [vmem:[%s5 + $0x40] sm:$0xff] %vm182, %v364
  %378 = vst.msk [vmem:[%s5 + $0x48] sm:$0xff] %vm182, %v365
  %379 = vst.msk [vmem:[%s5 + $0x50] sm:$0xff] %vm182, %v366
  %380 = vst.msk [vmem:[%s5 + $0x58] sm:$0xff] %vm182, %v367
  %381 = vst.msk [vmem:[%s5 + $0x60] sm:$0x3] %vm206, %v368
  // Predicated region
  $region22: #{ae_forward.5} parent=0 // pred_check
    _
  $region23: #{ae_forward.5} parent=0 // pred_check_branch
    %383 = sbr.rel (0) target = $region25
  $region24: #{ae_forward.5} parent=0 // pred_region
    _
  $region25: #{ae_forward.5} parent=0 // pred_fallthru
    _
  // Predicated region
  $region26: #{ae_forward.5} parent=0 // pred_check
    _
  $region27: #{ae_forward.5} parent=0 // pred_check_branch
    %385 = sbr.rel (0) target = $region29
  $region28: #{ae_forward.5} parent=0 // pred_region
    _
  $region29: #{ae_forward.5} parent=0 // pred_fallthru
    _

// kernel: ae_forward.6
$region0: #{ae_forward.6}
  #allocation0 [shape = 'u32[]', space=smem, size = 0x4, offset = 0x4, fixed_abs, tag = 'smem constant byte address 0x4 - core index']
  #allocation1 [shape = 'u32[144,128]{1,0:T(1,128)}', space=vmem, size = 0x12000, scoped, tag = 'internal scratch']
  %s0 = inlined_call_operand.vmem [shape: f32[18,288], index: 0, kind: input, shape index: {}]
  %s1 = inlined_call_operand.vmem [shape: bf16[288,64], index: 1, kind: input, shape index: {}]
  %s2 = inlined_call_operand.vmem [shape: f32[1,64], index: 2, kind: input, shape index: {}]
  %s3 = inlined_call_operand.vmem [shape: f32[1,64], index: 3, kind: input, shape index: {}]
  %s4 = inlined_call_operand.vmem [shape: f32[1,64], index: 4, kind: input, shape index: {}]
  %s5 = inlined_call_operand.vmem [shape: f32[18,64], index: 5, kind: output, shape index: {}]
  %s6 = sld [smem:[#allocation0]]
  $region30: #{ae_forward.6} parent=0
    _
  %s8 = ssub.s32 1, %s6
  %s9 = scalar_select 0, %s8, %s6
  // Predicated region
  $region2: #{ae_forward.6} parent=0 // pred_check
    _
  $region3: #{ae_forward.6} parent=0 // pred_check_branch
    %11 = sbr.rel (0) target = $region5
  $region4: #{ae_forward.6} parent=0 // pred_region
    _
  $region5: #{ae_forward.6} parent=0 // pred_fallthru
    _
  // Predicated region
  $region6: #{ae_forward.6} parent=0 // pred_check
    _
  $region7: #{ae_forward.6} parent=0 // pred_check_branch
    %13 = sbr.rel (0) target = $region9
  $region8: #{ae_forward.6} parent=0 // pred_region
    _
  $region9: #{ae_forward.6} parent=0 // pred_fallthru
    _
  // Predicated region
  $region10: #{ae_forward.6} parent=0 // pred_check
    _
  $region11: #{ae_forward.6} parent=0 // pred_check_branch
    %15 = sbr.rel (0) target = $region13
  $region12: #{ae_forward.6} parent=0 // pred_region
    _
  $region13: #{ae_forward.6} parent=0 // pred_fallthru
    _
  // Predicated region
  $region14: #{ae_forward.6} parent=0 // pred_check
    _
  $region15: #{ae_forward.6} parent=0 // pred_check_branch
    %17 = sbr.rel (0) target = $region17
  $region16: #{ae_forward.6} parent=0 // pred_region
    _
  $region17: #{ae_forward.6} parent=0 // pred_fallthru
    _
  // Predicated region
  $region18: #{ae_forward.6} parent=0 // pred_check
    _
  $region19: #{ae_forward.6} parent=0 // pred_check_branch
    %19 = sbr.rel (0) target = $region21
  $region20: #{ae_forward.6} parent=0 // pred_region
    _
  $region21: #{ae_forward.6} parent=0 // pred_fallthru
    _
  %v21 = vld [vmem:[%s0] sm:$0xff]
  %v22 = vld [vmem:[%s0 + $0x8] sm:$0xff]
  %v23 = vld [vmem:[%s0 + $0x10] sm:$0xff]
  %v24 = vld [vmem:[%s0 + $0x18] sm:$0xff]
  %v25 = vld [vmem:[%s0 + $0x20] sm:$0xff]
  %v26 = vld [vmem:[%s0 + $0x28] sm:$0xff]
  %v27 = vld [vmem:[%s0 + $0x30] sm:$0x3]
  %v28 = vld [vmem:[%s0 + $0x38] sm:$0x3]
  %v29 = vld [vmem:[%s0 + $0x40] sm:$0x3]
  %v30 = vpack.c.bf16 %v24, %v21
  %v31 = vpack.c.bf16 %v25, %v22
  %v32 = vpack.c.bf16 %v26, %v23
  %v33 = vpack.c.bf16 %v27, %v27
  %v34 = vpack.c.bf16 %v28, %v28
  %v35 = vpack.c.bf16 %v29, %v29
  %v36 = vld [vmem:[%s1] sm:$0xf]
  %v37 = vld [vmem:[%s1 + $0x4] sm:$0xf]
  %v38 = vld [vmem:[%s1 + $0x8] sm:$0xf]
  %v39 = vld [vmem:[%s1 + $0xc] sm:$0xf]
  %v40 = vld [vmem:[%s1 + $0x10] sm:$0xf]
  %v41 = vld [vmem:[%s1 + $0x14] sm:$0xf]
  %v42 = vld [vmem:[%s1 + $0x18] sm:$0xf]
  %v43 = vld [vmem:[%s1 + $0x1c] sm:$0xf]
  %v44 = vld [vmem:[%s1 + $0x20] sm:$0xf]
  %v45 = vld [vmem:[%s1 + $0x24] sm:$0xf]
  %v46 = vld [vmem:[%s1 + $0x28] sm:$0xf]
  %v47 = vld [vmem:[%s1 + $0x2c] sm:$0xf]
  %v48 = vld [vmem:[%s1 + $0x30] sm:$0xf]
  %v49 = vld [vmem:[%s1 + $0x34] sm:$0xf]
  %v50 = vld [vmem:[%s1 + $0x38] sm:$0xf]
  %v51 = vld [vmem:[%s1 + $0x3c] sm:$0xf]
  %v52 = vld [vmem:[%s1 + $0x40] sm:$0xf]
  %v53 = vld [vmem:[%s1 + $0x44] sm:$0xf]
  %v54 = vld [vmem:[%s1 + $0x48] sm:$0xf]
  %v55 = vld [vmem:[%s1 + $0x4c] sm:$0xf]
  %v56 = vld [vmem:[%s1 + $0x50] sm:$0xf]
  %v57 = vld [vmem:[%s1 + $0x54] sm:$0xf]
  %v58 = vld [vmem:[%s1 + $0x58] sm:$0xf]
  %v59 = vld [vmem:[%s1 + $0x5c] sm:$0xf]
  %v60 = vld [vmem:[%s1 + $0x60] sm:$0xf]
  %v61 = vld [vmem:[%s1 + $0x64] sm:$0xf]
  %v62 = vld [vmem:[%s1 + $0x68] sm:$0xf]
  %v63 = vld [vmem:[%s1 + $0x6c] sm:$0xf]
  %v64 = vld [vmem:[%s1 + $0x70] sm:$0xf]
  %v65 = vld [vmem:[%s1 + $0x74] sm:$0xf]
  %v66 = vld [vmem:[%s1 + $0x78] sm:$0xf]
  %v67 = vld [vmem:[%s1 + $0x7c] sm:$0xf]
  %v68 = vld [vmem:[%s1 + $0x80] sm:$0xf]
  %v69 = vld [vmem:[%s1 + $0x84] sm:$0xf]
  %v70 = vld [vmem:[%s1 + $0x88] sm:$0xf]
  %v71 = vld [vmem:[%s1 + $0x8c] sm:$0xf]
  %v72 = vld [vmem:[%s2] sm:$0x1]
  %v74 = vlaneseq
  %v75 = vshrl.u32 %v74, 7
  %v76 = vsub.s32 0, %v75
  %v77 = vrot.slane %v72, %v76
  %v115 = vunpack.c.l.b16 %v36
  %v116 = vunpack.c.l.b16 %v37
  %v117 = vunpack.c.l.b16 %v38
  %v118 = vunpack.c.l.b16 %v39
  %v119 = vunpack.c.l.b16 %v40
  %v120 = vunpack.c.l.b16 %v41
  %v121 = vunpack.c.l.b16 %v42
  %v122 = vunpack.c.l.b16 %v43
  %v123 = vunpack.c.l.b16 %v44
  %v124 = vunpack.c.l.b16 %v45
  %v125 = vunpack.c.l.b16 %v46
  %v126 = vunpack.c.l.b16 %v47
  %v127 = vunpack.c.l.b16 %v48
  %v128 = vunpack.c.l.b16 %v49
  %v129 = vunpack.c.l.b16 %v50
  %v130 = vunpack.c.l.b16 %v51
  %v131 = vunpack.c.l.b16 %v52
  %v132 = vunpack.c.l.b16 %v53
  %v133 = vunpack.c.l.b16 %v54
  %v134 = vunpack.c.l.b16 %v55
  %v135 = vunpack.c.l.b16 %v56
  %v136 = vunpack.c.l.b16 %v57
  %v137 = vunpack.c.l.b16 %v58
  %v138 = vunpack.c.l.b16 %v59
  %v139 = vunpack.c.l.b16 %v60
  %v140 = vunpack.c.l.b16 %v61
  %v141 = vunpack.c.l.b16 %v62
  %v142 = vunpack.c.l.b16 %v63
  %v143 = vunpack.c.l.b16 %v64
  %v144 = vunpack.c.l.b16 %v65
  %v145 = vunpack.c.l.b16 %v66
  %v146 = vunpack.c.l.b16 %v67
  %v147 = vunpack.c.l.b16 %v68
  %v148 = vunpack.c.l.b16 %v69
  %v149 = vunpack.c.l.b16 %v70
  %v150 = vunpack.c.l.b16 %v71
  %v151 = vpack.c.b16 %v116, %v115
  %v152 = vpack.c.b16 %v118, %v117
  %v153 = vpack.c.b16 %v120, %v119
  %v154 = vpack.c.b16 %v122, %v121
  %v155 = vpack.c.b16 %v124, %v123
  %v156 = vpack.c.b16 %v126, %v125
  %v157 = vpack.c.b16 %v128, %v127
  %v158 = vpack.c.b16 %v130, %v129
  %v159 = vpack.c.b16 %v132, %v131
  %v160 = vpack.c.b16 %v134, %v133
  %v161 = vpack.c.b16 %v136, %v135
  %v162 = vpack.c.b16 %v138, %v137
  %v163 = vpack.c.b16 %v140, %v139
  %v164 = vpack.c.b16 %v142, %v141
  %v165 = vpack.c.b16 %v144, %v143
  %v166 = vpack.c.b16 %v146, %v145
  %v167 = vpack.c.b16 %v148, %v147
  %v168 = vpack.c.b16 %v150, %v149
  %vm187 = vcmask 261120
  %v189 = vsel %vm187, %v32, 0
  %v192 = vsel %vm187, %v35, 0
  %194 = vmatprep.subr.bf16.mxu0 0
  %195 = vmatpush1.bf16.msra.mxu0 %v151
  %196 = vmatprep.subr.bf16.mxu0 0
  %197 = vmatpush1.bf16.msra.mxu0 %v152
  %198 = vmatprep.subr.bf16.mxu0 0
  %199 = vmatpush1.bf16.msra.mxu0 %v153
  %200 = vmatprep.subr.bf16.mxu0 0
  %201 = vmatpush1.bf16.msra.mxu0 %v154
  %202 = vmatprep.subr.bf16.mxu0 0
  %203 = vmatpush1.bf16.msra.mxu0 %v155
  %204 = vmatprep.subr.bf16.mxu0 0
  %205 = vmatpush1.bf16.msra.mxu0 %v156
  %206 = vmatprep.subr.bf16.mxu0 0
  %207 = vmatpush1.bf16.msra.mxu0 %v157
  %208 = vmatprep.subr.bf16.mxu0 0
  %209 = vmatpush1.bf16.msra.mxu0 %v158
  %210 = vmatprep.subr.bf16.mxu0 0
  %211 = vmatpush1.bf16.msra.mxu0 %v159
  %212 = vmatprep.subr.bf16.mxu0 0
  %213 = vmatpush1.bf16.msra.mxu0 %v160
  %214 = vmatprep.subr.bf16.mxu0 0
  %215 = vmatpush1.bf16.msra.mxu0 %v161
  %216 = vmatprep.subr.bf16.mxu0 0
  %217 = vmatpush1.bf16.msra.mxu0 %v162
  %218 = vmatprep.subr.bf16.mxu0 0
  %219 = vmatpush1.bf16.msra.mxu0 %v163
  %220 = vmatprep.subr.bf16.mxu0 0
  %221 = vmatpush1.bf16.msra.mxu0 %v164
  %222 = vmatprep.subr.bf16.mxu0 0
  %223 = vmatpush1.bf16.msra.mxu0 %v165
  %224 = vmatprep.subr.bf16.mxu0 0
  %225 = vmatpush1.bf16.msra.mxu0 %v166
  %226 = vmatprep.mubr.bf16.mxu0 %v31
  %227 = vmatmul.mubr.bf16.gmra.mrb[0].mxu0 %v30
  %v228 = vpop.f32.mrb[0].mxu0
  %v229 = vadd.f32 %v77, %v228
  %v230 = vpop.f32.mrb[0].mxu0
  %v231 = vpop.f32.mrb[0].mxu0
  %v232 = vadd.f32 %v77, %v231
  %v233 = vpop.f32.mrb[0].mxu0
  %234 = vmatprep.mubr.bf16.mxu0 %v34
  %235 = vmatmul.mubr.bf16.gmra.mrb[0].mxu0 %v33
  %v236 = vpop.f32.mrb[0].mxu0
  %v237 = vadd.f32 %v77, %v236
  %v238 = vpop.f32.mrb[0].mxu0
  %v239 = vpop.f32.mrb[0].mxu0
  %v240 = vpop.f32.mrb[0].mxu0
  %241 = vdwg.mxu0
  %242 = vmatprep.subr.bf16.mxu0 0
  %243 = vmatpush1.bf16.msra.mxu0 %v167
  %244 = vmatprep.subr.bf16.mxu0 0
  %245 = vmatpush1.bf16.msra.mxu0 %v168
  %246 = vmatprep.subr.bf16.mxu0 0
  %247 = vmatpush1.bf16.msra.mxu0 0
  %248 = vmatprep.subr.bf16.mxu0 0
  %249 = vmatpush1.bf16.msra.mxu0 0
  %250 = vmatprep.subr.bf16.mxu0 0
  %251 = vmatpush1.bf16.msra.mxu0 0
  %252 = vmatprep.subr.bf16.mxu0 0
  %253 = vmatpush1.bf16.msra.mxu0 0
  %254 = vmatprep.subr.bf16.mxu0 0
  %255 = vmatpush1.bf16.msra.mxu0 0
  %256 = vmatprep.subr.bf16.mxu0 0
  %257 = vmatpush1.bf16.msra.mxu0 0
  %258 = vmatprep.subr.bf16.mxu0 0
  %259 = vmatpush1.bf16.msra.mxu0 0
  %260 = vmatprep.subr.bf16.mxu0 0
  %261 = vmatpush1.bf16.msra.mxu0 0
  %262 = vmatprep.subr.bf16.mxu0 0
  %263 = vmatpush1.bf16.msra.mxu0 0
  %264 = vmatprep.subr.bf16.mxu0 0
  %265 = vmatpush1.bf16.msra.mxu0 0
  %266 = vmatprep.subr.bf16.mxu0 0
  %267 = vmatpush1.bf16.msra.mxu0 0
  %268 = vmatprep.subr.bf16.mxu0 0
  %269 = vmatpush1.bf16.msra.mxu0 0
  %270 = vmatprep.subr.bf16.mxu0 0
  %271 = vmatpush1.bf16.msra.mxu0 0
  %272 = vmatprep.subr.bf16.mxu0 0
  %273 = vmatpush1.bf16.msra.mxu0 0
  %274 = vmatprep.mubr.bf16.mxu0 0
  %275 = vmatmul.mubr.bf16.gmra.mrb[0].mxu0 %v189
  %v276 = vpop.f32.mrb[0].mxu0
  %v277 = vadd.f32 %v229, %v276
  %v278 = vpop.f32.mrb[0].mxu0
  %v279 = vpop.f32.mrb[0].mxu0
  %v280 = vadd.f32 %v232, %v279
  %v281 = vpop.f32.mrb[0].mxu0
  %282 = vmatprep.mubr.bf16.mxu0 0
  %283 = vmatmul.mubr.bf16.gmra.mrb[0].mxu0 %v192
  %v284 = vpop.f32.mrb[0].mxu0
  %v285 = vadd.f32 %v237, %v284
  %v286 = vpop.f32.mrb[0].mxu0
  %v287 = vpop.f32.mrb[0].mxu0
  %v288 = vpop.f32.mrb[0].mxu0
  %289 = vdwg.mxu0
  %vm290 = vcmask 523264
  %v291 = vsel %vm290, %v277, 0.0
  %v292 = vsel %vm290, %v280, 0.0
  %v293 = vadd.f32 %v291, %v292
  %vm294 = vcmask 517120
  %v295 = vsel %vm294, %v285, 0.0
  %v296 = vadd.f32 %v293, %v295
  %v297 = vrot.slane %v296, 4
  %v298 = vadd.f32 %v296, %v297
  %v299 = vrot.slane %v298, 2
  %v300 = vadd.f32 %v298, %v299
  %v301 = vrot.slane %v300, 1
  %v302 = vadd.f32 %v300, %v301
  %v303 = vrcp.pop 18.0
  %v304 = vmul.f32 %v302, %v303
  %v305 = vsub.f32 %v277, %v304
  %v306 = vsub.f32 %v280, %v304
  %v307 = vsub.f32 %v285, %v304
  %v308 = vmul.f32 %v305, %v305
  %v309 = vmul.f32 %v306, %v306
  %v310 = vmul.f32 %v307, %v307
  %v311 = vsel %vm290, %v308, 0.0
  %v312 = vsel %vm290, %v309, 0.0
  %v313 = vadd.f32 %v311, %v312
  %v314 = vsel %vm294, %v310, 0.0
  %v315 = vadd.f32 %v313, %v314
  %v316 = vrot.slane %v315, 4
  %v317 = vadd.f32 %v315, %v316
  %v318 = vrot.slane %v317, 2
  %v319 = vadd.f32 %v317, %v318
  %v320 = vrot.slane %v319, 1
  %v321 = vadd.f32 %v319, %v320
  %v322 = vmul.f32 %v321, %v303
  %v323 = vadd.f32 %v322, 1e-05
  %v324 = vrsqrt.pop %v323
  %v325 = vmul.f32 %v305, %v324
  %v326 = vmul.f32 %v306, %v324
  %v327 = vmul.f32 %v307, %v324
  %v328 = vld [vmem:[%s3] sm:$0x1]
  %v330 = vlaneseq
  %v331 = vshrl.u32 %v330, 7
  %v332 = vsub.s32 0, %v331
  %v333 = vrot.slane %v328, %v332
  %v335 = vmul.f32 %v325, %v333
  %v336 = vmul.f32 %v326, %v333
  %v337 = vmul.f32 %v327, %v333
  %v338 = vld [vmem:[%s4] sm:$0x1]
  %v340 = vlaneseq
  %v341 = vshrl.u32 %v340, 7
  %v342 = vsub.s32 0, %v341
  %v343 = vrot.slane %v338, %v342
  %v345 = vadd.f32 %v335, %v343
  %v346 = vadd.f32 %v336, %v343
  %v347 = vadd.f32 %v337, %v343
  %vm348 = vcmp.gt.f32.partialorder %v345, 0.0
  %vm349 = vcmp.gt.f32.partialorder %v346, 0.0
  %vm350 = vcmp.gt.f32.partialorder %v347, 0.0
  %v351 = vmul.f32 %v345, 0.2
  %v352 = vmul.f32 %v346, 0.2
  %v353 = vmul.f32 %v347, 0.2
  %v354 = vsel %vm348, %v345, %v351
  %v355 = vsel %vm349, %v346, %v352
  %v356 = vsel %vm350, %v347, %v353
  %357 = vst.msk [vmem:[%s5] sm:$0xff] %vm290, %v354
  %358 = vst.msk [vmem:[%s5 + $0x8] sm:$0xff] %vm290, %v355
  %359 = vst.msk [vmem:[%s5 + $0x10] sm:$0x3] %vm294, %v356
  // Predicated region
  $region22: #{ae_forward.6} parent=0 // pred_check
    _
  $region23: #{ae_forward.6} parent=0 // pred_check_branch
    %361 = sbr.rel (0) target = $region25
  $region24: #{ae_forward.6} parent=0 // pred_region
    _
  $region25: #{ae_forward.6} parent=0 // pred_fallthru
    _
  // Predicated region
  $region26: #{ae_forward.6} parent=0 // pred_check
    _
  $region27: #{ae_forward.6} parent=0 // pred_check_branch
    %363 = sbr.rel (0) target = $region29
  $region28: #{ae_forward.6} parent=0 // pred_region
    _
  $region29: #{ae_forward.6} parent=0 // pred_fallthru
    _

// kernel: ae_forward.7
$region0: #{ae_forward.7}
  #allocation0 [shape = 'u32[]', space=smem, size = 0x4, offset = 0x4, fixed_abs, tag = 'smem constant byte address 0x4 - core index']
  #allocation1 [shape = 'u32[144,128]{1,0:T(1,128)}', space=vmem, size = 0x12000, scoped, tag = 'internal scratch']
  %s0 = inlined_call_operand.vmem [shape: f32[32,256], index: 0, kind: input, shape index: {}]
  %s1 = inlined_call_operand.vmem [shape: bf16[256,128], index: 1, kind: input, shape index: {}]
  %s2 = inlined_call_operand.vmem [shape: f32[1,128], index: 2, kind: input, shape index: {}]
  %s3 = inlined_call_operand.vmem [shape: f32[32,128], index: 3, kind: output, shape index: {}]
  %s4 = sld [smem:[#allocation0]]
  $region22: #{ae_forward.7} parent=0
    _
  %s6 = ssub.s32 1, %s4
  %s7 = scalar_select 0, %s6, %s4
  // Predicated region
  $region2: #{ae_forward.7} parent=0 // pred_check
    _
  $region3: #{ae_forward.7} parent=0 // pred_check_branch
    %9 = sbr.rel (0) target = $region5
  $region4: #{ae_forward.7} parent=0 // pred_region
    _
  $region5: #{ae_forward.7} parent=0 // pred_fallthru
    _
  // Predicated region
  $region6: #{ae_forward.7} parent=0 // pred_check
    _
  $region7: #{ae_forward.7} parent=0 // pred_check_branch
    %11 = sbr.rel (0) target = $region9
  $region8: #{ae_forward.7} parent=0 // pred_region
    _
  $region9: #{ae_forward.7} parent=0 // pred_fallthru
    _
  // Predicated region
  $region10: #{ae_forward.7} parent=0 // pred_check
    _
  $region11: #{ae_forward.7} parent=0 // pred_check_branch
    %13 = sbr.rel (0) target = $region13
  $region12: #{ae_forward.7} parent=0 // pred_region
    _
  $region13: #{ae_forward.7} parent=0 // pred_fallthru
    _
  %v15 = vld [vmem:[%s0] sm:$0xff]
  %v16 = vld [vmem:[%s0 + $0x8] sm:$0xff]
  %v17 = vld [vmem:[%s0 + $0x10] sm:$0xff]
  %v18 = vld [vmem:[%s0 + $0x18] sm:$0xff]
  %v19 = vld [vmem:[%s0 + $0x20] sm:$0xff]
  %v20 = vld [vmem:[%s0 + $0x28] sm:$0xff]
  %v21 = vld [vmem:[%s0 + $0x30] sm:$0xff]
  %v22 = vld [vmem:[%s0 + $0x38] sm:$0xff]
  %v23 = vpack.c.bf16 %v17, %v15
  %v24 = vpack.c.bf16 %v18, %v16
  %v25 = vpack.c.bf16 %v21, %v19
  %v26 = vpack.c.bf16 %v22, %v20
  %v27 = vld [vmem:[%s1] sm:$0xf]
  %v28 = vld [vmem:[%s1 + $0x4] sm:$0xf]
  %v29 = vld [vmem:[%s1 + $0x8] sm:$0xf]
  %v30 = vld [vmem:[%s1 + $0xc] sm:$0xf]
  %v31 = vld [vmem:[%s1 + $0x10] sm:$0xf]
  %v32 = vld [vmem:[%s1 + $0x14] sm:$0xf]
  %v33 = vld [vmem:[%s1 + $0x18] sm:$0xf]
  %v34 = vld [vmem:[%s1 + $0x1c] sm:$0xf]
  %v35 = vld [vmem:[%s1 + $0x20] sm:$0xf]
  %v36 = vld [vmem:[%s1 + $0x24] sm:$0xf]
  %v37 = vld [vmem:[%s1 + $0x28] sm:$0xf]
  %v38 = vld [vmem:[%s1 + $0x2c] sm:$0xf]
  %v39 = vld [vmem:[%s1 + $0x30] sm:$0xf]
  %v40 = vld [vmem:[%s1 + $0x34] sm:$0xf]
  %v41 = vld [vmem:[%s1 + $0x38] sm:$0xf]
  %v42 = vld [vmem:[%s1 + $0x3c] sm:$0xf]
  %v43 = vld [vmem:[%s1 + $0x40] sm:$0xf]
  %v44 = vld [vmem:[%s1 + $0x44] sm:$0xf]
  %v45 = vld [vmem:[%s1 + $0x48] sm:$0xf]
  %v46 = vld [vmem:[%s1 + $0x4c] sm:$0xf]
  %v47 = vld [vmem:[%s1 + $0x50] sm:$0xf]
  %v48 = vld [vmem:[%s1 + $0x54] sm:$0xf]
  %v49 = vld [vmem:[%s1 + $0x58] sm:$0xf]
  %v50 = vld [vmem:[%s1 + $0x5c] sm:$0xf]
  %v51 = vld [vmem:[%s1 + $0x60] sm:$0xf]
  %v52 = vld [vmem:[%s1 + $0x64] sm:$0xf]
  %v53 = vld [vmem:[%s1 + $0x68] sm:$0xf]
  %v54 = vld [vmem:[%s1 + $0x6c] sm:$0xf]
  %v55 = vld [vmem:[%s1 + $0x70] sm:$0xf]
  %v56 = vld [vmem:[%s1 + $0x74] sm:$0xf]
  %v57 = vld [vmem:[%s1 + $0x78] sm:$0xf]
  %v58 = vld [vmem:[%s1 + $0x7c] sm:$0xf]
  %v59 = vld [vmem:[%s2] sm:$0x1]
  %v61 = vlaneseq
  %v62 = vshrl.u32 %v61, 7
  %v63 = vsub.s32 0, %v62
  %v64 = vrot.slane %v59, %v63
  %v98 = vunpack.c.l.b16 %v27
  %v99 = vunpack.c.l.b16 %v28
  %v100 = vunpack.c.l.b16 %v29
  %v101 = vunpack.c.l.b16 %v30
  %v102 = vunpack.c.l.b16 %v31
  %v103 = vunpack.c.l.b16 %v32
  %v104 = vunpack.c.l.b16 %v33
  %v105 = vunpack.c.l.b16 %v34
  %v106 = vunpack.c.l.b16 %v35
  %v107 = vunpack.c.l.b16 %v36
  %v108 = vunpack.c.l.b16 %v37
  %v109 = vunpack.c.l.b16 %v38
  %v110 = vunpack.c.l.b16 %v39
  %v111 = vunpack.c.l.b16 %v40
  %v112 = vunpack.c.l.b16 %v41
  %v113 = vunpack.c.l.b16 %v42
  %v114 = vunpack.c.l.b16 %v43
  %v115 = vunpack.c.l.b16 %v44
  %v116 = vunpack.c.l.b16 %v45
  %v117 = vunpack.c.l.b16 %v46
  %v118 = vunpack.c.l.b16 %v47
  %v119 = vunpack.c.l.b16 %v48
  %v120 = vunpack.c.l.b16 %v49
  %v121 = vunpack.c.l.b16 %v50
  %v122 = vunpack.c.l.b16 %v51
  %v123 = vunpack.c.l.b16 %v52
  %v124 = vunpack.c.l.b16 %v53
  %v125 = vunpack.c.l.b16 %v54
  %v126 = vunpack.c.l.b16 %v55
  %v127 = vunpack.c.l.b16 %v56
  %v128 = vunpack.c.l.b16 %v57
  %v129 = vunpack.c.l.b16 %v58
  %v130 = vpack.c.b16 %v99, %v98
  %v131 = vpack.c.b16 %v101, %v100
  %v132 = vpack.c.b16 %v103, %v102
  %v133 = vpack.c.b16 %v105, %v104
  %v134 = vpack.c.b16 %v107, %v106
  %v135 = vpack.c.b16 %v109, %v108
  %v136 = vpack.c.b16 %v111, %v110
  %v137 = vpack.c.b16 %v113, %v112
  %v138 = vpack.c.b16 %v115, %v114
  %v139 = vpack.c.b16 %v117, %v116
  %v140 = vpack.c.b16 %v119, %v118
  %v141 = vpack.c.b16 %v121, %v120
  %v142 = vpack.c.b16 %v123, %v122
  %v143 = vpack.c.b16 %v125, %v124
  %v144 = vpack.c.b16 %v127, %v126
  %v145 = vpack.c.b16 %v129, %v128
  %162 = vmatprep.subr.bf16.mxu0 0
  %163 = vmatpush1.bf16.msra.mxu0 %v130
  %164 = vmatprep.subr.bf16.mxu0 0
  %165 = vmatpush1.bf16.msra.mxu0 %v131
  %166 = vmatprep.subr.bf16.mxu0 0
  %167 = vmatpush1.bf16.msra.mxu0 %v132
  %168 = vmatprep.subr.bf16.mxu0 0
  %169 = vmatpush1.bf16.msra.mxu0 %v133
  %170 = vmatprep.subr.bf16.mxu0 0
  %171 = vmatpush1.bf16.msra.mxu0 %v134
  %172 = vmatprep.subr.bf16.mxu0 0
  %173 = vmatpush1.bf16.msra.mxu0 %v135
  %174 = vmatprep.subr.bf16.mxu0 0
  %175 = vmatpush1.bf16.msra.mxu0 %v136
  %176 = vmatprep.subr.bf16.mxu0 0
  %177 = vmatpush1.bf16.msra.mxu0 %v137
  %178 = vmatprep.subr.bf16.mxu0 0
  %179 = vmatpush1.bf16.msra.mxu0 %v138
  %180 = vmatprep.subr.bf16.mxu0 0
  %181 = vmatpush1.bf16.msra.mxu0 %v139
  %182 = vmatprep.subr.bf16.mxu0 0
  %183 = vmatpush1.bf16.msra.mxu0 %v140
  %184 = vmatprep.subr.bf16.mxu0 0
  %185 = vmatpush1.bf16.msra.mxu0 %v141
  %186 = vmatprep.subr.bf16.mxu0 0
  %187 = vmatpush1.bf16.msra.mxu0 %v142
  %188 = vmatprep.subr.bf16.mxu0 0
  %189 = vmatpush1.bf16.msra.mxu0 %v143
  %190 = vmatprep.subr.bf16.mxu0 0
  %191 = vmatpush1.bf16.msra.mxu0 %v144
  %192 = vmatprep.subr.bf16.mxu0 0
  %193 = vmatpush1.bf16.msra.mxu0 %v145
  %194 = vmatprep.mubr.bf16.mxu0 %v24
  %195 = vmatmul.mubr.bf16.gmra.mrb[0].mxu0 %v23
  %v196 = vpop.f32.mrb[0].mxu0
  %v197 = vadd.f32 %v64, %v196
  %v198 = vpop.f32.mrb[0].mxu0
  %v199 = vpop.f32.mrb[0].mxu0
  %v200 = vadd.f32 %v64, %v199
  %v201 = vpop.f32.mrb[0].mxu0
  %202 = vmatprep.mubr.bf16.mxu0 %v26
  %203 = vmatmul.mubr.bf16.gmra.mrb[0].mxu0 %v25
  %v204 = vpop.f32.mrb[0].mxu0
  %v205 = vadd.f32 %v64, %v204
  %v206 = vpop.f32.mrb[0].mxu0
  %v207 = vpop.f32.mrb[0].mxu0
  %v208 = vadd.f32 %v64, %v207
  %v209 = vpop.f32.mrb[0].mxu0
  %210 = vdwg.mxu0
  %211 = vst [vmem:[%s3] sm:$0xff] %v197
  %212 = vst [vmem:[%s3 + $0x8] sm:$0xff] %v200
  %213 = vst [vmem:[%s3 + $0x10] sm:$0xff] %v205
  %214 = vst [vmem:[%s3 + $0x18] sm:$0xff] %v208
  // Predicated region
  $region14: #{ae_forward.7} parent=0 // pred_check
    _
  $region15: #{ae_forward.7} parent=0 // pred_check_branch
    %216 = sbr.rel (0) target = $region17
  $region16: #{ae_forward.7} parent=0 // pred_region
    _
  $region17: #{ae_forward.7} parent=0 // pred_fallthru
    _
  // Predicated region
  $region18: #{ae_forward.7} parent=0 // pred_check
    _
  $region19: #{ae_forward.7} parent=0 // pred_check_branch
    %218 = sbr.rel (0) target = $region21
  $region20: #{ae_forward.7} parent=0 // pred_region
    _
  $region21: #{ae_forward.7} parent=0 // pred_fallthru
    _

// kernel: ae_forward.8
$region0: #{ae_forward.8}
  #allocation0 [shape = 'u32[]', space=smem, size = 0x4, offset = 0x4, fixed_abs, tag = 'smem constant byte address 0x4 - core index']
  #allocation1 [shape = 'u32[144,128]{1,0:T(1,128)}', space=vmem, size = 0x12000, scoped, tag = 'internal scratch']
  %s0 = inlined_call_operand.vmem [shape: f32[32,128], index: 0, kind: input, shape index: {}]
  %s1 = inlined_call_operand.vmem [shape: bf16[128,256], index: 1, kind: input, shape index: {}]
  %s2 = inlined_call_operand.vmem [shape: f32[1,64], index: 2, kind: input, shape index: {}]
  %s3 = inlined_call_operand.vmem [shape: f32[1,64], index: 3, kind: input, shape index: {}]
  %s4 = inlined_call_operand.vmem [shape: f32[1,64], index: 4, kind: input, shape index: {}]
  %s5 = inlined_call_operand.vmem [shape: f32[32,256], index: 5, kind: output, shape index: {}]
  %s6 = sld [smem:[#allocation0]]
  $region30: #{ae_forward.8} parent=0
    _
  %s8 = ssub.s32 1, %s6
  %s9 = scalar_select 0, %s8, %s6
  // Predicated region
  $region2: #{ae_forward.8} parent=0 // pred_check
    _
  $region3: #{ae_forward.8} parent=0 // pred_check_branch
    %11 = sbr.rel (0) target = $region5
  $region4: #{ae_forward.8} parent=0 // pred_region
    _
  $region5: #{ae_forward.8} parent=0 // pred_fallthru
    _
  // Predicated region
  $region6: #{ae_forward.8} parent=0 // pred_check
    _
  $region7: #{ae_forward.8} parent=0 // pred_check_branch
    %13 = sbr.rel (0) target = $region9
  $region8: #{ae_forward.8} parent=0 // pred_region
    _
  $region9: #{ae_forward.8} parent=0 // pred_fallthru
    _
  // Predicated region
  $region10: #{ae_forward.8} parent=0 // pred_check
    _
  $region11: #{ae_forward.8} parent=0 // pred_check_branch
    %15 = sbr.rel (0) target = $region13
  $region12: #{ae_forward.8} parent=0 // pred_region
    _
  $region13: #{ae_forward.8} parent=0 // pred_fallthru
    _
  // Predicated region
  $region14: #{ae_forward.8} parent=0 // pred_check
    _
  $region15: #{ae_forward.8} parent=0 // pred_check_branch
    %17 = sbr.rel (0) target = $region17
  $region16: #{ae_forward.8} parent=0 // pred_region
    _
  $region17: #{ae_forward.8} parent=0 // pred_fallthru
    _
  // Predicated region
  $region18: #{ae_forward.8} parent=0 // pred_check
    _
  $region19: #{ae_forward.8} parent=0 // pred_check_branch
    %19 = sbr.rel (0) target = $region21
  $region20: #{ae_forward.8} parent=0 // pred_region
    _
  $region21: #{ae_forward.8} parent=0 // pred_fallthru
    _
  %v21 = vld [vmem:[%s0] sm:$0xff]
  %v22 = vld [vmem:[%s0 + $0x8] sm:$0xff]
  %v23 = vld [vmem:[%s0 + $0x10] sm:$0xff]
  %v24 = vld [vmem:[%s0 + $0x18] sm:$0xff]
  %v25 = vpack.c.bf16 %v22, %v21
  %v26 = vpack.c.bf16 %v24, %v23
  %v27 = vld [vmem:[%s1] sm:$0xff]
  %v28 = vld [vmem:[%s1 + $0x8] sm:$0xff]
  %v29 = vld [vmem:[%s1 + $0x10] sm:$0xff]
  %v30 = vld [vmem:[%s1 + $0x18] sm:$0xff]
  %v31 = vld [vmem:[%s1 + $0x20] sm:$0xff]
  %v32 = vld [vmem:[%s1 + $0x28] sm:$0xff]
  %v33 = vld [vmem:[%s1 + $0x30] sm:$0xff]
  %v34 = vld [vmem:[%s1 + $0x38] sm:$0xff]
  %v35 = vld [vmem:[%s1 + $0x40] sm:$0xff]
  %v36 = vld [vmem:[%s1 + $0x48] sm:$0xff]
  %v37 = vld [vmem:[%s1 + $0x50] sm:$0xff]
  %v38 = vld [vmem:[%s1 + $0x58] sm:$0xff]
  %v39 = vld [vmem:[%s1 + $0x60] sm:$0xff]
  %v40 = vld [vmem:[%s1 + $0x68] sm:$0xff]
  %v41 = vld [vmem:[%s1 + $0x70] sm:$0xff]
  %v42 = vld [vmem:[%s1 + $0x78] sm:$0xff]
  %v59 = vunpack.c.l.b16 %v27
  %v60 = vunpack.c.h.b16 %v27
  %v61 = vunpack.c.l.b16 %v28
  %v62 = vunpack.c.h.b16 %v28
  %v63 = vunpack.c.l.b16 %v29
  %v64 = vunpack.c.h.b16 %v29
  %v65 = vunpack.c.l.b16 %v30
  %v66 = vunpack.c.h.b16 %v30
  %v67 = vunpack.c.l.b16 %v31
  %v68 = vunpack.c.h.b16 %v31
  %v69 = vunpack.c.l.b16 %v32
  %v70 = vunpack.c.h.b16 %v32
  %v71 = vunpack.c.l.b16 %v33
  %v72 = vunpack.c.h.b16 %v33
  %v73 = vunpack.c.l.b16 %v34
  %v74 = vunpack.c.h.b16 %v34
  %v75 = vunpack.c.l.b16 %v35
  %v76 = vunpack.c.h.b16 %v35
  %v77 = vunpack.c.l.b16 %v36
  %v78 = vunpack.c.h.b16 %v36
  %v79 = vunpack.c.l.b16 %v37
  %v80 = vunpack.c.h.b16 %v37
  %v81 = vunpack.c.l.b16 %v38
  %v82 = vunpack.c.h.b16 %v38
  %v83 = vunpack.c.l.b16 %v39
  %v84 = vunpack.c.h.b16 %v39
  %v85 = vunpack.c.l.b16 %v40
  %v86 = vunpack.c.h.b16 %v40
  %v87 = vunpack.c.l.b16 %v41
  %v88 = vunpack.c.h.b16 %v41
  %v89 = vunpack.c.l.b16 %v42
  %v90 = vunpack.c.h.b16 %v42
  %v91 = vpack.c.b16 %v61, %v59
  %v92 = vpack.c.b16 %v62, %v60
  %v93 = vpack.c.b16 %v65, %v63
  %v94 = vpack.c.b16 %v66, %v64
  %v95 = vpack.c.b16 %v69, %v67
  %v96 = vpack.c.b16 %v70, %v68
  %v97 = vpack.c.b16 %v73, %v71
  %v98 = vpack.c.b16 %v74, %v72
  %v99 = vpack.c.b16 %v77, %v75
  %v100 = vpack.c.b16 %v78, %v76
  %v101 = vpack.c.b16 %v81, %v79
  %v102 = vpack.c.b16 %v82, %v80
  %v103 = vpack.c.b16 %v85, %v83
  %v104 = vpack.c.b16 %v86, %v84
  %v105 = vpack.c.b16 %v89, %v87
  %v106 = vpack.c.b16 %v90, %v88
  %123 = vmatprep.subr.bf16.mxu0 %v92
  %124 = vmatpush1.bf16.msra.mxu0 %v91
  %125 = vmatprep.subr.bf16.mxu0 %v94
  %126 = vmatpush1.bf16.msra.mxu0 %v93
  %127 = vmatprep.subr.bf16.mxu0 %v96
  %128 = vmatpush1.bf16.msra.mxu0 %v95
  %129 = vmatprep.subr.bf16.mxu0 %v98
  %130 = vmatpush1.bf16.msra.mxu0 %v97
  %131 = vmatprep.subr.bf16.mxu0 %v100
  %132 = vmatpush1.bf16.msra.mxu0 %v99
  %133 = vmatprep.subr.bf16.mxu0 %v102
  %134 = vmatpush1.bf16.msra.mxu0 %v101
  %135 = vmatprep.subr.bf16.mxu0 %v104
  %136 = vmatpush1.bf16.msra.mxu0 %v103
  %137 = vmatprep.subr.bf16.mxu0 %v106
  %138 = vmatpush1.bf16.msra.mxu0 %v105
  %139 = vmatprep.subr.bf16.mxu0 0
  %140 = vmatpush1.bf16.msra.mxu0 0
  %141 = vmatprep.subr.bf16.mxu0 0
  %142 = vmatpush1.bf16.msra.mxu0 0
  %143 = vmatprep.subr.bf16.mxu0 0
  %144 = vmatpush1.bf16.msra.mxu0 0
  %145 = vmatprep.subr.bf16.mxu0 0
  %146 = vmatpush1.bf16.msra.mxu0 0
  %147 = vmatprep.subr.bf16.mxu0 0
  %148 = vmatpush1.bf16.msra.mxu0 0
  %149 = vmatprep.subr.bf16.mxu0 0
  %150 = vmatpush1.bf16.msra.mxu0 0
  %151 = vmatprep.subr.bf16.mxu0 0
  %152 = vmatpush1.bf16.msra.mxu0 0
  %153 = vmatprep.subr.bf16.mxu0 0
  %154 = vmatpush1.bf16.msra.mxu0 0
  %155 = vmatprep.mubr.bf16.mxu0 0
  %156 = vmatmul.mubr.bf16.gmra.mrb[0].mxu0 %v25
  %v157 = vpop.f32.mrb[0].mxu0
  %v158 = vadd.f32 0.0, %v157
  %v159 = vpop.f32.mrb[0].mxu0
  %v160 = vadd.f32 0.0, %v159
  %v161 = vpop.f32.mrb[0].mxu0
  %v162 = vadd.f32 0.0, %v161
  %v163 = vpop.f32.mrb[0].mxu0
  %v164 = vadd.f32 0.0, %v163
  %165 = vmatprep.mubr.bf16.mxu0 0
  %166 = vmatmul.mubr.bf16.gmra.mrb[0].mxu0 %v26
  %v167 = vpop.f32.mrb[0].mxu0
  %v168 = vadd.f32 0.0, %v167
  %v169 = vpop.f32.mrb[0].mxu0
  %v170 = vadd.f32 0.0, %v169
  %v171 = vpop.f32.mrb[0].mxu0
  %v172 = vadd.f32 0.0, %v171
  %v173 = vpop.f32.mrb[0].mxu0
  %v174 = vadd.f32 0.0, %v173
  %175 = vdwg.mxu0
  %v176 = vld [vmem:[%s2] sm:$0x1]
  %v177 = vld [vmem:[%s3] sm:$0x1]
  %v178 = vld [vmem:[%s4] sm:$0x1]
  %v180 = vlaneseq
  %v181 = vshrl.u32 %v180, 7
  %v182 = vsub.s32 0, %v181
  %v183 = vrot.slane %v176, %v182
  %v185 = vadd.f32 %v158, %v183
  %v186 = vadd.f32 %v162, %v183
  %v187 = vadd.f32 %v168, %v183
  %v188 = vadd.f32 %v172, %v183
  %189 = vrot.lane.b32.xlu0 %v183, 64
  %v190 = vpop.permute.xlu0 %189
  %v192 = vadd.f32 %v158, %v190
  %v193 = vadd.f32 %v162, %v190
  %v194 = vadd.f32 %v168, %v190
  %v195 = vadd.f32 %v172, %v190
  %v196 = vadd.f32 %v160, %v183
  %v197 = vadd.f32 %v164, %v183
  %v198 = vadd.f32 %v170, %v183
  %v199 = vadd.f32 %v174, %v183
  %v200 = vadd.f32 %v160, %v190
  %v201 = vadd.f32 %v164, %v190
  %v202 = vadd.f32 %v170, %v190
  %v203 = vadd.f32 %v174, %v190
  %208 = vrot.lane.b32.xlu0 %v192, 64
  %v209 = vpop.permute.xlu0 %208
  %210 = vrot.lane.b32.xlu0 %v193, 64
  %v211 = vpop.permute.xlu0 %210
  %212 = vrot.lane.b32.xlu0 %v194, 64
  %v213 = vpop.permute.xlu0 %212
  %214 = vrot.lane.b32.xlu0 %v195, 64
  %v215 = vpop.permute.xlu0 %214
  %v220 = vadd.f32 %v185, %v209
  %v221 = vadd.f32 %v186, %v211
  %v222 = vadd.f32 %v187, %v213
  %v223 = vadd.f32 %v188, %v215
  %v224 = vadd.f32 %v220, %v196
  %v225 = vadd.f32 %v221, %v197
  %v226 = vadd.f32 %v222, %v198
  %v227 = vadd.f32 %v223, %v199
  %232 = vrot.lane.b32.xlu0 %v200, 64
  %v233 = vpop.permute.xlu0 %232
  %234 = vrot.lane.b32.xlu0 %v201, 64
  %v235 = vpop.permute.xlu0 %234
  %236 = vrot.lane.b32.xlu0 %v202, 64
  %v237 = vpop.permute.xlu0 %236
  %238 = vrot.lane.b32.xlu0 %v203, 64
  %v239 = vpop.permute.xlu0 %238
  %v244 = vadd.f32 %v224, %v233
  %v245 = vadd.f32 %v225, %v235
  %v246 = vadd.f32 %v226, %v237
  %v247 = vadd.f32 %v227, %v239
  %vm248 = vcmask 523264
  %v249 = vsel %vm248, %v244, 0.0
  %v250 = vsel %vm248, %v245, 0.0
  %v251 = vadd.f32 %v249, %v250
  %v252 = vsel %vm248, %v246, 0.0
  %v253 = vadd.f32 %v251, %v252
  %v254 = vsel %vm248, %v247, 0.0
  %v255 = vadd.f32 %v253, %v254
  %v256 = vrot.slane %v255, 4
  %v257 = vadd.f32 %v255, %v256
  %v258 = vrot.slane %v257, 2
  %v259 = vadd.f32 %v257, %v258
  %v260 = vrot.slane %v259, 1
  %v261 = vadd.f32 %v259, %v260
  %v262 = vmul.f32 %v261, 0.0078125
  %v263 = vsub.f32 %v185, %v262
  %v264 = vsub.f32 %v186, %v262
  %v265 = vsub.f32 %v187, %v262
  %v266 = vsub.f32 %v188, %v262
  %268 = vrot.lane.b32.xlu0 %v262, 64
  %v269 = vpop.permute.xlu0 %268
  %v271 = vsub.f32 %v192, %v269
  %v272 = vsub.f32 %v193, %v269
  %v273 = vsub.f32 %v194, %v269
  %v274 = vsub.f32 %v195, %v269
  %v275 = vsub.f32 %v196, %v262
  %v276 = vsub.f32 %v197, %v262
  %v277 = vsub.f32 %v198, %v262
  %v278 = vsub.f32 %v199, %v262
  %v279 = vsub.f32 %v200, %v269
  %v280 = vsub.f32 %v201, %v269
  %v281 = vsub.f32 %v202, %v269
  %v282 = vsub.f32 %v203, %v269
  %v283 = vmul.f32 %v263, %v263
  %v284 = vmul.f32 %v264, %v264
  %v285 = vmul.f32 %v265, %v265
  %v286 = vmul.f32 %v266, %v266
  %v287 = vmul.f32 %v271, %v271
  %v288 = vmul.f32 %v272, %v272
  %v289 = vmul.f32 %v273, %v273
  %v290 = vmul.f32 %v274, %v274
  %295 = vrot.lane.b32.xlu0 %v287, 64
  %v296 = vpop.permute.xlu0 %295
  %297 = vrot.lane.b32.xlu0 %v288, 64
  %v298 = vpop.permute.xlu0 %297
  %299 = vrot.lane.b32.xlu0 %v289, 64
  %v300 = vpop.permute.xlu0 %299
  %301 = vrot.lane.b32.xlu0 %v290, 64
  %v302 = vpop.permute.xlu0 %301
  %v307 = vadd.f32 %v283, %v296
  %v308 = vadd.f32 %v284, %v298
  %v309 = vadd.f32 %v285, %v300
  %v310 = vadd.f32 %v286, %v302
  %v311 = vmul.f32 %v275, %v275
  %v312 = vmul.f32 %v276, %v276
  %v313 = vmul.f32 %v277, %v277
  %v314 = vmul.f32 %v278, %v278
  %v315 = vadd.f32 %v307, %v311
  %v316 = vadd.f32 %v308, %v312
  %v317 = vadd.f32 %v309, %v313
  %v318 = vadd.f32 %v310, %v314
  %v319 = vmul.f32 %v279, %v279
  %v320 = vmul.f32 %v280, %v280
  %v321 = vmul.f32 %v281, %v281
  %v322 = vmul.f32 %v282, %v282
  %327 = vrot.lane.b32.xlu0 %v319, 64
  %v328 = vpop.permute.xlu0 %327
  %329 = vrot.lane.b32.xlu0 %v320, 64
  %v330 = vpop.permute.xlu0 %329
  %331 = vrot.lane.b32.xlu0 %v321, 64
  %v332 = vpop.permute.xlu0 %331
  %333 = vrot.lane.b32.xlu0 %v322, 64
  %v334 = vpop.permute.xlu0 %333
  %v339 = vadd.f32 %v315, %v328
  %v340 = vadd.f32 %v316, %v330
  %v341 = vadd.f32 %v317, %v332
  %v342 = vadd.f32 %v318, %v334
  %v343 = vsel %vm248, %v339, 0.0
  %v344 = vsel %vm248, %v340, 0.0
  %v345 = vadd.f32 %v343, %v344
  %v346 = vsel %vm248, %v341, 0.0
  %v347 = vadd.f32 %v345, %v346
  %v348 = vsel %vm248, %v342, 0.0
  %v349 = vadd.f32 %v347, %v348
  %v350 = vrot.slane %v349, 4
  %v351 = vadd.f32 %v349, %v350
  %v352 = vrot.slane %v351, 2
  %v353 = vadd.f32 %v351, %v352
  %v354 = vrot.slane %v353, 1
  %v355 = vadd.f32 %v353, %v354
  %v356 = vmul.f32 %v355, 0.0078125
  %v357 = vadd.f32 %v356, 1e-05
  %v358 = vrsqrt.pop %v357
  %v359 = vmul.f32 %v358, %v177
  %v360 = vlaneseq
  %v361 = vshrl.u32 %v360, 7
  %v362 = vsub.s32 0, %v361
  %v363 = vrot.slane %v359, %v362
  %v364 = vmul.f32 %v263, %v363
  %v365 = vmul.f32 %v264, %v363
  %v366 = vmul.f32 %v265, %v363
  %v367 = vmul.f32 %v266, %v363
  %v369 = vlaneseq
  %v370 = vshrl.u32 %v369, 7
  %v371 = vsub.s32 0, %v370
  %v372 = vrot.slane %v178, %v371
  %v374 = vadd.f32 %v364, %v372
  %v375 = vadd.f32 %v365, %v372
  %v376 = vadd.f32 %v366, %v372
  %v377 = vadd.f32 %v367, %v372
  %vm378 = vcmp.gt.f32.partialorder %v374, 0.0
  %vm379 = vcmp.gt.f32.partialorder %v375, 0.0
  %vm380 = vcmp.gt.f32.partialorder %v376, 0.0
  %vm381 = vcmp.gt.f32.partialorder %v377, 0.0
  %v382 = vmul.f32 %v374, 0.2
  %v383 = vmul.f32 %v375, 0.2
  %v384 = vmul.f32 %v376, 0.2
  %v385 = vmul.f32 %v377, 0.2
  %v386 = vsel %vm378, %v374, %v382
  %v387 = vsel %vm379, %v375, %v383
  %v388 = vsel %vm380, %v376, %v384
  %v389 = vsel %vm381, %v377, %v385
  %391 = vrot.lane.b32.xlu0 %v363, 64
  %v392 = vpop.permute.xlu0 %391
  %v394 = vmul.f32 %v271, %v392
  %v395 = vmul.f32 %v272, %v392
  %v396 = vmul.f32 %v273, %v392
  %v397 = vmul.f32 %v274, %v392
  %398 = vrot.lane.b32.xlu0 %v372, 64
  %v399 = vpop.permute.xlu0 %398
  %v401 = vadd.f32 %v394, %v399
  %v402 = vadd.f32 %v395, %v399
  %v403 = vadd.f32 %v396, %v399
  %v404 = vadd.f32 %v397, %v399
  %vm405 = vcmp.gt.f32.partialorder %v401, 0.0
  %vm406 = vcmp.gt.f32.partialorder %v402, 0.0
  %vm407 = vcmp.gt.f32.partialorder %v403, 0.0
  %vm408 = vcmp.gt.f32.partialorder %v404, 0.0
  %v409 = vmul.f32 %v401, 0.2
  %v410 = vmul.f32 %v402, 0.2
  %v411 = vmul.f32 %v403, 0.2
  %v412 = vmul.f32 %v404, 0.2
  %v413 = vsel %vm405, %v401, %v409
  %v414 = vsel %vm406, %v402, %v410
  %v415 = vsel %vm407, %v403, %v411
  %v416 = vsel %vm408, %v404, %v412
  %v417 = vmul.f32 %v275, %v363
  %v418 = vmul.f32 %v276, %v363
  %v419 = vmul.f32 %v277, %v363
  %v420 = vmul.f32 %v278, %v363
  %v421 = vadd.f32 %v417, %v372
  %v422 = vadd.f32 %v418, %v372
  %v423 = vadd.f32 %v419, %v372
  %v424 = vadd.f32 %v420, %v372
  %vm425 = vcmp.gt.f32.partialorder %v421, 0.0
  %vm426 = vcmp.gt.f32.partialorder %v422, 0.0
  %vm427 = vcmp.gt.f32.partialorder %v423, 0.0
  %vm428 = vcmp.gt.f32.partialorder %v424, 0.0
  %v429 = vmul.f32 %v421, 0.2
  %v430 = vmul.f32 %v422, 0.2
  %v431 = vmul.f32 %v423, 0.2
  %v432 = vmul.f32 %v424, 0.2
  %v433 = vsel %vm425, %v421, %v429
  %v434 = vsel %vm426, %v422, %v430
  %v435 = vsel %vm427, %v423, %v431
  %v436 = vsel %vm428, %v424, %v432
  %v437 = vmul.f32 %v279, %v392
  %v438 = vmul.f32 %v280, %v392
  %v439 = vmul.f32 %v281, %v392
  %v440 = vmul.f32 %v282, %v392
  %v441 = vadd.f32 %v437, %v399
  %v442 = vadd.f32 %v438, %v399
  %v443 = vadd.f32 %v439, %v399
  %v444 = vadd.f32 %v440, %v399
  %vm445 = vcmp.gt.f32.partialorder %v441, 0.0
  %vm446 = vcmp.gt.f32.partialorder %v442, 0.0
  %vm447 = vcmp.gt.f32.partialorder %v443, 0.0
  %vm448 = vcmp.gt.f32.partialorder %v444, 0.0
  %v449 = vmul.f32 %v441, 0.2
  %v450 = vmul.f32 %v442, 0.2
  %v451 = vmul.f32 %v443, 0.2
  %v452 = vmul.f32 %v444, 0.2
  %v453 = vsel %vm445, %v441, %v449
  %v454 = vsel %vm446, %v442, %v450
  %v455 = vsel %vm447, %v443, %v451
  %v456 = vsel %vm448, %v444, %v452
  %v457 = vsel %vm248, %v386, %v413
  %v458 = vsel %vm248, %v387, %v414
  %v459 = vsel %vm248, %v388, %v415
  %v460 = vsel %vm248, %v389, %v416
  %v461 = vsel %vm248, %v433, %v453
  %v462 = vsel %vm248, %v434, %v454
  %v463 = vsel %vm248, %v435, %v455
  %v464 = vsel %vm248, %v436, %v456
  %465 = vst [vmem:[%s5] sm:$0xff] %v457
  %466 = vst [vmem:[%s5 + $0x8] sm:$0xff] %v461
  %467 = vst [vmem:[%s5 + $0x10] sm:$0xff] %v458
  %468 = vst [vmem:[%s5 + $0x18] sm:$0xff] %v462
  %469 = vst [vmem:[%s5 + $0x20] sm:$0xff] %v459
  %470 = vst [vmem:[%s5 + $0x28] sm:$0xff] %v463
  %471 = vst [vmem:[%s5 + $0x30] sm:$0xff] %v460
  %472 = vst [vmem:[%s5 + $0x38] sm:$0xff] %v464
  // Predicated region
  $region22: #{ae_forward.8} parent=0 // pred_check
    _
  $region23: #{ae_forward.8} parent=0 // pred_check_branch
    %474 = sbr.rel (0) target = $region25
  $region24: #{ae_forward.8} parent=0 // pred_region
    _
  $region25: #{ae_forward.8} parent=0 // pred_fallthru
    _
  // Predicated region
  $region26: #{ae_forward.8} parent=0 // pred_check
    _
  $region27: #{ae_forward.8} parent=0 // pred_check_branch
    %476 = sbr.rel (0) target = $region29
  $region28: #{ae_forward.8} parent=0 // pred_region
    _
  $region29: #{ae_forward.8} parent=0 // pred_fallthru
    _

// kernel: ae_forward.9
$region0: #{ae_forward.9}
  #allocation0 [shape = 'u32[]', space=smem, size = 0x4, offset = 0x4, fixed_abs, tag = 'smem constant byte address 0x4 - core index']
  #allocation1 [shape = 'u32[144,128]{1,0:T(1,128)}', space=vmem, size = 0x12000, scoped, tag = 'internal scratch']
  %s0 = inlined_call_operand.vmem [shape: f32[128,64], index: 0, kind: input, shape index: {}]
  %s1 = inlined_call_operand.vmem [shape: bf16[64,128], index: 1, kind: input, shape index: {}]
  %s2 = inlined_call_operand.vmem [shape: f32[1,32], index: 2, kind: input, shape index: {}]
  %s3 = inlined_call_operand.vmem [shape: f32[1,32], index: 3, kind: input, shape index: {}]
  %s4 = inlined_call_operand.vmem [shape: f32[1,32], index: 4, kind: input, shape index: {}]
  %s5 = inlined_call_operand.vmem [shape: bf16[128,16], index: 5, kind: input, shape index: {}]
  %s6 = inlined_call_operand.vmem [shape: f32[1,16], index: 6, kind: input, shape index: {}]
  %s7 = inlined_call_operand.vmem [shape: f32[128,16], index: 7, kind: output, shape index: {}]
  %s8 = sld [smem:[#allocation0]]
  $region38: #{ae_forward.9} parent=0
    _
  %s10 = ssub.s32 1, %s8
  %s11 = scalar_select 0, %s10, %s8
  // Predicated region
  $region2: #{ae_forward.9} parent=0 // pred_check
    _
  $region3: #{ae_forward.9} parent=0 // pred_check_branch
    %13 = sbr.rel (0) target = $region5
  $region4: #{ae_forward.9} parent=0 // pred_region
    _
  $region5: #{ae_forward.9} parent=0 // pred_fallthru
    _
  // Predicated region
  $region6: #{ae_forward.9} parent=0 // pred_check
    _
  $region7: #{ae_forward.9} parent=0 // pred_check_branch
    %15 = sbr.rel (0) target = $region9
  $region8: #{ae_forward.9} parent=0 // pred_region
    _
  $region9: #{ae_forward.9} parent=0 // pred_fallthru
    _
  // Predicated region
  $region10: #{ae_forward.9} parent=0 // pred_check
    _
  $region11: #{ae_forward.9} parent=0 // pred_check_branch
    %17 = sbr.rel (0) target = $region13
  $region12: #{ae_forward.9} parent=0 // pred_region
    _
  $region13: #{ae_forward.9} parent=0 // pred_fallthru
    _
  // Predicated region
  $region14: #{ae_forward.9} parent=0 // pred_check
    _
  $region15: #{ae_forward.9} parent=0 // pred_check_branch
    %19 = sbr.rel (0) target = $region17
  $region16: #{ae_forward.9} parent=0 // pred_region
    _
  $region17: #{ae_forward.9} parent=0 // pred_fallthru
    _
  // Predicated region
  $region18: #{ae_forward.9} parent=0 // pred_check
    _
  $region19: #{ae_forward.9} parent=0 // pred_check_branch
    %21 = sbr.rel (0) target = $region21
  $region20: #{ae_forward.9} parent=0 // pred_region
    _
  $region21: #{ae_forward.9} parent=0 // pred_fallthru
    _
  // Predicated region
  $region22: #{ae_forward.9} parent=0 // pred_check
    _
  $region23: #{ae_forward.9} parent=0 // pred_check_branch
    %23 = sbr.rel (0) target = $region25
  $region24: #{ae_forward.9} parent=0 // pred_region
    _
  $region25: #{ae_forward.9} parent=0 // pred_fallthru
    _
  // Predicated region
  $region26: #{ae_forward.9} parent=0 // pred_check
    _
  $region27: #{ae_forward.9} parent=0 // pred_check_branch
    %25 = sbr.rel (0) target = $region29
  $region28: #{ae_forward.9} parent=0 // pred_region
    _
  $region29: #{ae_forward.9} parent=0 // pred_fallthru
    _
  %v27 = vld [vmem:[%s0] sm:$0xff]
  %v28 = vld [vmem:[%s0 + $0x8] sm:$0xff]
  %v29 = vld [vmem:[%s0 + $0x10] sm:$0xff]
  %v30 = vld [vmem:[%s0 + $0x18] sm:$0xff]
  %v31 = vld [vmem:[%s0 + $0x20] sm:$0xff]
  %v32 = vld [vmem:[%s0 + $0x28] sm:$0xff]
  %v33 = vld [vmem:[%s0 + $0x30] sm:$0xff]
  %v34 = vld [vmem:[%s0 + $0x38] sm:$0xff]
  %v35 = vld [vmem:[%s0 + $0x40] sm:$0xff]
  %v36 = vld [vmem:[%s0 + $0x48] sm:$0xff]
  %v37 = vld [vmem:[%s0 + $0x50] sm:$0xff]
  %v38 = vld [vmem:[%s0 + $0x58] sm:$0xff]
  %v39 = vld [vmem:[%s0 + $0x60] sm:$0xff]
  %v40 = vld [vmem:[%s0 + $0x68] sm:$0xff]
  %v41 = vld [vmem:[%s0 + $0x70] sm:$0xff]
  %v42 = vld [vmem:[%s0 + $0x78] sm:$0xff]
  %v43 = vpack.c.bf16 %v28, %v27
  %v44 = vpack.c.bf16 %v30, %v29
  %v45 = vpack.c.bf16 %v32, %v31
  %v46 = vpack.c.bf16 %v34, %v33
  %v47 = vpack.c.bf16 %v36, %v35
  %v48 = vpack.c.bf16 %v38, %v37
  %v49 = vpack.c.bf16 %v40, %v39
  %v50 = vpack.c.bf16 %v42, %v41
  %v51 = vld [vmem:[%s1] sm:$0xf]
  %v52 = vld [vmem:[%s1 + $0x4] sm:$0xf]
  %v53 = vld [vmem:[%s1 + $0x8] sm:$0xf]
  %v54 = vld [vmem:[%s1 + $0xc] sm:$0xf]
  %v55 = vld [vmem:[%s1 + $0x10] sm:$0xf]
  %v56 = vld [vmem:[%s1 + $0x14] sm:$0xf]
  %v57 = vld [vmem:[%s1 + $0x18] sm:$0xf]
  %v58 = vld [vmem:[%s1 + $0x1c] sm:$0xf]
  %v67 = vunpack.c.l.b16 %v51
  %v68 = vunpack.c.l.b16 %v52
  %v69 = vunpack.c.l.b16 %v53
  %v70 = vunpack.c.l.b16 %v54
  %v71 = vunpack.c.l.b16 %v55
  %v72 = vunpack.c.l.b16 %v56
  %v73 = vunpack.c.l.b16 %v57
  %v74 = vunpack.c.l.b16 %v58
  %v75 = vpack.c.b16 %v68, %v67
  %v76 = vpack.c.b16 %v70, %v69
  %v77 = vpack.c.b16 %v72, %v71
  %v78 = vpack.c.b16 %v74, %v73
  %vm83 = vcmask 523264
  %v85 = vsel %vm83, %v43, 0
  %v88 = vsel %vm83, %v44, 0
  %v91 = vsel %vm83, %v45, 0
  %v94 = vsel %vm83, %v46, 0
  %v97 = vsel %vm83, %v47, 0
  %v100 = vsel %vm83, %v48, 0
  %v103 = vsel %vm83, %v49, 0
  %v106 = vsel %vm83, %v50, 0
  %108 = vmatprep.subr.bf16.mxu0 0
  %109 = vmatpush1.bf16.msra.mxu0 %v75
  %110 = vmatprep.subr.bf16.mxu0 0
  %111 = vmatpush1.bf16.msra.mxu0 %v76
  %112 = vmatprep.subr.bf16.mxu0 0
  %113 = vmatpush1.bf16.msra.mxu0 %v77
  %114 = vmatprep.subr.bf16.mxu0 0
  %115 = vmatpush1.bf16.msra.mxu0 %v78
  %116 = vmatprep.subr.bf16.mxu0 0
  %117 = vmatpush1.bf16.msra.mxu0 0
  %118 = vmatprep.subr.bf16.mxu0 0
  %119 = vmatpush1.bf16.msra.mxu0 0
  %120 = vmatprep.subr.bf16.mxu0 0
  %121 = vmatpush1.bf16.msra.mxu0 0
  %122 = vmatprep.subr.bf16.mxu0 0
  %123 = vmatpush1.bf16.msra.mxu0 0
  %124 = vmatprep.subr.bf16.mxu0 0
  %125 = vmatpush1.bf16.msra.mxu0 0
  %126 = vmatprep.subr.bf16.mxu0 0
  %127 = vmatpush1.bf16.msra.mxu0 0
  %128 = vmatprep.subr.bf16.mxu0 0
  %129 = vmatpush1.bf16.msra.mxu0 0
  %130 = vmatprep.subr.bf16.mxu0 0
  %131 = vmatpush1.bf16.msra.mxu0 0
  %132 = vmatprep.subr.bf16.mxu0 0
  %133 = vmatpush1.bf16.msra.mxu0 0
  %134 = vmatprep.subr.bf16.mxu0 0
  %135 = vmatpush1.bf16.msra.mxu0 0
  %136 = vmatprep.subr.bf16.mxu0 0
  %137 = vmatpush1.bf16.msra.mxu0 0
  %138 = vmatprep.subr.bf16.mxu0 0
  %139 = vmatpush1.bf16.msra.mxu0 0
  %140 = vmatprep.mubr.bf16.mxu0 0
  %141 = vmatmul.mubr.bf16.gmra.mrb[0].mxu0 %v85
  %v142 = vpop.f32.mrb[0].mxu0
  %v143 = vadd.f32 0.0, %v142
  %v144 = vpop.f32.mrb[0].mxu0
  %v145 = vpop.f32.mrb[0].mxu0
  %v146 = vadd.f32 0.0, %v145
  %v147 = vpop.f32.mrb[0].mxu0
  %148 = vmatprep.mubr.bf16.mxu0 0
  %149 = vmatmul.mubr.bf16.gmra.mrb[0].mxu0 %v88
  %v150 = vpop.f32.mrb[0].mxu0
  %v151 = vadd.f32 0.0, %v150
  %v152 = vpop.f32.mrb[0].mxu0
  %v153 = vpop.f32.mrb[0].mxu0
  %v154 = vadd.f32 0.0, %v153
  %v155 = vpop.f32.mrb[0].mxu0
  %156 = vmatprep.mubr.bf16.mxu0 0
  %157 = vmatmul.mubr.bf16.gmra.mrb[0].mxu0 %v91
  %v158 = vpop.f32.mrb[0].mxu0
  %v159 = vadd.f32 0.0, %v158
  %v160 = vpop.f32.mrb[0].mxu0
  %v161 = vpop.f32.mrb[0].mxu0
  %v162 = vadd.f32 0.0, %v161
  %v163 = vpop.f32.mrb[0].mxu0
  %164 = vmatprep.mubr.bf16.mxu0 0
  %165 = vmatmul.mubr.bf16.gmra.mrb[0].mxu0 %v94
  %v166 = vpop.f32.mrb[0].mxu0
  %v167 = vadd.f32 0.0, %v166
  %v168 = vpop.f32.mrb[0].mxu0
  %v169 = vpop.f32.mrb[0].mxu0
  %v170 = vadd.f32 0.0, %v169
  %v171 = vpop.f32.mrb[0].mxu0
  %172 = vmatprep.mubr.bf16.mxu0 0
  %173 = vmatmul.mubr.bf16.gmra.mrb[0].mxu0 %v97
  %v174 = vpop.f32.mrb[0].mxu0
  %v175 = vadd.f32 0.0, %v174
  %v176 = vpop.f32.mrb[0].mxu0
  %v177 = vpop.f32.mrb[0].mxu0
  %v178 = vadd.f32 0.0, %v177
  %v179 = vpop.f32.mrb[0].mxu0
  %180 = vmatprep.mubr.bf16.mxu0 0
  %181 = vmatmul.mubr.bf16.gmra.mrb[0].mxu0 %v100
  %v182 = vpop.f32.mrb[0].mxu0
  %v183 = vadd.f32 0.0, %v182
  %v184 = vpop.f32.mrb[0].mxu0
  %v185 = vpop.f32.mrb[0].mxu0
  %v186 = vadd.f32 0.0, %v185
  %v187 = vpop.f32.mrb[0].mxu0
  %188 = vmatprep.mubr.bf16.mxu0 0
  %189 = vmatmul.mubr.bf16.gmra.mrb[0].mxu0 %v103
  %v190 = vpop.f32.mrb[0].mxu0
  %v191 = vadd.f32 0.0, %v190
  %v192 = vpop.f32.mrb[0].mxu0
  %v193 = vpop.f32.mrb[0].mxu0
  %v194 = vadd.f32 0.0, %v193
  %v195 = vpop.f32.mrb[0].mxu0
  %196 = vmatprep.mubr.bf16.mxu0 0
  %197 = vmatmul.mubr.bf16.gmra.mrb[0].mxu0 %v106
  %v198 = vpop.f32.mrb[0].mxu0
  %v199 = vadd.f32 0.0, %v198
  %v200 = vpop.f32.mrb[0].mxu0
  %v201 = vpop.f32.mrb[0].mxu0
  %v202 = vadd.f32 0.0, %v201
  %v203 = vpop.f32.mrb[0].mxu0
  %204 = vdwg.mxu0
  %v205 = vld [vmem:[%s2] sm:$0x1]
  %v206 = vld [vmem:[%s3] sm:$0x1]
  %v207 = vld [vmem:[%s4] sm:$0x1]
  %v209 = vlaneseq
  %v210 = vshrl.u32 %v209, 7
  %v211 = vsub.s32 0, %v210
  %v212 = vrot.slane %v205, %v211
  %v214 = vadd.f32 %v143, %v212
  %v215 = vadd.f32 %v146, %v212
  %v216 = vadd.f32 %v151, %v212
  %v217 = vadd.f32 %v154, %v212
  %v218 = vadd.f32 %v159, %v212
  %v219 = vadd.f32 %v162, %v212
  %v220 = vadd.f32 %v167, %v212
  %v221 = vadd.f32 %v170, %v212
  %v222 = vadd.f32 %v175, %v212
  %v223 = vadd.f32 %v178, %v212
  %v224 = vadd.f32 %v183, %v212
  %v225 = vadd.f32 %v186, %v212
  %v226 = vadd.f32 %v191, %v212
  %v227 = vadd.f32 %v194, %v212
  %v228 = vadd.f32 %v199, %v212
  %v229 = vadd.f32 %v202, %v212
  %230 = vrot.lane.b32.xlu0 %v212, 32
  %v231 = vpop.permute.xlu0 %230
  %v233 = vadd.f32 %v143, %v231
  %v234 = vadd.f32 %v146, %v231
  %v235 = vadd.f32 %v151, %v231
  %v236 = vadd.f32 %v154, %v231
  %v237 = vadd.f32 %v159, %v231
  %v238 = vadd.f32 %v162, %v231
  %v239 = vadd.f32 %v167, %v231
  %v240 = vadd.f32 %v170, %v231
  %v241 = vadd.f32 %v175, %v231
  %v242 = vadd.f32 %v178, %v231
  %v243 = vadd.f32 %v183, %v231
  %v244 = vadd.f32 %v186, %v231
  %v245 = vadd.f32 %v191, %v231
  %v246 = vadd.f32 %v194, %v231
  %v247 = vadd.f32 %v199, %v231
  %v248 = vadd.f32 %v202, %v231
  %249 = vrot.lane.b32.xlu0 %v212, 64
  %v250 = vpop.permute.xlu0 %249
  %v252 = vadd.f32 %v143, %v250
  %v253 = vadd.f32 %v146, %v250
  %v254 = vadd.f32 %v151, %v250
  %v255 = vadd.f32 %v154, %v250
  %v256 = vadd.f32 %v159, %v250
  %v257 = vadd.f32 %v162, %v250
  %v258 = vadd.f32 %v167, %v250
  %v259 = vadd.f32 %v170, %v250
  %v260 = vadd.f32 %v175, %v250
  %v261 = vadd.f32 %v178, %v250
  %v262 = vadd.f32 %v183, %v250
  %v263 = vadd.f32 %v186, %v250
  %v264 = vadd.f32 %v191, %v250
  %v265 = vadd.f32 %v194, %v250
  %v266 = vadd.f32 %v199, %v250
  %v267 = vadd.f32 %v202, %v250
  %268 = vrot.lane.b32.xlu0 %v212, 96
  %v269 = vpop.permute.xlu0 %268
  %v271 = vadd.f32 %v143, %v269
  %v272 = vadd.f32 %v146, %v269
  %v273 = vadd.f32 %v151, %v269
  %v274 = vadd.f32 %v154, %v269
  %v275 = vadd.f32 %v159, %v269
  %v276 = vadd.f32 %v162, %v269
  %v277 = vadd.f32 %v167, %v269
  %v278 = vadd.f32 %v170, %v269
  %v279 = vadd.f32 %v175, %v269
  %v280 = vadd.f32 %v178, %v269
  %v281 = vadd.f32 %v183, %v269
  %v282 = vadd.f32 %v186, %v269
  %v283 = vadd.f32 %v191, %v269
  %v284 = vadd.f32 %v194, %v269
  %v285 = vadd.f32 %v199, %v269
  %v286 = vadd.f32 %v202, %v269
  %303 = vrot.lane.b32.xlu0 %v233, 96
  %v304 = vpop.permute.xlu0 %303
  %305 = vrot.lane.b32.xlu0 %v234, 96
  %v306 = vpop.permute.xlu0 %305
  %307 = vrot.lane.b32.xlu0 %v235, 96
  %v308 = vpop.permute.xlu0 %307
  %309 = vrot.lane.b32.xlu0 %v236, 96
  %v310 = vpop.permute.xlu0 %309
  %311 = vrot.lane.b32.xlu0 %v237, 96
  %v312 = vpop.permute.xlu0 %311
  %313 = vrot.lane.b32.xlu0 %v238, 96
  %v314 = vpop.permute.xlu0 %313
  %315 = vrot.lane.b32.xlu0 %v239, 96
  %v316 = vpop.permute.xlu0 %315
  %317 = vrot.lane.b32.xlu0 %v240, 96
  %v318 = vpop.permute.xlu0 %317
  %319 = vrot.lane.b32.xlu0 %v241, 96
  %v320 = vpop.permute.xlu0 %319
  %321 = vrot.lane.b32.xlu0 %v242, 96
  %v322 = vpop.permute.xlu0 %321
  %323 = vrot.lane.b32.xlu0 %v243, 96
  %v324 = vpop.permute.xlu0 %323
  %325 = vrot.lane.b32.xlu0 %v244, 96
  %v326 = vpop.permute.xlu0 %325
  %327 = vrot.lane.b32.xlu0 %v245, 96
  %v328 = vpop.permute.xlu0 %327
  %329 = vrot.lane.b32.xlu0 %v246, 96
  %v330 = vpop.permute.xlu0 %329
  %331 = vrot.lane.b32.xlu0 %v247, 96
  %v332 = vpop.permute.xlu0 %331
  %333 = vrot.lane.b32.xlu0 %v248, 96
  %v334 = vpop.permute.xlu0 %333
  %v351 = vadd.f32 %v214, %v304
  %v352 = vadd.f32 %v215, %v306
  %v353 = vadd.f32 %v216, %v308
  %v354 = vadd.f32 %v217, %v310
  %v355 = vadd.f32 %v218, %v312
  %v356 = vadd.f32 %v219, %v314
  %v357 = vadd.f32 %v220, %v316
  %v358 = vadd.f32 %v221, %v318
  %v359 = vadd.f32 %v222, %v320
  %v360 = vadd.f32 %v223, %v322
  %v361 = vadd.f32 %v224, %v324
  %v362 = vadd.f32 %v225, %v326
  %v363 = vadd.f32 %v226, %v328
  %v364 = vadd.f32 %v227, %v330
  %v365 = vadd.f32 %v228, %v332
  %v366 = vadd.f32 %v229, %v334
  %383 = vrot.lane.b32.xlu0 %v252, 64
  %v384 = vpop.permute.xlu0 %383
  %385 = vrot.lane.b32.xlu0 %v253, 64
  %v386 = vpop.permute.xlu0 %385
  %387 = vrot.lane.b32.xlu0 %v254, 64
  %v388 = vpop.permute.xlu0 %387
  %389 = vrot.lane.b32.xlu0 %v255, 64
  %v390 = vpop.permute.xlu0 %389
  %391 = vrot.lane.b32.xlu0 %v256, 64
  %v392 = vpop.permute.xlu0 %391
  %393 = vrot.lane.b32.xlu0 %v257, 64
  %v394 = vpop.permute.xlu0 %393
  %395 = vrot.lane.b32.xlu0 %v258, 64
  %v396 = vpop.permute.xlu0 %395
  %397 = vrot.lane.b32.xlu0 %v259, 64
  %v398 = vpop.permute.xlu0 %397
  %399 = vrot.lane.b32.xlu0 %v260, 64
  %v400 = vpop.permute.xlu0 %399
  %401 = vrot.lane.b32.xlu0 %v261, 64
  %v402 = vpop.permute.xlu0 %401
  %403 = vrot.lane.b32.xlu0 %v262, 64
  %v404 = vpop.permute.xlu0 %403
  %405 = vrot.lane.b32.xlu0 %v263, 64
  %v406 = vpop.permute.xlu0 %405
  %407 = vrot.lane.b32.xlu0 %v264, 64
  %v408 = vpop.permute.xlu0 %407
  %409 = vrot.lane.b32.xlu0 %v265, 64
  %v410 = vpop.permute.xlu0 %409
  %411 = vrot.lane.b32.xlu0 %v266, 64
  %v412 = vpop.permute.xlu0 %411
  %413 = vrot.lane.b32.xlu0 %v267, 64
  %v414 = vpop.permute.xlu0 %413
  %v431 = vadd.f32 %v351, %v384
  %v432 = vadd.f32 %v352, %v386
  %v433 = vadd.f32 %v353, %v388
  %v434 = vadd.f32 %v354, %v390
  %v435 = vadd.f32 %v355, %v392
  %v436 = vadd.f32 %v356, %v394
  %v437 = vadd.f32 %v357, %v396
  %v438 = vadd.f32 %v358, %v398
  %v439 = vadd.f32 %v359, %v400
  %v440 = vadd.f32 %v360, %v402
  %v441 = vadd.f32 %v361, %v404
  %v442 = vadd.f32 %v362, %v406
  %v443 = vadd.f32 %v363, %v408
  %v444 = vadd.f32 %v364, %v410
  %v445 = vadd.f32 %v365, %v412
  %v446 = vadd.f32 %v366, %v414
  %463 = vrot.lane.b32.xlu0 %v271, 32
  %v464 = vpop.permute.xlu0 %463
  %465 = vrot.lane.b32.xlu0 %v272, 32
  %v466 = vpop.permute.xlu0 %465
  %467 = vrot.lane.b32.xlu0 %v273, 32
  %v468 = vpop.permute.xlu0 %467
  %469 = vrot.lane.b32.xlu0 %v274, 32
  %v470 = vpop.permute.xlu0 %469
  %471 = vrot.lane.b32.xlu0 %v275, 32
  %v472 = vpop.permute.xlu0 %471
  %473 = vrot.lane.b32.xlu0 %v276, 32
  %v474 = vpop.permute.xlu0 %473
  %475 = vrot.lane.b32.xlu0 %v277, 32
  %v476 = vpop.permute.xlu0 %475
  %477 = vrot.lane.b32.xlu0 %v278, 32
  %v478 = vpop.permute.xlu0 %477
  %479 = vrot.lane.b32.xlu0 %v279, 32
  %v480 = vpop.permute.xlu0 %479
  %481 = vrot.lane.b32.xlu0 %v280, 32
  %v482 = vpop.permute.xlu0 %481
  %483 = vrot.lane.b32.xlu0 %v281, 32
  %v484 = vpop.permute.xlu0 %483
  %485 = vrot.lane.b32.xlu0 %v282, 32
  %v486 = vpop.permute.xlu0 %485
  %487 = vrot.lane.b32.xlu0 %v283, 32
  %v488 = vpop.permute.xlu0 %487
  %489 = vrot.lane.b32.xlu0 %v284, 32
  %v490 = vpop.permute.xlu0 %489
  %491 = vrot.lane.b32.xlu0 %v285, 32
  %v492 = vpop.permute.xlu0 %491
  %493 = vrot.lane.b32.xlu0 %v286, 32
  %v494 = vpop.permute.xlu0 %493
  %v511 = vadd.f32 %v431, %v464
  %v512 = vadd.f32 %v432, %v466
  %v513 = vadd.f32 %v433, %v468
  %v514 = vadd.f32 %v434, %v470
  %v515 = vadd.f32 %v435, %v472
  %v516 = vadd.f32 %v436, %v474
  %v517 = vadd.f32 %v437, %v476
  %v518 = vadd.f32 %v438, %v478
  %v519 = vadd.f32 %v439, %v480
  %v520 = vadd.f32 %v440, %v482
  %v521 = vadd.f32 %v441, %v484
  %v522 = vadd.f32 %v442, %v486
  %v523 = vadd.f32 %v443, %v488
  %v524 = vadd.f32 %v444, %v490
  %v525 = vadd.f32 %v445, %v492
  %v526 = vadd.f32 %v446, %v494
  %vm527 = vcmask 261120
  %v528 = vsel %vm527, %v511, 0.0
  %v529 = vsel %vm527, %v512, 0.0
  %v530 = vadd.f32 %v528, %v529
  %v531 = vsel %vm527, %v513, 0.0
  %v532 = vadd.f32 %v530, %v531
  %v533 = vsel %vm527, %v514, 0.0
  %v534 = vadd.f32 %v532, %v533
  %v535 = vsel %vm527, %v515, 0.0
  %v536 = vadd.f32 %v534, %v535
  %v537 = vsel %vm527, %v516, 0.0
  %v538 = vadd.f32 %v536, %v537
  %v539 = vsel %vm527, %v517, 0.0
  %v540 = vadd.f32 %v538, %v539
  %v541 = vsel %vm527, %v518, 0.0
  %v542 = vadd.f32 %v540, %v541
  %v543 = vsel %vm527, %v519, 0.0
  %v544 = vadd.f32 %v542, %v543
  %v545 = vsel %vm527, %v520, 0.0
  %v546 = vadd.f32 %v544, %v545
  %v547 = vsel %vm527, %v521, 0.0
  %v548 = vadd.f32 %v546, %v547
  %v549 = vsel %vm527, %v522, 0.0
  %v550 = vadd.f32 %v548, %v549
  %v551 = vsel %vm527, %v523, 0.0
  %v552 = vadd.f32 %v550, %v551
  %v553 = vsel %vm527, %v524, 0.0
  %v554 = vadd.f32 %v552, %v553
  %v555 = vsel %vm527, %v525, 0.0
  %v556 = vadd.f32 %v554, %v555
  %v557 = vsel %vm527, %v526, 0.0
  %v558 = vadd.f32 %v556, %v557
  %v559 = vrot.slane %v558, 4
  %v560 = vadd.f32 %v558, %v559
  %v561 = vrot.slane %v560, 2
  %v562 = vadd.f32 %v560, %v561
  %v563 = vrot.slane %v562, 1
  %v564 = vadd.f32 %v562, %v563
  %v565 = vmul.f32 %v564, 0.001953125
  %v566 = vsub.f32 %v214, %v565
  %v567 = vsub.f32 %v215, %v565
  %v568 = vsub.f32 %v216, %v565
  %v569 = vsub.f32 %v217, %v565
  %v570 = vsub.f32 %v218, %v565
  %v571 = vsub.f32 %v219, %v565
  %v572 = vsub.f32 %v220, %v565
  %v573 = vsub.f32 %v221, %v565
  %v574 = vsub.f32 %v222, %v565
  %v575 = vsub.f32 %v223, %v565
  %v576 = vsub.f32 %v224, %v565
  %v577 = vsub.f32 %v225, %v565
  %v578 = vsub.f32 %v226, %v565
  %v579 = vsub.f32 %v227, %v565
  %v580 = vsub.f32 %v228, %v565
  %v581 = vsub.f32 %v229, %v565
  %583 = vrot.lane.b32.xlu0 %v565, 32
  %v584 = vpop.permute.xlu0 %583
  %v586 = vsub.f32 %v233, %v584
  %v587 = vsub.f32 %v234, %v584
  %v588 = vsub.f32 %v235, %v584
  %v589 = vsub.f32 %v236, %v584
  %v590 = vsub.f32 %v237, %v584
  %v591 = vsub.f32 %v238, %v584
  %v592 = vsub.f32 %v239, %v584
  %v593 = vsub.f32 %v240, %v584
  %v594 = vsub.f32 %v241, %v584
  %v595 = vsub.f32 %v242, %v584
  %v596 = vsub.f32 %v243, %v584
  %v597 = vsub.f32 %v244, %v584
  %v598 = vsub.f32 %v245, %v584
  %v599 = vsub.f32 %v246, %v584
  %v600 = vsub.f32 %v247, %v584
  %v601 = vsub.f32 %v248, %v584
  %602 = vrot.lane.b32.xlu0 %v565, 64
  %v603 = vpop.permute.xlu0 %602
  %v605 = vsub.f32 %v252, %v603
  %v606 = vsub.f32 %v253, %v603
  %v607 = vsub.f32 %v254, %v603
  %v608 = vsub.f32 %v255, %v603
  %v609 = vsub.f32 %v256, %v603
  %v610 = vsub.f32 %v257, %v603
  %v611 = vsub.f32 %v258, %v603
  %v612 = vsub.f32 %v259, %v603
  %v613 = vsub.f32 %v260, %v603
  %v614 = vsub.f32 %v261, %v603
  %v615 = vsub.f32 %v262, %v603
  %v616 = vsub.f32 %v263, %v603
  %v617 = vsub.f32 %v264, %v603
  %v618 = vsub.f32 %v265, %v603
  %v619 = vsub.f32 %v266, %v603
  %v620 = vsub.f32 %v267, %v603
  %621 = vrot.lane.b32.xlu0 %v565, 96
  %v622 = vpop.permute.xlu0 %621
  %v624 = vsub.f32 %v271, %v622
  %v625 = vsub.f32 %v272, %v622
  %v626 = vsub.f32 %v273, %v622
  %v627 = vsub.f32 %v274, %v622
  %v628 = vsub.f32 %v275, %v622
  %v629 = vsub.f32 %v276, %v622
  %v630 = vsub.f32 %v277, %v622
  %v631 = vsub.f32 %v278, %v622
  %v632 = vsub.f32 %v279, %v622
  %v633 = vsub.f32 %v280, %v622
  %v634 = vsub.f32 %v281, %v622
  %v635 = vsub.f32 %v282, %v622
  %v636 = vsub.f32 %v283, %v622
  %v637 = vsub.f32 %v284, %v622
  %v638 = vsub.f32 %v285, %v622
  %v639 = vsub.f32 %v286, %v622
  %v640 = vmul.f32 %v566, %v566
  %v641 = vmul.f32 %v567, %v567
  %v642 = vmul.f32 %v568, %v568
  %v643 = vmul.f32 %v569, %v569
  %v644 = vmul.f32 %v570, %v570
  %v645 = vmul.f32 %v571, %v571
  %v646 = vmul.f32 %v572, %v572
  %v647 = vmul.f32 %v573, %v573
  %v648 = vmul.f32 %v574, %v574
  %v649 = vmul.f32 %v575, %v575
  %v650 = vmul.f32 %v576, %v576
  %v651 = vmul.f32 %v577, %v577
  %v652 = vmul.f32 %v578, %v578
  %v653 = vmul.f32 %v579, %v579
  %v654 = vmul.f32 %v580, %v580
  %v655 = vmul.f32 %v581, %v581
  %v656 = vmul.f32 %v586, %v586
  %v657 = vmul.f32 %v587, %v587
  %v658 = vmul.f32 %v588, %v588
  %v659 = vmul.f32 %v589, %v589
  %v660 = vmul.f32 %v590, %v590
  %v661 = vmul.f32 %v591, %v591
  %v662 = vmul.f32 %v592, %v592
  %v663 = vmul.f32 %v593, %v593
  %v664 = vmul.f32 %v594, %v594
  %v665 = vmul.f32 %v595, %v595
  %v666 = vmul.f32 %v596, %v596
  %v667 = vmul.f32 %v597, %v597
  %v668 = vmul.f32 %v598, %v598
  %v669 = vmul.f32 %v599, %v599
  %v670 = vmul.f32 %v600, %v600
  %v671 = vmul.f32 %v601, %v601
  %688 = vrot.lane.b32.xlu0 %v656, 96
  %v689 = vpop.permute.xlu0 %688
  %690 = vrot.lane.b32.xlu0 %v657, 96
  %v691 = vpop.permute.xlu0 %690
  %692 = vrot.lane.b32.xlu0 %v658, 96
  %v693 = vpop.permute.xlu0 %692
  %694 = vrot.lane.b32.xlu0 %v659, 96
  %v695 = vpop.permute.xlu0 %694
  %696 = vrot.lane.b32.xlu0 %v660, 96
  %v697 = vpop.permute.xlu0 %696
  %698 = vrot.lane.b32.xlu0 %v661, 96
  %v699 = vpop.permute.xlu0 %698
  %700 = vrot.lane.b32.xlu0 %v662, 96
  %v701 = vpop.permute.xlu0 %700
  %702 = vrot.lane.b32.xlu0 %v663, 96
  %v703 = vpop.permute.xlu0 %702
  %704 = vrot.lane.b32.xlu0 %v664, 96
  %v705 = vpop.permute.xlu0 %704
  %706 = vrot.lane.b32.xlu0 %v665, 96
  %v707 = vpop.permute.xlu0 %706
  %708 = vrot.lane.b32.xlu0 %v666, 96
  %v709 = vpop.permute.xlu0 %708
  %710 = vrot.lane.b32.xlu0 %v667, 96
  %v711 = vpop.permute.xlu0 %710
  %712 = vrot.lane.b32.xlu0 %v668, 96
  %v713 = vpop.permute.xlu0 %712
  %714 = vrot.lane.b32.xlu0 %v669, 96
  %v715 = vpop.permute.xlu0 %714
  %716 = vrot.lane.b32.xlu0 %v670, 96
  %v717 = vpop.permute.xlu0 %716
  %718 = vrot.lane.b32.xlu0 %v671, 96
  %v719 = vpop.permute.xlu0 %718
  %v736 = vadd.f32 %v640, %v689
  %v737 = vadd.f32 %v641, %v691
  %v738 = vadd.f32 %v642, %v693
  %v739 = vadd.f32 %v643, %v695
  %v740 = vadd.f32 %v644, %v697
  %v741 = vadd.f32 %v645, %v699
  %v742 = vadd.f32 %v646, %v701
  %v743 = vadd.f32 %v647, %v703
  %v744 = vadd.f32 %v648, %v705
  %v745 = vadd.f32 %v649, %v707
  %v746 = vadd.f32 %v650, %v709
  %v747 = vadd.f32 %v651, %v711
  %v748 = vadd.f32 %v652, %v713
  %v749 = vadd.f32 %v653, %v715
  %v750 = vadd.f32 %v654, %v717
  %v751 = vadd.f32 %v655, %v719
  %v752 = vmul.f32 %v605, %v605
  %v753 = vmul.f32 %v606, %v606
  %v754 = vmul.f32 %v607, %v607
  %v755 = vmul.f32 %v608, %v608
  %v756 = vmul.f32 %v609, %v609
  %v757 = vmul.f32 %v610, %v610
  %v758 = vmul.f32 %v611, %v611
  %v759 = vmul.f32 %v612, %v612
  %v760 = vmul.f32 %v613, %v613
  %v761 = vmul.f32 %v614, %v614
  %v762 = vmul.f32 %v615, %v615
  %v763 = vmul.f32 %v616, %v616
  %v764 = vmul.f32 %v617, %v617
  %v765 = vmul.f32 %v618, %v618
  %v766 = vmul.f32 %v619, %v619
  %v767 = vmul.f32 %v620, %v620
  %784 = vrot.lane.b32.xlu0 %v752, 64
  %v785 = vpop.permute.xlu0 %784
  %786 = vrot.lane.b32.xlu0 %v753, 64
  %v787 = vpop.permute.xlu0 %786
  %788 = vrot.lane.b32.xlu0 %v754, 64
  %v789 = vpop.permute.xlu0 %788
  %790 = vrot.lane.b32.xlu0 %v755, 64
  %v791 = vpop.permute.xlu0 %790
  %792 = vrot.lane.b32.xlu0 %v756, 64
  %v793 = vpop.permute.xlu0 %792
  %794 = vrot.lane.b32.xlu0 %v757, 64
  %v795 = vpop.permute.xlu0 %794
  %796 = vrot.lane.b32.xlu0 %v758, 64
  %v797 = vpop.permute.xlu0 %796
  %798 = vrot.lane.b32.xlu0 %v759, 64
  %v799 = vpop.permute.xlu0 %798
  %800 = vrot.lane.b32.xlu0 %v760, 64
  %v801 = vpop.permute.xlu0 %800
  %802 = vrot.lane.b32.xlu0 %v761, 64
  %v803 = vpop.permute.xlu0 %802
  %804 = vrot.lane.b32.xlu0 %v762, 64
  %v805 = vpop.permute.xlu0 %804
  %806 = vrot.lane.b32.xlu0 %v763, 64
  %v807 = vpop.permute.xlu0 %806
  %808 = vrot.lane.b32.xlu0 %v764, 64
  %v809 = vpop.permute.xlu0 %808
  %810 = vrot.lane.b32.xlu0 %v765, 64
  %v811 = vpop.permute.xlu0 %810
  %812 = vrot.lane.b32.xlu0 %v766, 64
  %v813 = vpop.permute.xlu0 %812
  %814 = vrot.lane.b32.xlu0 %v767, 64
  %v815 = vpop.permute.xlu0 %814
  %v832 = vadd.f32 %v736, %v785
  %v833 = vadd.f32 %v737, %v787
  %v834 = vadd.f32 %v738, %v789
  %v835 = vadd.f32 %v739, %v791
  %v836 = vadd.f32 %v740, %v793
  %v837 = vadd.f32 %v741, %v795
  %v838 = vadd.f32 %v742, %v797
  %v839 = vadd.f32 %v743, %v799
  %v840 = vadd.f32 %v744, %v801
  %v841 = vadd.f32 %v745, %v803
  %v842 = vadd.f32 %v746, %v805
  %v843 = vadd.f32 %v747, %v807
  %v844 = vadd.f32 %v748, %v809
  %v845 = vadd.f32 %v749, %v811
  %v846 = vadd.f32 %v750, %v813
  %v847 = vadd.f32 %v751, %v815
  %v848 = vmul.f32 %v624, %v624
  %v849 = vmul.f32 %v625, %v625
  %v850 = vmul.f32 %v626, %v626
  %v851 = vmul.f32 %v627, %v627
  %v852 = vmul.f32 %v628, %v628
  %v853 = vmul.f32 %v629, %v629
  %v854 = vmul.f32 %v630, %v630
  %v855 = vmul.f32 %v631, %v631
  %v856 = vmul.f32 %v632, %v632
  %v857 = vmul.f32 %v633, %v633
  %v858 = vmul.f32 %v634, %v634
  %v859 = vmul.f32 %v635, %v635
  %v860 = vmul.f32 %v636, %v636
  %v861 = vmul.f32 %v637, %v637
  %v862 = vmul.f32 %v638, %v638
  %v863 = vmul.f32 %v639, %v639
  %880 = vrot.lane.b32.xlu0 %v848, 32
  %v881 = vpop.permute.xlu0 %880
  %882 = vrot.lane.b32.xlu0 %v849, 32
  %v883 = vpop.permute.xlu0 %882
  %884 = vrot.lane.b32.xlu0 %v850, 32
  %v885 = vpop.permute.xlu0 %884
  %886 = vrot.lane.b32.xlu0 %v851, 32
  %v887 = vpop.permute.xlu0 %886
  %888 = vrot.lane.b32.xlu0 %v852, 32
  %v889 = vpop.permute.xlu0 %888
  %890 = vrot.lane.b32.xlu0 %v853, 32
  %v891 = vpop.permute.xlu0 %890
  %892 = vrot.lane.b32.xlu0 %v854, 32
  %v893 = vpop.permute.xlu0 %892
  %894 = vrot.lane.b32.xlu0 %v855, 32
  %v895 = vpop.permute.xlu0 %894
  %896 = vrot.lane.b32.xlu0 %v856, 32
  %v897 = vpop.permute.xlu0 %896
  %898 = vrot.lane.b32.xlu0 %v857, 32
  %v899 = vpop.permute.xlu0 %898
  %900 = vrot.lane.b32.xlu0 %v858, 32
  %v901 = vpop.permute.xlu0 %900
  %902 = vrot.lane.b32.xlu0 %v859, 32
  %v903 = vpop.permute.xlu0 %902
  %904 = vrot.lane.b32.xlu0 %v860, 32
  %v905 = vpop.permute.xlu0 %904
  %906 = vrot.lane.b32.xlu0 %v861, 32
  %v907 = vpop.permute.xlu0 %906
  %908 = vrot.lane.b32.xlu0 %v862, 32
  %v909 = vpop.permute.xlu0 %908
  %910 = vrot.lane.b32.xlu0 %v863, 32
  %v911 = vpop.permute.xlu0 %910
  %v928 = vadd.f32 %v832, %v881
  %v929 = vadd.f32 %v833, %v883
  %v930 = vadd.f32 %v834, %v885
  %v931 = vadd.f32 %v835, %v887
  %v932 = vadd.f32 %v836, %v889
  %v933 = vadd.f32 %v837, %v891
  %v934 = vadd.f32 %v838, %v893
  %v935 = vadd.f32 %v839, %v895
  %v936 = vadd.f32 %v840, %v897
  %v937 = vadd.f32 %v841, %v899
  %v938 = vadd.f32 %v842, %v901
  %v939 = vadd.f32 %v843, %v903
  %v940 = vadd.f32 %v844, %v905
  %v941 = vadd.f32 %v845, %v907
  %v942 = vadd.f32 %v846, %v909
  %v943 = vadd.f32 %v847, %v911
  %v944 = vsel %vm527, %v928, 0.0
  %v945 = vsel %vm527, %v929, 0.0
  %v946 = vadd.f32 %v944, %v945
  %v947 = vsel %vm527, %v930, 0.0
  %v948 = vadd.f32 %v946, %v947
  %v949 = vsel %vm527, %v931, 0.0
  %v950 = vadd.f32 %v948, %v949
  %v951 = vsel %vm527, %v932, 0.0
  %v952 = vadd.f32 %v950, %v951
  %v953 = vsel %vm527, %v933, 0.0
  %v954 = vadd.f32 %v952, %v953
  %v955 = vsel %vm527, %v934, 0.0
  %v956 = vadd.f32 %v954, %v955
  %v957 = vsel %vm527, %v935, 0.0
  %v958 = vadd.f32 %v956, %v957
  %v959 = vsel %vm527, %v936, 0.0
  %v960 = vadd.f32 %v958, %v959
  %v961 = vsel %vm527, %v937, 0.0
  %v962 = vadd.f32 %v960, %v961
  %v963 = vsel %vm527, %v938, 0.0
  %v964 = vadd.f32 %v962, %v963
  %v965 = vsel %vm527, %v939, 0.0
  %v966 = vadd.f32 %v964, %v965
  %v967 = vsel %vm527, %v940, 0.0
  %v968 = vadd.f32 %v966, %v967
  %v969 = vsel %vm527, %v941, 0.0
  %v970 = vadd.f32 %v968, %v969
  %v971 = vsel %vm527, %v942, 0.0
  %v972 = vadd.f32 %v970, %v971
  %v973 = vsel %vm527, %v943, 0.0
  %v974 = vadd.f32 %v972, %v973
  %v975 = vrot.slane %v974, 4
  %v976 = vadd.f32 %v974, %v975
  %v977 = vrot.slane %v976, 2
  %v978 = vadd.f32 %v976, %v977
  %v979 = vrot.slane %v978, 1
  %v980 = vadd.f32 %v978, %v979
  %v981 = vmul.f32 %v980, 0.001953125
  %v982 = vadd.f32 %v981, 1e-05
  %v983 = vrsqrt.pop %v982
  %v984 = vmul.f32 %v983, %v206
  %v985 = vlaneseq
  %v986 = vshrl.u32 %v985, 7
  %v987 = vsub.s32 0, %v986
  %v988 = vrot.slane %v984, %v987
  %v989 = vmul.f32 %v566, %v988
  %v990 = vmul.f32 %v567, %v988
  %v991 = vmul.f32 %v568, %v988
  %v992 = vmul.f32 %v569, %v988
  %v993 = vmul.f32 %v570, %v988
  %v994 = vmul.f32 %v571, %v988
  %v995 = vmul.f32 %v572, %v988
  %v996 = vmul.f32 %v573, %v988
  %v997 = vmul.f32 %v574, %v988
  %v998 = vmul.f32 %v575, %v988
  %v999 = vmul.f32 %v576, %v988
  %v1000 = vmul.f32 %v577, %v988
  %v1001 = vmul.f32 %v578, %v988
  %v1002 = vmul.f32 %v579, %v988
  %v1003 = vmul.f32 %v580, %v988
  %v1004 = vmul.f32 %v581, %v988
  %v1006 = vlaneseq
  %v1007 = vshrl.u32 %v1006, 7
  %v1008 = vsub.s32 0, %v1007
  %v1009 = vrot.slane %v207, %v1008
  %v1011 = vadd.f32 %v989, %v1009
  %v1012 = vadd.f32 %v990, %v1009
  %v1013 = vadd.f32 %v991, %v1009
  %v1014 = vadd.f32 %v992, %v1009
  %v1015 = vadd.f32 %v993, %v1009
  %v1016 = vadd.f32 %v994, %v1009
  %v1017 = vadd.f32 %v995, %v1009
  %v1018 = vadd.f32 %v996, %v1009
  %v1019 = vadd.f32 %v997, %v1009
  %v1020 = vadd.f32 %v998, %v1009
  %v1021 = vadd.f32 %v999, %v1009
  %v1022 = vadd.f32 %v1000, %v1009
  %v1023 = vadd.f32 %v1001, %v1009
  %v1024 = vadd.f32 %v1002, %v1009
  %v1025 = vadd.f32 %v1003, %v1009
  %v1026 = vadd.f32 %v1004, %v1009
  %vm1027 = vcmp.gt.f32.partialorder %v1011, 0.0
  %vm1028 = vcmp.gt.f32.partialorder %v1012, 0.0
  %vm1029 = vcmp.gt.f32.partialorder %v1013, 0.0
  %vm1030 = vcmp.gt.f32.partialorder %v1014, 0.0
  %vm1031 = vcmp.gt.f32.partialorder %v1015, 0.0
  %vm1032 = vcmp.gt.f32.partialorder %v1016, 0.0
  %vm1033 = vcmp.gt.f32.partialorder %v1017, 0.0
  %vm1034 = vcmp.gt.f32.partialorder %v1018, 0.0
  %vm1035 = vcmp.gt.f32.partialorder %v1019, 0.0
  %vm1036 = vcmp.gt.f32.partialorder %v1020, 0.0
  %vm1037 = vcmp.gt.f32.partialorder %v1021, 0.0
  %vm1038 = vcmp.gt.f32.partialorder %v1022, 0.0
  %vm1039 = vcmp.gt.f32.partialorder %v1023, 0.0
  %vm1040 = vcmp.gt.f32.partialorder %v1024, 0.0
  %vm1041 = vcmp.gt.f32.partialorder %v1025, 0.0
  %vm1042 = vcmp.gt.f32.partialorder %v1026, 0.0
  %v1043 = vmul.f32 %v1011, 0.2
  %v1044 = vmul.f32 %v1012, 0.2
  %v1045 = vmul.f32 %v1013, 0.2
  %v1046 = vmul.f32 %v1014, 0.2
  %v1047 = vmul.f32 %v1015, 0.2
  %v1048 = vmul.f32 %v1016, 0.2
  %v1049 = vmul.f32 %v1017, 0.2
  %v1050 = vmul.f32 %v1018, 0.2
  %v1051 = vmul.f32 %v1019, 0.2
  %v1052 = vmul.f32 %v1020, 0.2
  %v1053 = vmul.f32 %v1021, 0.2
  %v1054 = vmul.f32 %v1022, 0.2
  %v1055 = vmul.f32 %v1023, 0.2
  %v1056 = vmul.f32 %v1024, 0.2
  %v1057 = vmul.f32 %v1025, 0.2
  %v1058 = vmul.f32 %v1026, 0.2
  %v1059 = vsel %vm1027, %v1011, %v1043
  %v1060 = vsel %vm1028, %v1012, %v1044
  %v1061 = vsel %vm1029, %v1013, %v1045
  %v1062 = vsel %vm1030, %v1014, %v1046
  %v1063 = vsel %vm1031, %v1015, %v1047
  %v1064 = vsel %vm1032, %v1016, %v1048
  %v1065 = vsel %vm1033, %v1017, %v1049
  %v1066 = vsel %vm1034, %v1018, %v1050
  %v1067 = vsel %vm1035, %v1019, %v1051
  %v1068 = vsel %vm1036, %v1020, %v1052
  %v1069 = vsel %vm1037, %v1021, %v1053
  %v1070 = vsel %vm1038, %v1022, %v1054
  %v1071 = vsel %vm1039, %v1023, %v1055
  %v1072 = vsel %vm1040, %v1024, %v1056
  %v1073 = vsel %vm1041, %v1025, %v1057
  %v1074 = vsel %vm1042, %v1026, %v1058
  %1076 = vrot.lane.b32.xlu0 %v988, 32
  %v1077 = vpop.permute.xlu0 %1076
  %v1079 = vmul.f32 %v586, %v1077
  %v1080 = vmul.f32 %v587, %v1077
  %v1081 = vmul.f32 %v588, %v1077
  %v1082 = vmul.f32 %v589, %v1077
  %v1083 = vmul.f32 %v590, %v1077
  %v1084 = vmul.f32 %v591, %v1077
  %v1085 = vmul.f32 %v592, %v1077
  %v1086 = vmul.f32 %v593, %v1077
  %v1087 = vmul.f32 %v594, %v1077
  %v1088 = vmul.f32 %v595, %v1077
  %v1089 = vmul.f32 %v596, %v1077
  %v1090 = vmul.f32 %v597, %v1077
  %v1091 = vmul.f32 %v598, %v1077
  %v1092 = vmul.f32 %v599, %v1077
  %v1093 = vmul.f32 %v600, %v1077
  %v1094 = vmul.f32 %v601, %v1077
  %1095 = vrot.lane.b32.xlu0 %v1009, 32
  %v1096 = vpop.permute.xlu0 %1095
  %v1098 = vadd.f32 %v1079, %v1096
  %v1099 = vadd.f32 %v1080, %v1096
  %v1100 = vadd.f32 %v1081, %v1096
  %v1101 = vadd.f32 %v1082, %v1096
  %v1102 = vadd.f32 %v1083, %v1096
  %v1103 = vadd.f32 %v1084, %v1096
  %v1104 = vadd.f32 %v1085, %v1096
  %v1105 = vadd.f32 %v1086, %v1096
  %v1106 = vadd.f32 %v1087, %v1096
  %v1107 = vadd.f32 %v1088, %v1096
  %v1108 = vadd.f32 %v1089, %v1096
  %v1109 = vadd.f32 %v1090, %v1096
  %v1110 = vadd.f32 %v1091, %v1096
  %v1111 = vadd.f32 %v1092, %v1096
  %v1112 = vadd.f32 %v1093, %v1096
  %v1113 = vadd.f32 %v1094, %v1096
  %vm1114 = vcmp.gt.f32.partialorder %v1098, 0.0
  %vm1115 = vcmp.gt.f32.partialorder %v1099, 0.0
  %vm1116 = vcmp.gt.f32.partialorder %v1100, 0.0
  %vm1117 = vcmp.gt.f32.partialorder %v1101, 0.0
  %vm1118 = vcmp.gt.f32.partialorder %v1102, 0.0
  %vm1119 = vcmp.gt.f32.partialorder %v1103, 0.0
  %vm1120 = vcmp.gt.f32.partialorder %v1104, 0.0
  %vm1121 = vcmp.gt.f32.partialorder %v1105, 0.0
  %vm1122 = vcmp.gt.f32.partialorder %v1106, 0.0
  %vm1123 = vcmp.gt.f32.partialorder %v1107, 0.0
  %vm1124 = vcmp.gt.f32.partialorder %v1108, 0.0
  %vm1125 = vcmp.gt.f32.partialorder %v1109, 0.0
  %vm1126 = vcmp.gt.f32.partialorder %v1110, 0.0
  %vm1127 = vcmp.gt.f32.partialorder %v1111, 0.0
  %vm1128 = vcmp.gt.f32.partialorder %v1112, 0.0
  %vm1129 = vcmp.gt.f32.partialorder %v1113, 0.0
  %v1130 = vmul.f32 %v1098, 0.2
  %v1131 = vmul.f32 %v1099, 0.2
  %v1132 = vmul.f32 %v1100, 0.2
  %v1133 = vmul.f32 %v1101, 0.2
  %v1134 = vmul.f32 %v1102, 0.2
  %v1135 = vmul.f32 %v1103, 0.2
  %v1136 = vmul.f32 %v1104, 0.2
  %v1137 = vmul.f32 %v1105, 0.2
  %v1138 = vmul.f32 %v1106, 0.2
  %v1139 = vmul.f32 %v1107, 0.2
  %v1140 = vmul.f32 %v1108, 0.2
  %v1141 = vmul.f32 %v1109, 0.2
  %v1142 = vmul.f32 %v1110, 0.2
  %v1143 = vmul.f32 %v1111, 0.2
  %v1144 = vmul.f32 %v1112, 0.2
  %v1145 = vmul.f32 %v1113, 0.2
  %v1146 = vsel %vm1114, %v1098, %v1130
  %v1147 = vsel %vm1115, %v1099, %v1131
  %v1148 = vsel %vm1116, %v1100, %v1132
  %v1149 = vsel %vm1117, %v1101, %v1133
  %v1150 = vsel %vm1118, %v1102, %v1134
  %v1151 = vsel %vm1119, %v1103, %v1135
  %v1152 = vsel %vm1120, %v1104, %v1136
  %v1153 = vsel %vm1121, %v1105, %v1137
  %v1154 = vsel %vm1122, %v1106, %v1138
  %v1155 = vsel %vm1123, %v1107, %v1139
  %v1156 = vsel %vm1124, %v1108, %v1140
  %v1157 = vsel %vm1125, %v1109, %v1141
  %v1158 = vsel %vm1126, %v1110, %v1142
  %v1159 = vsel %vm1127, %v1111, %v1143
  %v1160 = vsel %vm1128, %v1112, %v1144
  %v1161 = vsel %vm1129, %v1113, %v1145
  %1162 = vrot.lane.b32.xlu0 %v988, 64
  %v1163 = vpop.permute.xlu0 %1162
  %v1165 = vmul.f32 %v605, %v1163
  %v1166 = vmul.f32 %v606, %v1163
  %v1167 = vmul.f32 %v607, %v1163
  %v1168 = vmul.f32 %v608, %v1163
  %v1169 = vmul.f32 %v609, %v1163
  %v1170 = vmul.f32 %v610, %v1163
  %v1171 = vmul.f32 %v611, %v1163
  %v1172 = vmul.f32 %v612, %v1163
  %v1173 = vmul.f32 %v613, %v1163
  %v1174 = vmul.f32 %v614, %v1163
  %v1175 = vmul.f32 %v615, %v1163
  %v1176 = vmul.f32 %v616, %v1163
  %v1177 = vmul.f32 %v617, %v1163
  %v1178 = vmul.f32 %v618, %v1163
  %v1179 = vmul.f32 %v619, %v1163
  %v1180 = vmul.f32 %v620, %v1163
  %1181 = vrot.lane.b32.xlu0 %v1009, 64
  %v1182 = vpop.permute.xlu0 %1181
  %v1184 = vadd.f32 %v1165, %v1182
  %v1185 = vadd.f32 %v1166, %v1182
  %v1186 = vadd.f32 %v1167, %v1182
  %v1187 = vadd.f32 %v1168, %v1182
  %v1188 = vadd.f32 %v1169, %v1182
  %v1189 = vadd.f32 %v1170, %v1182
  %v1190 = vadd.f32 %v1171, %v1182
  %v1191 = vadd.f32 %v1172, %v1182
  %v1192 = vadd.f32 %v1173, %v1182
  %v1193 = vadd.f32 %v1174, %v1182
  %v1194 = vadd.f32 %v1175, %v1182
  %v1195 = vadd.f32 %v1176, %v1182
  %v1196 = vadd.f32 %v1177, %v1182
  %v1197 = vadd.f32 %v1178, %v1182
  %v1198 = vadd.f32 %v1179, %v1182
  %v1199 = vadd.f32 %v1180, %v1182
  %vm1200 = vcmp.gt.f32.partialorder %v1184, 0.0
  %vm1201 = vcmp.gt.f32.partialorder %v1185, 0.0
  %vm1202 = vcmp.gt.f32.partialorder %v1186, 0.0
  %vm1203 = vcmp.gt.f32.partialorder %v1187, 0.0
  %vm1204 = vcmp.gt.f32.partialorder %v1188, 0.0
  %vm1205 = vcmp.gt.f32.partialorder %v1189, 0.0
  %vm1206 = vcmp.gt.f32.partialorder %v1190, 0.0
  %vm1207 = vcmp.gt.f32.partialorder %v1191, 0.0
  %vm1208 = vcmp.gt.f32.partialorder %v1192, 0.0
  %vm1209 = vcmp.gt.f32.partialorder %v1193, 0.0
  %vm1210 = vcmp.gt.f32.partialorder %v1194, 0.0
  %vm1211 = vcmp.gt.f32.partialorder %v1195, 0.0
  %vm1212 = vcmp.gt.f32.partialorder %v1196, 0.0
  %vm1213 = vcmp.gt.f32.partialorder %v1197, 0.0
  %vm1214 = vcmp.gt.f32.partialorder %v1198, 0.0
  %vm1215 = vcmp.gt.f32.partialorder %v1199, 0.0
  %v1216 = vmul.f32 %v1184, 0.2
  %v1217 = vmul.f32 %v1185, 0.2
  %v1218 = vmul.f32 %v1186, 0.2
  %v1219 = vmul.f32 %v1187, 0.2
  %v1220 = vmul.f32 %v1188, 0.2
  %v1221 = vmul.f32 %v1189, 0.2
  %v1222 = vmul.f32 %v1190, 0.2
  %v1223 = vmul.f32 %v1191, 0.2
  %v1224 = vmul.f32 %v1192, 0.2
  %v1225 = vmul.f32 %v1193, 0.2
  %v1226 = vmul.f32 %v1194, 0.2
  %v1227 = vmul.f32 %v1195, 0.2
  %v1228 = vmul.f32 %v1196, 0.2
  %v1229 = vmul.f32 %v1197, 0.2
  %v1230 = vmul.f32 %v1198, 0.2
  %v1231 = vmul.f32 %v1199, 0.2
  %v1232 = vsel %vm1200, %v1184, %v1216
  %v1233 = vsel %vm1201, %v1185, %v1217
  %v1234 = vsel %vm1202, %v1186, %v1218
  %v1235 = vsel %vm1203, %v1187, %v1219
  %v1236 = vsel %vm1204, %v1188, %v1220
  %v1237 = vsel %vm1205, %v1189, %v1221
  %v1238 = vsel %vm1206, %v1190, %v1222
  %v1239 = vsel %vm1207, %v1191, %v1223
  %v1240 = vsel %vm1208, %v1192, %v1224
  %v1241 = vsel %vm1209, %v1193, %v1225
  %v1242 = vsel %vm1210, %v1194, %v1226
  %v1243 = vsel %vm1211, %v1195, %v1227
  %v1244 = vsel %vm1212, %v1196, %v1228
  %v1245 = vsel %vm1213, %v1197, %v1229
  %v1246 = vsel %vm1214, %v1198, %v1230
  %v1247 = vsel %vm1215, %v1199, %v1231
  %1248 = vrot.lane.b32.xlu0 %v988, 96
  %v1249 = vpop.permute.xlu0 %1248
  %v1251 = vmul.f32 %v624, %v1249
  %v1252 = vmul.f32 %v625, %v1249
  %v1253 = vmul.f32 %v626, %v1249
  %v1254 = vmul.f32 %v627, %v1249
  %v1255 = vmul.f32 %v628, %v1249
  %v1256 = vmul.f32 %v629, %v1249
  %v1257 = vmul.f32 %v630, %v1249
  %v1258 = vmul.f32 %v631, %v1249
  %v1259 = vmul.f32 %v632, %v1249
  %v1260 = vmul.f32 %v633, %v1249
  %v1261 = vmul.f32 %v634, %v1249
  %v1262 = vmul.f32 %v635, %v1249
  %v1263 = vmul.f32 %v636, %v1249
  %v1264 = vmul.f32 %v637, %v1249
  %v1265 = vmul.f32 %v638, %v1249
  %v1266 = vmul.f32 %v639, %v1249
  %1267 = vrot.lane.b32.xlu0 %v1009, 96
  %v1268 = vpop.permute.xlu0 %1267
  %v1270 = vadd.f32 %v1251, %v1268
  %v1271 = vadd.f32 %v1252, %v1268
  %v1272 = vadd.f32 %v1253, %v1268
  %v1273 = vadd.f32 %v1254, %v1268
  %v1274 = vadd.f32 %v1255, %v1268
  %v1275 = vadd.f32 %v1256, %v1268
  %v1276 = vadd.f32 %v1257, %v1268
  %v1277 = vadd.f32 %v1258, %v1268
  %v1278 = vadd.f32 %v1259, %v1268
  %v1279 = vadd.f32 %v1260, %v1268
  %v1280 = vadd.f32 %v1261, %v1268
  %v1281 = vadd.f32 %v1262, %v1268
  %v1282 = vadd.f32 %v1263, %v1268
  %v1283 = vadd.f32 %v1264, %v1268
  %v1284 = vadd.f32 %v1265, %v1268
  %v1285 = vadd.f32 %v1266, %v1268
  %vm1286 = vcmp.gt.f32.partialorder %v1270, 0.0
  %vm1287 = vcmp.gt.f32.partialorder %v1271, 0.0
  %vm1288 = vcmp.gt.f32.partialorder %v1272, 0.0
  %vm1289 = vcmp.gt.f32.partialorder %v1273, 0.0
  %vm1290 = vcmp.gt.f32.partialorder %v1274, 0.0
  %vm1291 = vcmp.gt.f32.partialorder %v1275, 0.0
  %vm1292 = vcmp.gt.f32.partialorder %v1276, 0.0
  %vm1293 = vcmp.gt.f32.partialorder %v1277, 0.0
  %vm1294 = vcmp.gt.f32.partialorder %v1278, 0.0
  %vm1295 = vcmp.gt.f32.partialorder %v1279, 0.0
  %vm1296 = vcmp.gt.f32.partialorder %v1280, 0.0
  %vm1297 = vcmp.gt.f32.partialorder %v1281, 0.0
  %vm1298 = vcmp.gt.f32.partialorder %v1282, 0.0
  %vm1299 = vcmp.gt.f32.partialorder %v1283, 0.0
  %vm1300 = vcmp.gt.f32.partialorder %v1284, 0.0
  %vm1301 = vcmp.gt.f32.partialorder %v1285, 0.0
  %v1302 = vmul.f32 %v1270, 0.2
  %v1303 = vmul.f32 %v1271, 0.2
  %v1304 = vmul.f32 %v1272, 0.2
  %v1305 = vmul.f32 %v1273, 0.2
  %v1306 = vmul.f32 %v1274, 0.2
  %v1307 = vmul.f32 %v1275, 0.2
  %v1308 = vmul.f32 %v1276, 0.2
  %v1309 = vmul.f32 %v1277, 0.2
  %v1310 = vmul.f32 %v1278, 0.2
  %v1311 = vmul.f32 %v1279, 0.2
  %v1312 = vmul.f32 %v1280, 0.2
  %v1313 = vmul.f32 %v1281, 0.2
  %v1314 = vmul.f32 %v1282, 0.2
  %v1315 = vmul.f32 %v1283, 0.2
  %v1316 = vmul.f32 %v1284, 0.2
  %v1317 = vmul.f32 %v1285, 0.2
  %v1318 = vsel %vm1286, %v1270, %v1302
  %v1319 = vsel %vm1287, %v1271, %v1303
  %v1320 = vsel %vm1288, %v1272, %v1304
  %v1321 = vsel %vm1289, %v1273, %v1305
  %v1322 = vsel %vm1290, %v1274, %v1306
  %v1323 = vsel %vm1291, %v1275, %v1307
  %v1324 = vsel %vm1292, %v1276, %v1308
  %v1325 = vsel %vm1293, %v1277, %v1309
  %v1326 = vsel %vm1294, %v1278, %v1310
  %v1327 = vsel %vm1295, %v1279, %v1311
  %v1328 = vsel %vm1296, %v1280, %v1312
  %v1329 = vsel %vm1297, %v1281, %v1313
  %v1330 = vsel %vm1298, %v1282, %v1314
  %v1331 = vsel %vm1299, %v1283, %v1315
  %v1332 = vsel %vm1300, %v1284, %v1316
  %v1333 = vsel %vm1301, %v1285, %v1317
  %v1334 = vsel %vm527, %v1059, %v1146
  %v1335 = vsel %vm527, %v1060, %v1147
  %v1336 = vsel %vm527, %v1061, %v1148
  %v1337 = vsel %vm527, %v1062, %v1149
  %v1338 = vsel %vm527, %v1063, %v1150
  %v1339 = vsel %vm527, %v1064, %v1151
  %v1340 = vsel %vm527, %v1065, %v1152
  %v1341 = vsel %vm527, %v1066, %v1153
  %v1342 = vsel %vm527, %v1067, %v1154
  %v1343 = vsel %vm527, %v1068, %v1155
  %v1344 = vsel %vm527, %v1069, %v1156
  %v1345 = vsel %vm527, %v1070, %v1157
  %v1346 = vsel %vm527, %v1071, %v1158
  %v1347 = vsel %vm527, %v1072, %v1159
  %v1348 = vsel %vm527, %v1073, %v1160
  %v1349 = vsel %vm527, %v1074, %v1161
  %v1350 = vsel %vm83, %v1334, %v1232
  %v1351 = vsel %vm83, %v1335, %v1233
  %v1352 = vsel %vm83, %v1336, %v1234
  %v1353 = vsel %vm83, %v1337, %v1235
  %v1354 = vsel %vm83, %v1338, %v1236
  %v1355 = vsel %vm83, %v1339, %v1237
  %v1356 = vsel %vm83, %v1340, %v1238
  %v1357 = vsel %vm83, %v1341, %v1239
  %v1358 = vsel %vm83, %v1342, %v1240
  %v1359 = vsel %vm83, %v1343, %v1241
  %v1360 = vsel %vm83, %v1344, %v1242
  %v1361 = vsel %vm83, %v1345, %v1243
  %v1362 = vsel %vm83, %v1346, %v1244
  %v1363 = vsel %vm83, %v1347, %v1245
  %v1364 = vsel %vm83, %v1348, %v1246
  %v1365 = vsel %vm83, %v1349, %v1247
  %vm1366 = vcmask 785408
  %v1367 = vsel %vm1366, %v1350, %v1318
  %v1368 = vsel %vm1366, %v1351, %v1319
  %v1369 = vsel %vm1366, %v1352, %v1320
  %v1370 = vsel %vm1366, %v1353, %v1321
  %v1371 = vsel %vm1366, %v1354, %v1322
  %v1372 = vsel %vm1366, %v1355, %v1323
  %v1373 = vsel %vm1366, %v1356, %v1324
  %v1374 = vsel %vm1366, %v1357, %v1325
  %v1375 = vsel %vm1366, %v1358, %v1326
  %v1376 = vsel %vm1366, %v1359, %v1327
  %v1377 = vsel %vm1366, %v1360, %v1328
  %v1378 = vsel %vm1366, %v1361, %v1329
  %v1379 = vsel %vm1366, %v1362, %v1330
  %v1380 = vsel %vm1366, %v1363, %v1331
  %v1381 = vsel %vm1366, %v1364, %v1332
  %v1382 = vsel %vm1366, %v1365, %v1333
  %v1383 = vpack.c.bf16 %v1368, %v1367
  %v1384 = vpack.c.bf16 %v1370, %v1369
  %v1385 = vpack.c.bf16 %v1372, %v1371
  %v1386 = vpack.c.bf16 %v1374, %v1373
  %v1387 = vpack.c.bf16 %v1376, %v1375
  %v1388 = vpack.c.bf16 %v1378, %v1377
  %v1389 = vpack.c.bf16 %v1380, %v1379
  %v1390 = vpack.c.bf16 %v1382, %v1381
  %v1391 = vld [vmem:[%s5] sm:$0xf]
  %v1392 = vld [vmem:[%s5 + $0x4] sm:$0xf]
  %v1393 = vld [vmem:[%s5 + $0x8] sm:$0xf]
  %v1394 = vld [vmem:[%s5 + $0xc] sm:$0xf]
  %v1395 = vld [vmem:[%s5 + $0x10] sm:$0xf]
  %v1396 = vld [vmem:[%s5 + $0x14] sm:$0xf]
  %v1397 = vld [vmem:[%s5 + $0x18] sm:$0xf]
  %v1398 = vld [vmem:[%s5 + $0x1c] sm:$0xf]
  %v1399 = vld [vmem:[%s5 + $0x20] sm:$0xf]
  %v1400 = vld [vmem:[%s5 + $0x24] sm:$0xf]
  %v1401 = vld [vmem:[%s5 + $0x28] sm:$0xf]
  %v1402 = vld [vmem:[%s5 + $0x2c] sm:$0xf]
  %v1403 = vld [vmem:[%s5 + $0x30] sm:$0xf]
  %v1404 = vld [vmem:[%s5 + $0x34] sm:$0xf]
  %v1405 = vld [vmem:[%s5 + $0x38] sm:$0xf]
  %v1406 = vld [vmem:[%s5 + $0x3c] sm:$0xf]
  %v1407 = vld [vmem:[%s6] sm:$0x1]
  %v1409 = vlaneseq
  %v1410 = vshrl.u32 %v1409, 7
  %v1411 = vsub.s32 0, %v1410
  %v1412 = vrot.slane %v1407, %v1411
  %v1430 = vunpack.c.l.b16 %v1391
  %v1431 = vunpack.c.l.b16 %v1392
  %v1432 = vunpack.c.l.b16 %v1393
  %v1433 = vunpack.c.l.b16 %v1394
  %v1434 = vunpack.c.l.b16 %v1395
  %v1435 = vunpack.c.l.b16 %v1396
  %v1436 = vunpack.c.l.b16 %v1397
  %v1437 = vunpack.c.l.b16 %v1398
  %v1438 = vunpack.c.l.b16 %v1399
  %v1439 = vunpack.c.l.b16 %v1400
  %v1440 = vunpack.c.l.b16 %v1401
  %v1441 = vunpack.c.l.b16 %v1402
  %v1442 = vunpack.c.l.b16 %v1403
  %v1443 = vunpack.c.l.b16 %v1404
  %v1444 = vunpack.c.l.b16 %v1405
  %v1445 = vunpack.c.l.b16 %v1406
  %v1446 = vpack.c.b16 %v1431, %v1430
  %v1447 = vpack.c.b16 %v1433, %v1432
  %v1448 = vpack.c.b16 %v1435, %v1434
  %v1449 = vpack.c.b16 %v1437, %v1436
  %v1450 = vpack.c.b16 %v1439, %v1438
  %v1451 = vpack.c.b16 %v1441, %v1440
  %v1452 = vpack.c.b16 %v1443, %v1442
  %v1453 = vpack.c.b16 %v1445, %v1444
  %1462 = vmatprep.subr.bf16.mxu0 0
  %1463 = vmatpush1.bf16.msra.mxu0 %v1446
  %1464 = vmatprep.subr.bf16.mxu0 0
  %1465 = vmatpush1.bf16.msra.mxu0 %v1447
  %1466 = vmatprep.subr.bf16.mxu0 0
  %1467 = vmatpush1.bf16.msra.mxu0 %v1448
  %1468 = vmatprep.subr.bf16.mxu0 0
  %1469 = vmatpush1.bf16.msra.mxu0 %v1449
  %1470 = vmatprep.subr.bf16.mxu0 0
  %1471 = vmatpush1.bf16.msra.mxu0 %v1450
  %1472 = vmatprep.subr.bf16.mxu0 0
  %1473 = vmatpush1.bf16.msra.mxu0 %v1451
  %1474 = vmatprep.subr.bf16.mxu0 0
  %1475 = vmatpush1.bf16.msra.mxu0 %v1452
  %1476 = vmatprep.subr.bf16.mxu0 0
  %1477 = vmatpush1.bf16.msra.mxu0 %v1453
  %1478 = vmatprep.subr.bf16.mxu0 0
  %1479 = vmatpush1.bf16.msra.mxu0 0
  %1480 = vmatprep.subr.bf16.mxu0 0
  %1481 = vmatpush1.bf16.msra.mxu0 0
  %1482 = vmatprep.subr.bf16.mxu0 0
  %1483 = vmatpush1.bf16.msra.mxu0 0
  %1484 = vmatprep.subr.bf16.mxu0 0
  %1485 = vmatpush1.bf16.msra.mxu0 0
  %1486 = vmatprep.subr.bf16.mxu0 0
  %1487 = vmatpush1.bf16.msra.mxu0 0
  %1488 = vmatprep.subr.bf16.mxu0 0
  %1489 = vmatpush1.bf16.msra.mxu0 0
  %1490 = vmatprep.subr.bf16.mxu0 0
  %1491 = vmatpush1.bf16.msra.mxu0 0
  %1492 = vmatprep.subr.bf16.mxu0 0
  %1493 = vmatpush1.bf16.msra.mxu0 0
  %1494 = vmatprep.mubr.bf16.mxu0 0
  %1495 = vmatmul.mubr.bf16.gmra.mrb[0].mxu0 %v1383
  %v1496 = vpop.f32.mrb[0].mxu0
  %v1497 = vadd.f32 %v1412, %v1496
  %v1498 = vpop.f32.mrb[0].mxu0
  %v1499 = vpop.f32.mrb[0].mxu0
  %v1500 = vadd.f32 %v1412, %v1499
  %v1501 = vpop.f32.mrb[0].mxu0
  %1502 = vmatprep.mubr.bf16.mxu0 0
  %1503 = vmatmul.mubr.bf16.gmra.mrb[0].mxu0 %v1384
  %v1504 = vpop.f32.mrb[0].mxu0
  %v1505 = vadd.f32 %v1412, %v1504
  %v1506 = vpop.f32.mrb[0].mxu0
  %v1507 = vpop.f32.mrb[0].mxu0
  %v1508 = vadd.f32 %v1412, %v1507
  %v1509 = vpop.f32.mrb[0].mxu0
  %1510 = vmatprep.mubr.bf16.mxu0 0
  %1511 = vmatmul.mubr.bf16.gmra.mrb[0].mxu0 %v1385
  %v1512 = vpop.f32.mrb[0].mxu0
  %v1513 = vadd.f32 %v1412, %v1512
  %v1514 = vpop.f32.mrb[0].mxu0
  %v1515 = vpop.f32.mrb[0].mxu0
  %v1516 = vadd.f32 %v1412, %v1515
  %v1517 = vpop.f32.mrb[0].mxu0
  %1518 = vmatprep.mubr.bf16.mxu0 0
  %1519 = vmatmul.mubr.bf16.gmra.mrb[0].mxu0 %v1386
  %v1520 = vpop.f32.mrb[0].mxu0
  %v1521 = vadd.f32 %v1412, %v1520
  %v1522 = vpop.f32.mrb[0].mxu0
  %v1523 = vpop.f32.mrb[0].mxu0
  %v1524 = vadd.f32 %v1412, %v1523
  %v1525 = vpop.f32.mrb[0].mxu0
  %1526 = vmatprep.mubr.bf16.mxu0 0
  %1527 = vmatmul.mubr.bf16.gmra.mrb[0].mxu0 %v1387
  %v1528 = vpop.f32.mrb[0].mxu0
  %v1529 = vadd.f32 %v1412, %v1528
  %v1530 = vpop.f32.mrb[0].mxu0
  %v1531 = vpop.f32.mrb[0].mxu0
  %v1532 = vadd.f32 %v1412, %v1531
  %v1533 = vpop.f32.mrb[0].mxu0
  %1534 = vmatprep.mubr.bf16.mxu0 0
  %1535 = vmatmul.mubr.bf16.gmra.mrb[0].mxu0 %v1388
  %v1536 = vpop.f32.mrb[0].mxu0
  %v1537 = vadd.f32 %v1412, %v1536
  %v1538 = vpop.f32.mrb[0].mxu0
  %v1539 = vpop.f32.mrb[0].mxu0
  %v1540 = vadd.f32 %v1412, %v1539
  %v1541 = vpop.f32.mrb[0].mxu0
  %1542 = vmatprep.mubr.bf16.mxu0 0
  %1543 = vmatmul.mubr.bf16.gmra.mrb[0].mxu0 %v1389
  %v1544 = vpop.f32.mrb[0].mxu0
  %v1545 = vadd.f32 %v1412, %v1544
  %v1546 = vpop.f32.mrb[0].mxu0
  %v1547 = vpop.f32.mrb[0].mxu0
  %v1548 = vadd.f32 %v1412, %v1547
  %v1549 = vpop.f32.mrb[0].mxu0
  %1550 = vmatprep.mubr.bf16.mxu0 0
  %1551 = vmatmul.mubr.bf16.gmra.mrb[0].mxu0 %v1390
  %v1552 = vpop.f32.mrb[0].mxu0
  %v1553 = vadd.f32 %v1412, %v1552
  %v1554 = vpop.f32.mrb[0].mxu0
  %v1555 = vpop.f32.mrb[0].mxu0
  %v1556 = vadd.f32 %v1412, %v1555
  %v1557 = vpop.f32.mrb[0].mxu0
  %1558 = vdwg.mxu0
  %v1559 = vtanh.pop %v1497
  %v1560 = vtanh.pop %v1500
  %v1561 = vtanh.pop %v1505
  %v1562 = vtanh.pop %v1508
  %v1563 = vtanh.pop %v1513
  %v1564 = vtanh.pop %v1516
  %v1565 = vtanh.pop %v1521
  %v1566 = vtanh.pop %v1524
  %v1567 = vtanh.pop %v1529
  %v1568 = vtanh.pop %v1532
  %v1569 = vtanh.pop %v1537
  %v1570 = vtanh.pop %v1540
  %v1571 = vtanh.pop %v1545
  %v1572 = vtanh.pop %v1548
  %v1573 = vtanh.pop %v1553
  %v1574 = vtanh.pop %v1556
  %vm1575 = vcmask 130048
  %1576 = vst.msk [vmem:[%s7] sm:$0xff] %vm1575, %v1559
  %1577 = vst.msk [vmem:[%s7 + $0x8] sm:$0xff] %vm1575, %v1560
  %1578 = vst.msk [vmem:[%s7 + $0x10] sm:$0xff] %vm1575, %v1561
  %1579 = vst.msk [vmem:[%s7 + $0x18] sm:$0xff] %vm1575, %v1562
  %1580 = vst.msk [vmem:[%s7 + $0x20] sm:$0xff] %vm1575, %v1563
  %1581 = vst.msk [vmem:[%s7 + $0x28] sm:$0xff] %vm1575, %v1564
  %1582 = vst.msk [vmem:[%s7 + $0x30] sm:$0xff] %vm1575, %v1565
  %1583 = vst.msk [vmem:[%s7 + $0x38] sm:$0xff] %vm1575, %v1566
  %1584 = vst.msk [vmem:[%s7 + $0x40] sm:$0xff] %vm1575, %v1567
  %1585 = vst.msk [vmem:[%s7 + $0x48] sm:$0xff] %vm1575, %v1568
  %1586 = vst.msk [vmem:[%s7 + $0x50] sm:$0xff] %vm1575, %v1569
  %1587 = vst.msk [vmem:[%s7 + $0x58] sm:$0xff] %vm1575, %v1570
  %1588 = vst.msk [vmem:[%s7 + $0x60] sm:$0xff] %vm1575, %v1571
  %1589 = vst.msk [vmem:[%s7 + $0x68] sm:$0xff] %vm1575, %v1572
  %1590 = vst.msk [vmem:[%s7 + $0x70] sm:$0xff] %vm1575, %v1573
  %1591 = vst.msk [vmem:[%s7 + $0x78] sm:$0xff] %vm1575, %v1574
  // Predicated region
  $region30: #{ae_forward.9} parent=0 // pred_check
    _
  $region31: #{ae_forward.9} parent=0 // pred_check_branch
    %1593 = sbr.rel (0) target = $region33
  $region32: #{ae_forward.9} parent=0 // pred_region
    _
  $region33: #{ae_forward.9} parent=0 // pred_fallthru
    _
  // Predicated region
  $region34: #{ae_forward.9} parent=0 // pred_check
    _
  $region35: #{ae_forward.9} parent=0 // pred_check_branch
    %1595 = sbr.rel (0) target = $region37
  $region36: #{ae_forward.9} parent=0 // pred_region
    _
  $region37: #{ae_forward.9} parent=0 // pred_fallthru
    _

</llo_original>
